<compile_context>
chip_gen: v7x
topology: tpu7x:2x2x1
jax: 0.10.0
libtpu: 0.0.40
codegen_flags: <defaults>
</compile_context>

<pallas_src>
import functools

import jax
import jax.numpy as jnp
from jax.experimental import pallas as pl
from jax.experimental.pallas import tpu as pltpu


# --------------------------------------------------------------------------
# Fused SGGTM forward kernel (one block of Bb samples per grid step)
# --------------------------------------------------------------------------
def sggtm_fused_kernel(x_ref, tt_ref, ts_ref, ws_ref, win_ref, whh_ref,
                       bias_ref, wg_ref, bg_ref, o_ref, *, Bb, W, H, MD, M):
    # x    : (Bb, W, F)      input window block
    # tt   : (Bb, 4, W, W)   temporal transition taps [T, T^2, T', T'^2] per sample
    # ts   : (4, F, F)       spatial transition taps, pre-transposed (+ squared), shared
    # ws   : (4, W, W)       spatial DiffConv weight blocks W_k^T, shared
    # win  : (6, F, 4H)      LSTM input-projection blocks:
    #                        0..3 = w_tempo@W_ih_t split per tap, 4 = W_ih_spatio, 5 = W_ih_x
    # whh  : (H, 4H)         LSTM recurrent weight (gate order i,f,g,o)
    # bias : (W, 4H)         fused bias (b_lstm + tempo-bias path + spatio-bias path)
    # wg   : (H, Gp), bg: (1, Gp)   lane-padded packed GMM head [mu | logsig | pi | 0pad]
    # o    : (Bb, W, Gp)     packed lane-dense output
    f32 = jnp.float32

    # hoist shared weight loads out of the per-sample loop
    w_in = [win_ref[k] for k in range(6)]
    ts = [ts_ref[k] for k in range(4)]
    ws = [ws_ref[k] for k in range(4)]
    bias = bias_ref[...]                                       # (W, 4H)
    whh = whh_ref[...]                                         # (H, 4H)

    # ---- per-sample graph convs, composed directly into the LSTM input
    #      pre-activation xw_b = lstm_in @ W_ih + b (no lane concats) --------
    xw_rows = []
    for bi in range(Bb):
        xb = x_ref[bi]                                         # (W, F)
        xw_b = bias + jnp.dot(xb, w_in[5], preferred_element_type=f32)
        # temporal DiffConv taps, pre-composed with the temporal W_ih rows
        for k in range(4):
            z = jnp.dot(tt_ref[bi, k], xb, preferred_element_type=f32)     # (W, F)
            xw_b = xw_b + jnp.dot(z, w_in[k], preferred_element_type=f32)  # (W, 4H)
        # spatial DiffConv, transpose-free: sum_k W_k^T (x T_k^T)
        dsp = jnp.dot(ws[0], jnp.dot(xb, ts[0], preferred_element_type=f32),
                      preferred_element_type=f32)              # (W, F)
        for k in range(1, 4):
            u = jnp.dot(xb, ts[k], preferred_element_type=f32)
            dsp = dsp + jnp.dot(ws[k], u, preferred_element_type=f32)
        xw_b = xw_b + jnp.dot(dsp, w_in[4], preferred_element_type=f32)
        xw_rows.append(xw_b)                                   # (W, 4H)
    xw = jnp.stack(xw_rows, axis=1)                            # (W, Bb, 4H) time-major

    # ---- batched LSTM recurrence: h, c carried as (Bb, H) ------------------
    h = jnp.zeros((Bb, H), f32)
    c = jnp.zeros((Bb, H), f32)
    hs = []
    for t in range(W):                 # W is small & static -> fully unrolled
        pre = xw[t] + jnp.dot(h, whh, preferred_element_type=f32)   # (Bb, 4H)
        i_g = jax.nn.sigmoid(pre[:, 0:H])
        f_g = jax.nn.sigmoid(pre[:, H:2 * H])
        g_g = jnp.tanh(pre[:, 2 * H:3 * H])
        o_g = jax.nn.sigmoid(pre[:, 3 * H:4 * H])
        c = f_g * c + i_g * g_g
        h = o_g * jnp.tanh(c)
        hs.append(h)
    hflat = jnp.concatenate(hs, axis=0)                        # (W*Bb, H) time-major

    # ---- GMM / MDN head: one matmul into a lane-dense padded tile ----------
    g = (jnp.dot(hflat, wg_ref[...], preferred_element_type=f32)
         + bg_ref[...])                                        # (W*Bb, Gp)
    Gp = g.shape[-1]
    lane = jax.lax.broadcasted_iota(jnp.int32, g.shape, 1)
    sig_mask = (lane >= MD) & (lane < 2 * MD)
    pi_mask = (lane >= 2 * MD) & (lane < 2 * MD + M)
    out = jnp.where(sig_mask, jnp.exp(jnp.where(sig_mask, g, 0.0)), g)
    logits = jnp.where(pi_mask, g, jnp.float32(-1e30))
    mmax = jnp.max(logits, axis=-1, keepdims=True)
    e = jnp.exp(logits - mmax)                                 # exactly 0 off the pi lanes
    pi = e / jnp.sum(e, axis=-1, keepdims=True)                # exact divide
    out = jnp.where(pi_mask, pi, out)

    g3 = out.reshape(W, Bb, Gp)
    for bi in range(Bb):                                       # full (W, Gp) tile stores
        o_ref[bi] = g3[:, bi, :]


# --------------------------------------------------------------------------
# Glue: transition matrices, forward wrapper, reference, param init
# --------------------------------------------------------------------------
def transition_matrices(adj):
    # DCRNN-style transition matrices: forward = row-normalised adjacency,
    # backward = row-normalised transpose.
    def _norm(a):
        rs = jnp.sum(a, axis=-1, keepdims=True)
        safe = jnp.where(rs > 0, rs, 1.0)
        return jnp.where(rs > 0, a / safe, 0.0)
    return _norm(adj), _norm(jnp.swapaxes(adj, -1, -2))


def sggtm_forward(params, x, tempo_adj, spatio_adj, exo_var=None, block_b=8):
    """SGGTM.forward: x (B, window, input_size) -> (mu, sigma, pi)."""
    if exo_var is not None:
        x_in = jnp.concatenate([exo_var, x], axis=-1)
    else:
        x_in = x
    B, W, F = x_in.shape
    H = params['w_hh'].shape[0]
    M = params['mixture_dim']
    D = params['output_size']
    MD = M * D
    G = 2 * MD + M
    Gp = max(128, ((G + 127) // 128) * 128)            # lane-dense packed width

    # ---- batch blocking: Bb samples per grid step, keep grid >= 2 if possible
    bb = max(1, min(block_b, B))
    nsteps = -(-B // bb)
    if nsteps == 1 and B > 1:                           # v7x: feed both TensorCores
        bb = -(-B // 2)
        nsteps = -(-B // bb)
    Bpad = nsteps * bb

    # ---- transition matrices (+ precomputed squares) -----------------------
    tf_t, tb_t = transition_matrices(tempo_adj)                       # (B, W, W)
    tt_stack = jnp.stack([tf_t, jnp.matmul(tf_t, tf_t),
                          tb_t, jnp.matmul(tb_t, tb_t)], axis=1)      # (B, 4, W, W)
    tf_s, tb_s = transition_matrices(spatio_adj)                      # (F, F)
    tfsT, tbsT = tf_s.T, tb_s.T
    ts_stack = jnp.stack([tfsT, tfsT @ tfsT, tbsT, tbsT @ tbsT], axis=0)  # (4, F, F)

    # ---- weight composition / packing --------------------------------------
    w_ih = params['w_ih']                               # (I, 4H), rows [tempo|spatio|x]
    wih_t = w_ih[0:H]
    wih_s = w_ih[H:H + F]
    wih_x = w_ih[H + F:H + 2 * F]
    wtc = params['w_tempo'] @ wih_t                     # (4F, 4H) composed temporal path
    w_in = jnp.stack([wtc[k * F:(k + 1) * F] for k in range(4)]
                     + [wih_s, wih_x], axis=0)          # (6, F, 4H)
    ws_t = params['ws_t']                               # (W, 4W) = hstack(W_k^T)
    ws_stack = jnp.stack([ws_t[:, k * W:(k + 1) * W] for k in range(4)], axis=0)  # (4,W,W)
    bias_fused = (params['b_lstm']
                  + params['b_tempo'] @ wih_t
                  + params['b_spatio'] @ (jnp.ones((1, F), jnp.float32) @ wih_s))  # (W,4H)
    wg_pad = jnp.zeros((H, Gp), jnp.float32).at[:, :G].set(params['w_gmm'])
    bg_pad = jnp.zeros((1, Gp), jnp.float32).at[:, :G].set(params['b_gmm'])

    # ---- batch pad ----------------------------------------------------------
    if Bpad != B:
        pad = Bpad - B
        x_pad = jnp.pad(x_in, ((0, pad), (0, 0), (0, 0)))
        tt_pad = jnp.pad(tt_stack, ((0, pad), (0, 0), (0, 0), (0, 0)))
    else:
        x_pad, tt_pad = x_in, tt_stack

    kernel = functools.partial(sggtm_fused_kernel, Bb=bb, W=W, H=H, MD=MD, M=M)
    packed = pl.pallas_call(
        kernel,
        out_shape=jax.ShapeDtypeStruct((Bpad, W, Gp), jnp.float32),
        grid_spec=pltpu.PrefetchScalarGridSpec(
            num_scalar_prefetch=0,
            grid=(nsteps,),
            in_specs=[
                pl.BlockSpec((bb, W, F), lambda n: (n, 0, 0)),        # x
                pl.BlockSpec((bb, 4, W, W), lambda n: (n, 0, 0, 0)),  # temporal taps
                pl.BlockSpec((4, F, F), lambda n: (0, 0, 0)),         # spatial taps (shared)
                pl.BlockSpec((4, W, W), lambda n: (0, 0, 0)),         # spatial weights
                pl.BlockSpec((6, F, 4 * H), lambda n: (0, 0, 0)),     # input-proj blocks
                pl.BlockSpec((H, 4 * H), lambda n: (0, 0)),           # w_hh
                pl.BlockSpec((W, 4 * H), lambda n: (0, 0)),           # fused bias
                pl.BlockSpec((H, Gp), lambda n: (0, 0)),              # w_gmm (padded)
                pl.BlockSpec((1, Gp), lambda n: (0, 0)),              # b_gmm (padded)
            ],
            out_specs=pl.BlockSpec((bb, W, Gp), lambda n: (n, 0, 0)),
        ),
        compiler_params=pltpu.CompilerParams(
            dimension_semantics=("parallel",)),
    )(x_pad, tt_pad, ts_stack, ws_stack, w_in,
      params['w_hh'], bias_fused, wg_pad, bg_pad)

    packed = packed[:B]
    mu = packed[..., :MD].reshape(B, W, M, D)
    sigma = packed[..., MD:2 * MD].reshape(B, W, M, D)
    pi = packed[..., 2 * MD:2 * MD + M]
    return mu, sigma, pi


def sggtm_reference(params, x_in, tempo_adj, spatio_adj):
    """Pure-JAX reference following the original PyTorch forward structure."""
    B, W, F = x_in.shape
    H = params['w_hh'].shape[0]
    M = params['mixture_dim']
    D = params['output_size']
    MD = M * D
    tf_t, tb_t = transition_matrices(tempo_adj)
    tf_s, tb_s = transition_matrices(spatio_adj)
    # temporal DiffConv (nodes = timesteps)
    z1 = jnp.matmul(tf_t, x_in); z2 = jnp.matmul(tf_t, z1)
    z3 = jnp.matmul(tb_t, x_in); z4 = jnp.matmul(tb_t, z3)
    zcat = jnp.concatenate([z1, z2, z3, z4], axis=-1)
    diff_tempo = zcat @ params['w_tempo'] + params['b_tempo']
    # spatial DiffConv (nodes = channels), with the permute(0,2,1) wrapping
    y = jnp.swapaxes(x_in, 1, 2)                                     # (B, F, W)
    s1 = jnp.einsum('ij,bjw->biw', tf_s, y); s2 = jnp.einsum('ij,bjw->biw', tf_s, s1)
    s3 = jnp.einsum('ij,bjw->biw', tb_s, y); s4 = jnp.einsum('ij,bjw->biw', tb_s, s3)
    scat = jnp.concatenate([s1, s2, s3, s4], axis=-1)                # (B, F, 4W)
    ds = scat @ params['ws_t'].T + params['b_spatio'][:, 0][None, None, :]
    diff_spatio = jnp.swapaxes(ds, 1, 2)                             # (B, W, F)
    # LSTM
    lstm_in = jnp.concatenate([diff_tempo, diff_spatio, x_in], axis=-1)
    h = jnp.zeros((B, H), jnp.float32)
    c = jnp.zeros((B, H), jnp.float32)
    outs = []
    for t in range(W):
        pre = lstm_in[:, t, :] @ params['w_ih'] + h @ params['w_hh'] + params['b_lstm']
        i_g = jax.nn.sigmoid(pre[:, :H]); f_g = jax.nn.sigmoid(pre[:, H:2 * H])
        g_g = jnp.tanh(pre[:, 2 * H:3 * H]); o_g = jax.nn.sigmoid(pre[:, 3 * H:])
        c = f_g * c + i_g * g_g
        h = o_g * jnp.tanh(c)
        outs.append(h)
    hseq = jnp.stack(outs, axis=1)                                   # (B, W, H)
    g = hseq @ params['w_gmm'] + params['b_gmm']
    mu = g[..., :MD].reshape(B, W, M, D)
    sigma = jnp.exp(g[..., MD:2 * MD]).reshape(B, W, M, D)
    pi = jax.nn.softmax(g[..., 2 * MD:], axis=-1)
    return mu, sigma, pi


def init_params(key, input_size, hidden_size, window, mixture_dim,
                output_size, exo_size=0):
    # TODO(synk): only num_layers=1, bidirectional=False LSTM (as exercised
    # here) is implemented; dropout is inference-inactive anyway.
    F = input_size + exo_size
    H = hidden_size
    W = window
    I = 2 * F + H
    MD = mixture_dim * output_size
    G = 2 * MD + mixture_dim
    ks = jax.random.split(key, 5)

    def lin(k, fan_in, shape):
        return jax.random.normal(k, shape, jnp.float32) / jnp.sqrt(fan_in)

    return {
        # temporal DiffConv(F, H, K=2, root_weight=False): Linear(4F, H)
        'w_tempo': lin(ks[0], 4 * F, (4 * F, H)),
        'b_tempo': jnp.zeros((1, H), jnp.float32),
        # spatial DiffConv(W, W, K=2, root_weight=False): Linear(4W, W),
        # stored pre-transposed as hstack(W_k^T) -> (W, 4W)
        'ws_t': lin(ks[1], 4 * W, (W, 4 * W)),
        'b_spatio': jnp.zeros((W, 1), jnp.float32),
        # LSTM (gate order i, f, g, o), lane-dense (I,4H)/(H,4H); b = b_ih+b_hh
        'w_ih': lin(ks[2], I, (I, 4 * H)),
        'w_hh': lin(ks[3], H, (H, 4 * H)),
        'b_lstm': jnp.zeros((1, 4 * H), jnp.float32),
        # GMM / MDN head packed as [W_mu | W_logsigma | W_pi]
        'w_gmm': lin(ks[4], H, (H, G)),
        'b_gmm': jnp.zeros((1, G), jnp.float32),
        'mixture_dim': mixture_dim,
        'output_size': output_size,
    }


if __name__ == "__main__":
    B, W, F, H, M, D = 2, 8, 4, 32, 3, 4   # batch, window, input, hidden, mixtures, output

    key = jax.random.PRNGKey(0)
    kx, ka, kp = jax.random.split(key, 3)

    x = jax.random.normal(kx, (B, W, F), jnp.float32)

    # TODO(synk): natural visibility graph construction (get_adj / natural_vvg)
    # has no clean Pallas equivalent; pass a deterministic synthetic dense
    # temporal adjacency instead (equivalent to supplying temporal_edge_i/_w).
    tempo_adj = jnp.abs(jax.random.normal(ka, (B, W, W), jnp.float32)) * \
        (1.0 - jnp.eye(W, dtype=jnp.float32))

    # fixed spatial graph over the input channels (stands in for edge_index /
    # edge_weight passed to the constructor): fully connected, no self loops
    spatio_adj = (jnp.ones((F, F), jnp.float32) -
                  jnp.eye(F, dtype=jnp.float32)) * 0.5

    params = init_params(kp, F, H, W, M, D)

    mu, sigma, pi = sggtm_forward(params, x, tempo_adj, spatio_adj)
    jax.block_until_ready((mu, sigma, pi))

    assert mu.shape == (B, W, M, D)
    assert sigma.shape == (B, W, M, D)
    assert pi.shape == (B, W, M)
    assert bool(jnp.all(sigma > 0))
    # exact divide in-kernel softmax -> pi rows sum to 1 tightly
    assert bool(jnp.allclose(jnp.sum(pi, axis=-1), 1.0, atol=1e-4))

    # cross-check against a pure-JAX reference of the original forward
    # (loose tolerance: different matmul association orders / MXU rounding)
    mu_r, sigma_r, pi_r = sggtm_reference(params, x, tempo_adj, spatio_adj)
    assert bool(jnp.allclose(mu, mu_r, rtol=5e-2, atol=5e-2))
    assert bool(jnp.allclose(sigma, sigma_r, rtol=5e-2, atol=5e-2))
    assert bool(jnp.allclose(pi, pi_r, rtol=5e-2, atol=5e-2))

    print("KERNEL_OK")
</pallas_src>

<mosaic_0001>
module attributes {stable_mosaic.version = 11 : i64} {
  func.func @sggtm_fused_kernel(%arg0: i32, %arg1: memref<1x8x4xf32, #tpu.memory_space<vmem>>, %arg2: memref<1x4x8x8xf32, #tpu.memory_space<vmem>>, %arg3: memref<4x4x4xf32, #tpu.memory_space<vmem>>, %arg4: memref<4x8x8xf32, #tpu.memory_space<vmem>>, %arg5: memref<6x4x128xf32, #tpu.memory_space<vmem>>, %arg6: memref<32x128xf32, #tpu.memory_space<vmem>>, %arg7: memref<8x128xf32, #tpu.memory_space<vmem>>, %arg8: memref<32x128xf32, #tpu.memory_space<vmem>>, %arg9: memref<1x128xf32, #tpu.memory_space<vmem>>, %arg10: memref<1x8x128xf32, #tpu.memory_space<vmem>>) attributes {dimension_semantics = [#tpu.dimension_semantics<parallel>], iteration_bounds = array<i64: 2>, scalar_prefetch = 0 : i64, scratch_operands = 0 : i64, tpu.core_type = #tpu.core_type<tc>, window_params = [{transform_indices = @transform_0, window_bounds = array<i64: 1, 8, 4>}, {transform_indices = @transform_1, window_bounds = array<i64: 1, 4, 8, 8>}, {pipeline_mode = #tpu.pipeline_mode<synchronous>, transform_indices = @transform_2, window_bounds = array<i64: 4, 4, 4>}, {pipeline_mode = #tpu.pipeline_mode<synchronous>, transform_indices = @transform_3, window_bounds = array<i64: 4, 8, 8>}, {pipeline_mode = #tpu.pipeline_mode<synchronous>, transform_indices = @transform_4, window_bounds = array<i64: 6, 4, 128>}, {pipeline_mode = #tpu.pipeline_mode<synchronous>, transform_indices = @transform_5, window_bounds = array<i64: 32, 128>}, {pipeline_mode = #tpu.pipeline_mode<synchronous>, transform_indices = @transform_6, window_bounds = array<i64: 8, 128>}, {pipeline_mode = #tpu.pipeline_mode<synchronous>, transform_indices = @transform_7, window_bounds = array<i64: 32, 128>}, {pipeline_mode = #tpu.pipeline_mode<synchronous>, transform_indices = @transform_8, window_bounds = array<i64: 1, 128>}, {transform_indices = @transform_9, window_bounds = array<i64: 1, 8, 128>}]} {
    %c0 = arith.constant 0 : index
    %c0_0 = arith.constant 0 : index
    %c0_1 = arith.constant 0 : index
    %0 = vector.load %arg5[%c0, %c0_0, %c0_1] : memref<6x4x128xf32, #tpu.memory_space<vmem>>, vector<1x4x128xf32>
    %1 = vector.shape_cast %0 : vector<1x4x128xf32> to vector<4x128xf32>
    %c1 = arith.constant 1 : index
    %c0_2 = arith.constant 0 : index
    %c0_3 = arith.constant 0 : index
    %2 = vector.load %arg5[%c1, %c0_2, %c0_3] : memref<6x4x128xf32, #tpu.memory_space<vmem>>, vector<1x4x128xf32>
    %3 = vector.shape_cast %2 : vector<1x4x128xf32> to vector<4x128xf32>
    %c2 = arith.constant 2 : index
    %c0_4 = arith.constant 0 : index
    %c0_5 = arith.constant 0 : index
    %4 = vector.load %arg5[%c2, %c0_4, %c0_5] : memref<6x4x128xf32, #tpu.memory_space<vmem>>, vector<1x4x128xf32>
    %5 = vector.shape_cast %4 : vector<1x4x128xf32> to vector<4x128xf32>
    %c3 = arith.constant 3 : index
    %c0_6 = arith.constant 0 : index
    %c0_7 = arith.constant 0 : index
    %6 = vector.load %arg5[%c3, %c0_6, %c0_7] : memref<6x4x128xf32, #tpu.memory_space<vmem>>, vector<1x4x128xf32>
    %7 = vector.shape_cast %6 : vector<1x4x128xf32> to vector<4x128xf32>
    %c4 = arith.constant 4 : index
    %c0_8 = arith.constant 0 : index
    %c0_9 = arith.constant 0 : index
    %8 = vector.load %arg5[%c4, %c0_8, %c0_9] : memref<6x4x128xf32, #tpu.memory_space<vmem>>, vector<1x4x128xf32>
    %9 = vector.shape_cast %8 : vector<1x4x128xf32> to vector<4x128xf32>
    %c5 = arith.constant 5 : index
    %c0_10 = arith.constant 0 : index
    %c0_11 = arith.constant 0 : index
    %10 = vector.load %arg5[%c5, %c0_10, %c0_11] : memref<6x4x128xf32, #tpu.memory_space<vmem>>, vector<1x4x128xf32>
    %11 = vector.shape_cast %10 : vector<1x4x128xf32> to vector<4x128xf32>
    %c0_12 = arith.constant 0 : index
    %c0_13 = arith.constant 0 : index
    %c0_14 = arith.constant 0 : index
    %12 = vector.load %arg3[%c0_12, %c0_13, %c0_14] : memref<4x4x4xf32, #tpu.memory_space<vmem>>, vector<1x4x4xf32>
    %13 = vector.shape_cast %12 : vector<1x4x4xf32> to vector<4x4xf32>
    %c1_15 = arith.constant 1 : index
    %c0_16 = arith.constant 0 : index
    %c0_17 = arith.constant 0 : index
    %14 = vector.load %arg3[%c1_15, %c0_16, %c0_17] : memref<4x4x4xf32, #tpu.memory_space<vmem>>, vector<1x4x4xf32>
    %15 = vector.shape_cast %14 : vector<1x4x4xf32> to vector<4x4xf32>
    %c2_18 = arith.constant 2 : index
    %c0_19 = arith.constant 0 : index
    %c0_20 = arith.constant 0 : index
    %16 = vector.load %arg3[%c2_18, %c0_19, %c0_20] : memref<4x4x4xf32, #tpu.memory_space<vmem>>, vector<1x4x4xf32>
    %17 = vector.shape_cast %16 : vector<1x4x4xf32> to vector<4x4xf32>
    %c3_21 = arith.constant 3 : index
    %c0_22 = arith.constant 0 : index
    %c0_23 = arith.constant 0 : index
    %18 = vector.load %arg3[%c3_21, %c0_22, %c0_23] : memref<4x4x4xf32, #tpu.memory_space<vmem>>, vector<1x4x4xf32>
    %19 = vector.shape_cast %18 : vector<1x4x4xf32> to vector<4x4xf32>
    %c0_24 = arith.constant 0 : index
    %c0_25 = arith.constant 0 : index
    %c0_26 = arith.constant 0 : index
    %20 = vector.load %arg4[%c0_24, %c0_25, %c0_26] : memref<4x8x8xf32, #tpu.memory_space<vmem>>, vector<1x8x8xf32>
    %21 = vector.shape_cast %20 : vector<1x8x8xf32> to vector<8x8xf32>
    %c1_27 = arith.constant 1 : index
    %c0_28 = arith.constant 0 : index
    %c0_29 = arith.constant 0 : index
    %22 = vector.load %arg4[%c1_27, %c0_28, %c0_29] : memref<4x8x8xf32, #tpu.memory_space<vmem>>, vector<1x8x8xf32>
    %23 = vector.shape_cast %22 : vector<1x8x8xf32> to vector<8x8xf32>
    %c2_30 = arith.constant 2 : index
    %c0_31 = arith.constant 0 : index
    %c0_32 = arith.constant 0 : index
    %24 = vector.load %arg4[%c2_30, %c0_31, %c0_32] : memref<4x8x8xf32, #tpu.memory_space<vmem>>, vector<1x8x8xf32>
    %25 = vector.shape_cast %24 : vector<1x8x8xf32> to vector<8x8xf32>
    %c3_33 = arith.constant 3 : index
    %c0_34 = arith.constant 0 : index
    %c0_35 = arith.constant 0 : index
    %26 = vector.load %arg4[%c3_33, %c0_34, %c0_35] : memref<4x8x8xf32, #tpu.memory_space<vmem>>, vector<1x8x8xf32>
    %27 = vector.shape_cast %26 : vector<1x8x8xf32> to vector<8x8xf32>
    %c0_36 = arith.constant 0 : index
    %c0_37 = arith.constant 0 : index
    %28 = vector.load %arg7[%c0_36, %c0_37] : memref<8x128xf32, #tpu.memory_space<vmem>>, vector<8x128xf32>
    %c0_38 = arith.constant 0 : index
    %c0_39 = arith.constant 0 : index
    %29 = vector.load %arg6[%c0_38, %c0_39] : memref<32x128xf32, #tpu.memory_space<vmem>>, vector<32x128xf32>
    %c0_40 = arith.constant 0 : index
    %c0_41 = arith.constant 0 : index
    %c0_42 = arith.constant 0 : index
    %30 = vector.load %arg1[%c0_40, %c0_41, %c0_42] : memref<1x8x4xf32, #tpu.memory_space<vmem>>, vector<1x8x4xf32>
    %31 = vector.shape_cast %30 : vector<1x8x4xf32> to vector<8x4xf32>
    %cst = arith.constant dense<0.000000e+00> : vector<8x128xf32>
    %32 = tpu.matmul %31, %11, %cst {dimension_numbers = #tpu.dot_dimension_numbers<[1], [0], [0], [1], [0, 0, 1, 1], [], []>} : vector<8x4xf32>, vector<4x128xf32>, vector<8x128xf32> -> vector<8x128xf32>
    %33 = arith.addf %28, %32 : vector<8x128xf32>
    %c0_43 = arith.constant 0 : index
    %c0_44 = arith.constant 0 : index
    %c0_45 = arith.constant 0 : index
    %c0_46 = arith.constant 0 : index
    %34 = vector.load %arg2[%c0_43, %c0_44, %c0_45, %c0_46] : memref<1x4x8x8xf32, #tpu.memory_space<vmem>>, vector<1x1x8x8xf32>
    %35 = vector.shape_cast %34 : vector<1x1x8x8xf32> to vector<8x8xf32>
    %cst_47 = arith.constant dense<0.000000e+00> : vector<8x4xf32>
    %36 = tpu.matmul %35, %31, %cst_47 {dimension_numbers = #tpu.dot_dimension_numbers<[1], [0], [0], [1], [0, 0, 1, 1], [], []>} : vector<8x8xf32>, vector<8x4xf32>, vector<8x4xf32> -> vector<8x4xf32>
    %cst_48 = arith.constant dense<0.000000e+00> : vector<8x128xf32>
    %37 = tpu.matmul %36, %1, %cst_48 {dimension_numbers = #tpu.dot_dimension_numbers<[1], [0], [0], [1], [0, 0, 1, 1], [], []>} : vector<8x4xf32>, vector<4x128xf32>, vector<8x128xf32> -> vector<8x128xf32>
    %38 = arith.addf %33, %37 : vector<8x128xf32>
    %c0_49 = arith.constant 0 : index
    %c1_50 = arith.constant 1 : index
    %c0_51 = arith.constant 0 : index
    %c0_52 = arith.constant 0 : index
    %39 = vector.load %arg2[%c0_49, %c1_50, %c0_51, %c0_52] : memref<1x4x8x8xf32, #tpu.memory_space<vmem>>, vector<1x1x8x8xf32>
    %40 = vector.shape_cast %39 : vector<1x1x8x8xf32> to vector<8x8xf32>
    %cst_53 = arith.constant dense<0.000000e+00> : vector<8x4xf32>
    %41 = tpu.matmul %40, %31, %cst_53 {dimension_numbers = #tpu.dot_dimension_numbers<[1], [0], [0], [1], [0, 0, 1, 1], [], []>} : vector<8x8xf32>, vector<8x4xf32>, vector<8x4xf32> -> vector<8x4xf32>
    %cst_54 = arith.constant dense<0.000000e+00> : vector<8x128xf32>
    %42 = tpu.matmul %41, %3, %cst_54 {dimension_numbers = #tpu.dot_dimension_numbers<[1], [0], [0], [1], [0, 0, 1, 1], [], []>} : vector<8x4xf32>, vector<4x128xf32>, vector<8x128xf32> -> vector<8x128xf32>
    %43 = arith.addf %38, %42 : vector<8x128xf32>
    %c0_55 = arith.constant 0 : index
    %c2_56 = arith.constant 2 : index
    %c0_57 = arith.constant 0 : index
    %c0_58 = arith.constant 0 : index
    %44 = vector.load %arg2[%c0_55, %c2_56, %c0_57, %c0_58] : memref<1x4x8x8xf32, #tpu.memory_space<vmem>>, vector<1x1x8x8xf32>
    %45 = vector.shape_cast %44 : vector<1x1x8x8xf32> to vector<8x8xf32>
    %cst_59 = arith.constant dense<0.000000e+00> : vector<8x4xf32>
    %46 = tpu.matmul %45, %31, %cst_59 {dimension_numbers = #tpu.dot_dimension_numbers<[1], [0], [0], [1], [0, 0, 1, 1], [], []>} : vector<8x8xf32>, vector<8x4xf32>, vector<8x4xf32> -> vector<8x4xf32>
    %cst_60 = arith.constant dense<0.000000e+00> : vector<8x128xf32>
    %47 = tpu.matmul %46, %5, %cst_60 {dimension_numbers = #tpu.dot_dimension_numbers<[1], [0], [0], [1], [0, 0, 1, 1], [], []>} : vector<8x4xf32>, vector<4x128xf32>, vector<8x128xf32> -> vector<8x128xf32>
    %48 = arith.addf %43, %47 : vector<8x128xf32>
    %c0_61 = arith.constant 0 : index
    %c3_62 = arith.constant 3 : index
    %c0_63 = arith.constant 0 : index
    %c0_64 = arith.constant 0 : index
    %49 = vector.load %arg2[%c0_61, %c3_62, %c0_63, %c0_64] : memref<1x4x8x8xf32, #tpu.memory_space<vmem>>, vector<1x1x8x8xf32>
    %50 = vector.shape_cast %49 : vector<1x1x8x8xf32> to vector<8x8xf32>
    %cst_65 = arith.constant dense<0.000000e+00> : vector<8x4xf32>
    %51 = tpu.matmul %50, %31, %cst_65 {dimension_numbers = #tpu.dot_dimension_numbers<[1], [0], [0], [1], [0, 0, 1, 1], [], []>} : vector<8x8xf32>, vector<8x4xf32>, vector<8x4xf32> -> vector<8x4xf32>
    %cst_66 = arith.constant dense<0.000000e+00> : vector<8x128xf32>
    %52 = tpu.matmul %51, %7, %cst_66 {dimension_numbers = #tpu.dot_dimension_numbers<[1], [0], [0], [1], [0, 0, 1, 1], [], []>} : vector<8x4xf32>, vector<4x128xf32>, vector<8x128xf32> -> vector<8x128xf32>
    %53 = arith.addf %48, %52 : vector<8x128xf32>
    %cst_67 = arith.constant dense<0.000000e+00> : vector<8x4xf32>
    %54 = tpu.matmul %31, %13, %cst_67 {dimension_numbers = #tpu.dot_dimension_numbers<[1], [0], [0], [1], [0, 0, 1, 1], [], []>} : vector<8x4xf32>, vector<4x4xf32>, vector<8x4xf32> -> vector<8x4xf32>
    %cst_68 = arith.constant dense<0.000000e+00> : vector<8x4xf32>
    %55 = tpu.matmul %21, %54, %cst_68 {dimension_numbers = #tpu.dot_dimension_numbers<[1], [0], [0], [1], [0, 0, 1, 1], [], []>} : vector<8x8xf32>, vector<8x4xf32>, vector<8x4xf32> -> vector<8x4xf32>
    %cst_69 = arith.constant dense<0.000000e+00> : vector<8x4xf32>
    %56 = tpu.matmul %31, %15, %cst_69 {dimension_numbers = #tpu.dot_dimension_numbers<[1], [0], [0], [1], [0, 0, 1, 1], [], []>} : vector<8x4xf32>, vector<4x4xf32>, vector<8x4xf32> -> vector<8x4xf32>
    %cst_70 = arith.constant dense<0.000000e+00> : vector<8x4xf32>
    %57 = tpu.matmul %23, %56, %cst_70 {dimension_numbers = #tpu.dot_dimension_numbers<[1], [0], [0], [1], [0, 0, 1, 1], [], []>} : vector<8x8xf32>, vector<8x4xf32>, vector<8x4xf32> -> vector<8x4xf32>
    %58 = arith.addf %55, %57 : vector<8x4xf32>
    %cst_71 = arith.constant dense<0.000000e+00> : vector<8x4xf32>
    %59 = tpu.matmul %31, %17, %cst_71 {dimension_numbers = #tpu.dot_dimension_numbers<[1], [0], [0], [1], [0, 0, 1, 1], [], []>} : vector<8x4xf32>, vector<4x4xf32>, vector<8x4xf32> -> vector<8x4xf32>
    %cst_72 = arith.constant dense<0.000000e+00> : vector<8x4xf32>
    %60 = tpu.matmul %25, %59, %cst_72 {dimension_numbers = #tpu.dot_dimension_numbers<[1], [0], [0], [1], [0, 0, 1, 1], [], []>} : vector<8x8xf32>, vector<8x4xf32>, vector<8x4xf32> -> vector<8x4xf32>
    %61 = arith.addf %58, %60 : vector<8x4xf32>
    %cst_73 = arith.constant dense<0.000000e+00> : vector<8x4xf32>
    %62 = tpu.matmul %31, %19, %cst_73 {dimension_numbers = #tpu.dot_dimension_numbers<[1], [0], [0], [1], [0, 0, 1, 1], [], []>} : vector<8x4xf32>, vector<4x4xf32>, vector<8x4xf32> -> vector<8x4xf32>
    %cst_74 = arith.constant dense<0.000000e+00> : vector<8x4xf32>
    %63 = tpu.matmul %27, %62, %cst_74 {dimension_numbers = #tpu.dot_dimension_numbers<[1], [0], [0], [1], [0, 0, 1, 1], [], []>} : vector<8x8xf32>, vector<8x4xf32>, vector<8x4xf32> -> vector<8x4xf32>
    %64 = arith.addf %61, %63 : vector<8x4xf32>
    %cst_75 = arith.constant dense<0.000000e+00> : vector<8x128xf32>
    %65 = tpu.matmul %64, %9, %cst_75 {dimension_numbers = #tpu.dot_dimension_numbers<[1], [0], [0], [1], [0, 0, 1, 1], [], []>} : vector<8x4xf32>, vector<4x128xf32>, vector<8x128xf32> -> vector<8x128xf32>
    %66 = arith.addf %53, %65 : vector<8x128xf32>
    %67 = vector.shape_cast %66 : vector<8x128xf32> to vector<8x1x128xf32>
    %cst_76 = arith.constant 0.000000e+00 : f32
    %68 = vector.broadcast %cst_76 : f32 to vector<1x32xf32>
    %cst_77 = arith.constant 0.000000e+00 : f32
    %69 = vector.broadcast %cst_77 : f32 to vector<1x32xf32>
    %70 = vector.extract_strided_slice %67 {offsets = [0, 0, 0], sizes = [1, 1, 128], strides = [1, 1, 1]} : vector<8x1x128xf32> to vector<1x1x128xf32>
    %71 = vector.shape_cast %70 : vector<1x1x128xf32> to vector<1x128xf32>
    %cst_78 = arith.constant dense<0.000000e+00> : vector<1x128xf32>
    %72 = tpu.matmul %68, %29, %cst_78 {dimension_numbers = #tpu.dot_dimension_numbers<[1], [0], [0], [1], [0, 0, 1, 1], [], []>} : vector<1x32xf32>, vector<32x128xf32>, vector<1x128xf32> -> vector<1x128xf32>
    %73 = arith.addf %71, %72 : vector<1x128xf32>
    %74 = vector.extract_strided_slice %73 {offsets = [0, 0], sizes = [1, 32], strides = [1, 1]} : vector<1x128xf32> to vector<1x32xf32>
    %75 = arith.negf %74 : vector<1x32xf32>
    %76 = math.exp %75 : vector<1x32xf32>
    %cst_79 = arith.constant 1.000000e+00 : f32
    %77 = vector.broadcast %cst_79 : f32 to vector<1x32xf32>
    %78 = arith.addf %77, %76 : vector<1x32xf32>
    %79 = arith.divf %77, %78 : vector<1x32xf32>
    %80 = vector.extract_strided_slice %73 {offsets = [0, 32], sizes = [1, 32], strides = [1, 1]} : vector<1x128xf32> to vector<1x32xf32>
    %81 = arith.negf %80 : vector<1x32xf32>
    %82 = math.exp %81 : vector<1x32xf32>
    %cst_80 = arith.constant 1.000000e+00 : f32
    %83 = vector.broadcast %cst_80 : f32 to vector<1x32xf32>
    %84 = arith.addf %83, %82 : vector<1x32xf32>
    %85 = arith.divf %83, %84 : vector<1x32xf32>
    %86 = vector.extract_strided_slice %73 {offsets = [0, 64], sizes = [1, 32], strides = [1, 1]} : vector<1x128xf32> to vector<1x32xf32>
    %87 = math.tanh %86 : vector<1x32xf32>
    %88 = vector.extract_strided_slice %73 {offsets = [0, 96], sizes = [1, 32], strides = [1, 1]} : vector<1x128xf32> to vector<1x32xf32>
    %89 = arith.negf %88 : vector<1x32xf32>
    %90 = math.exp %89 : vector<1x32xf32>
    %cst_81 = arith.constant 1.000000e+00 : f32
    %91 = vector.broadcast %cst_81 : f32 to vector<1x32xf32>
    %92 = arith.addf %91, %90 : vector<1x32xf32>
    %93 = arith.divf %91, %92 : vector<1x32xf32>
    %94 = arith.mulf %85, %69 : vector<1x32xf32>
    %95 = arith.mulf %79, %87 : vector<1x32xf32>
    %96 = arith.addf %94, %95 : vector<1x32xf32>
    %97 = math.tanh %96 : vector<1x32xf32>
    %98 = arith.mulf %93, %97 : vector<1x32xf32>
    %99 = vector.extract_strided_slice %67 {offsets = [1, 0, 0], sizes = [1, 1, 128], strides = [1, 1, 1]} : vector<8x1x128xf32> to vector<1x1x128xf32>
    %100 = vector.shape_cast %99 : vector<1x1x128xf32> to vector<1x128xf32>
    %cst_82 = arith.constant dense<0.000000e+00> : vector<1x128xf32>
    %101 = tpu.matmul %98, %29, %cst_82 {dimension_numbers = #tpu.dot_dimension_numbers<[1], [0], [0], [1], [0, 0, 1, 1], [], []>} : vector<1x32xf32>, vector<32x128xf32>, vector<1x128xf32> -> vector<1x128xf32>
    %102 = arith.addf %100, %101 : vector<1x128xf32>
    %103 = vector.extract_strided_slice %102 {offsets = [0, 0], sizes = [1, 32], strides = [1, 1]} : vector<1x128xf32> to vector<1x32xf32>
    %104 = arith.negf %103 : vector<1x32xf32>
    %105 = math.exp %104 : vector<1x32xf32>
    %cst_83 = arith.constant 1.000000e+00 : f32
    %106 = vector.broadcast %cst_83 : f32 to vector<1x32xf32>
    %107 = arith.addf %106, %105 : vector<1x32xf32>
    %108 = arith.divf %106, %107 : vector<1x32xf32>
    %109 = vector.extract_strided_slice %102 {offsets = [0, 32], sizes = [1, 32], strides = [1, 1]} : vector<1x128xf32> to vector<1x32xf32>
    %110 = arith.negf %109 : vector<1x32xf32>
    %111 = math.exp %110 : vector<1x32xf32>
    %cst_84 = arith.constant 1.000000e+00 : f32
    %112 = vector.broadcast %cst_84 : f32 to vector<1x32xf32>
    %113 = arith.addf %112, %111 : vector<1x32xf32>
    %114 = arith.divf %112, %113 : vector<1x32xf32>
    %115 = vector.extract_strided_slice %102 {offsets = [0, 64], sizes = [1, 32], strides = [1, 1]} : vector<1x128xf32> to vector<1x32xf32>
    %116 = math.tanh %115 : vector<1x32xf32>
    %117 = vector.extract_strided_slice %102 {offsets = [0, 96], sizes = [1, 32], strides = [1, 1]} : vector<1x128xf32> to vector<1x32xf32>
    %118 = arith.negf %117 : vector<1x32xf32>
    %119 = math.exp %118 : vector<1x32xf32>
    %cst_85 = arith.constant 1.000000e+00 : f32
    %120 = vector.broadcast %cst_85 : f32 to vector<1x32xf32>
    %121 = arith.addf %120, %119 : vector<1x32xf32>
    %122 = arith.divf %120, %121 : vector<1x32xf32>
    %123 = arith.mulf %114, %96 : vector<1x32xf32>
    %124 = arith.mulf %108, %116 : vector<1x32xf32>
    %125 = arith.addf %123, %124 : vector<1x32xf32>
    %126 = math.tanh %125 : vector<1x32xf32>
    %127 = arith.mulf %122, %126 : vector<1x32xf32>
    %128 = vector.extract_strided_slice %67 {offsets = [2, 0, 0], sizes = [1, 1, 128], strides = [1, 1, 1]} : vector<8x1x128xf32> to vector<1x1x128xf32>
    %129 = vector.shape_cast %128 : vector<1x1x128xf32> to vector<1x128xf32>
    %cst_86 = arith.constant dense<0.000000e+00> : vector<1x128xf32>
    %130 = tpu.matmul %127, %29, %cst_86 {dimension_numbers = #tpu.dot_dimension_numbers<[1], [0], [0], [1], [0, 0, 1, 1], [], []>} : vector<1x32xf32>, vector<32x128xf32>, vector<1x128xf32> -> vector<1x128xf32>
    %131 = arith.addf %129, %130 : vector<1x128xf32>
    %132 = vector.extract_strided_slice %131 {offsets = [0, 0], sizes = [1, 32], strides = [1, 1]} : vector<1x128xf32> to vector<1x32xf32>
    %133 = arith.negf %132 : vector<1x32xf32>
    %134 = math.exp %133 : vector<1x32xf32>
    %cst_87 = arith.constant 1.000000e+00 : f32
    %135 = vector.broadcast %cst_87 : f32 to vector<1x32xf32>
    %136 = arith.addf %135, %134 : vector<1x32xf32>
    %137 = arith.divf %135, %136 : vector<1x32xf32>
    %138 = vector.extract_strided_slice %131 {offsets = [0, 32], sizes = [1, 32], strides = [1, 1]} : vector<1x128xf32> to vector<1x32xf32>
    %139 = arith.negf %138 : vector<1x32xf32>
    %140 = math.exp %139 : vector<1x32xf32>
    %cst_88 = arith.constant 1.000000e+00 : f32
    %141 = vector.broadcast %cst_88 : f32 to vector<1x32xf32>
    %142 = arith.addf %141, %140 : vector<1x32xf32>
    %143 = arith.divf %141, %142 : vector<1x32xf32>
    %144 = vector.extract_strided_slice %131 {offsets = [0, 64], sizes = [1, 32], strides = [1, 1]} : vector<1x128xf32> to vector<1x32xf32>
    %145 = math.tanh %144 : vector<1x32xf32>
    %146 = vector.extract_strided_slice %131 {offsets = [0, 96], sizes = [1, 32], strides = [1, 1]} : vector<1x128xf32> to vector<1x32xf32>
    %147 = arith.negf %146 : vector<1x32xf32>
    %148 = math.exp %147 : vector<1x32xf32>
    %cst_89 = arith.constant 1.000000e+00 : f32
    %149 = vector.broadcast %cst_89 : f32 to vector<1x32xf32>
    %150 = arith.addf %149, %148 : vector<1x32xf32>
    %151 = arith.divf %149, %150 : vector<1x32xf32>
    %152 = arith.mulf %143, %125 : vector<1x32xf32>
    %153 = arith.mulf %137, %145 : vector<1x32xf32>
    %154 = arith.addf %152, %153 : vector<1x32xf32>
    %155 = math.tanh %154 : vector<1x32xf32>
    %156 = arith.mulf %151, %155 : vector<1x32xf32>
    %157 = vector.extract_strided_slice %67 {offsets = [3, 0, 0], sizes = [1, 1, 128], strides = [1, 1, 1]} : vector<8x1x128xf32> to vector<1x1x128xf32>
    %158 = vector.shape_cast %157 : vector<1x1x128xf32> to vector<1x128xf32>
    %cst_90 = arith.constant dense<0.000000e+00> : vector<1x128xf32>
    %159 = tpu.matmul %156, %29, %cst_90 {dimension_numbers = #tpu.dot_dimension_numbers<[1], [0], [0], [1], [0, 0, 1, 1], [], []>} : vector<1x32xf32>, vector<32x128xf32>, vector<1x128xf32> -> vector<1x128xf32>
    %160 = arith.addf %158, %159 : vector<1x128xf32>
    %161 = vector.extract_strided_slice %160 {offsets = [0, 0], sizes = [1, 32], strides = [1, 1]} : vector<1x128xf32> to vector<1x32xf32>
    %162 = arith.negf %161 : vector<1x32xf32>
    %163 = math.exp %162 : vector<1x32xf32>
    %cst_91 = arith.constant 1.000000e+00 : f32
    %164 = vector.broadcast %cst_91 : f32 to vector<1x32xf32>
    %165 = arith.addf %164, %163 : vector<1x32xf32>
    %166 = arith.divf %164, %165 : vector<1x32xf32>
    %167 = vector.extract_strided_slice %160 {offsets = [0, 32], sizes = [1, 32], strides = [1, 1]} : vector<1x128xf32> to vector<1x32xf32>
    %168 = arith.negf %167 : vector<1x32xf32>
    %169 = math.exp %168 : vector<1x32xf32>
    %cst_92 = arith.constant 1.000000e+00 : f32
    %170 = vector.broadcast %cst_92 : f32 to vector<1x32xf32>
    %171 = arith.addf %170, %169 : vector<1x32xf32>
    %172 = arith.divf %170, %171 : vector<1x32xf32>
    %173 = vector.extract_strided_slice %160 {offsets = [0, 64], sizes = [1, 32], strides = [1, 1]} : vector<1x128xf32> to vector<1x32xf32>
    %174 = math.tanh %173 : vector<1x32xf32>
    %175 = vector.extract_strided_slice %160 {offsets = [0, 96], sizes = [1, 32], strides = [1, 1]} : vector<1x128xf32> to vector<1x32xf32>
    %176 = arith.negf %175 : vector<1x32xf32>
    %177 = math.exp %176 : vector<1x32xf32>
    %cst_93 = arith.constant 1.000000e+00 : f32
    %178 = vector.broadcast %cst_93 : f32 to vector<1x32xf32>
    %179 = arith.addf %178, %177 : vector<1x32xf32>
    %180 = arith.divf %178, %179 : vector<1x32xf32>
    %181 = arith.mulf %172, %154 : vector<1x32xf32>
    %182 = arith.mulf %166, %174 : vector<1x32xf32>
    %183 = arith.addf %181, %182 : vector<1x32xf32>
    %184 = math.tanh %183 : vector<1x32xf32>
    %185 = arith.mulf %180, %184 : vector<1x32xf32>
    %186 = vector.extract_strided_slice %67 {offsets = [4, 0, 0], sizes = [1, 1, 128], strides = [1, 1, 1]} : vector<8x1x128xf32> to vector<1x1x128xf32>
    %187 = vector.shape_cast %186 : vector<1x1x128xf32> to vector<1x128xf32>
    %cst_94 = arith.constant dense<0.000000e+00> : vector<1x128xf32>
    %188 = tpu.matmul %185, %29, %cst_94 {dimension_numbers = #tpu.dot_dimension_numbers<[1], [0], [0], [1], [0, 0, 1, 1], [], []>} : vector<1x32xf32>, vector<32x128xf32>, vector<1x128xf32> -> vector<1x128xf32>
    %189 = arith.addf %187, %188 : vector<1x128xf32>
    %190 = vector.extract_strided_slice %189 {offsets = [0, 0], sizes = [1, 32], strides = [1, 1]} : vector<1x128xf32> to vector<1x32xf32>
    %191 = arith.negf %190 : vector<1x32xf32>
    %192 = math.exp %191 : vector<1x32xf32>
    %cst_95 = arith.constant 1.000000e+00 : f32
    %193 = vector.broadcast %cst_95 : f32 to vector<1x32xf32>
    %194 = arith.addf %193, %192 : vector<1x32xf32>
    %195 = arith.divf %193, %194 : vector<1x32xf32>
    %196 = vector.extract_strided_slice %189 {offsets = [0, 32], sizes = [1, 32], strides = [1, 1]} : vector<1x128xf32> to vector<1x32xf32>
    %197 = arith.negf %196 : vector<1x32xf32>
    %198 = math.exp %197 : vector<1x32xf32>
    %cst_96 = arith.constant 1.000000e+00 : f32
    %199 = vector.broadcast %cst_96 : f32 to vector<1x32xf32>
    %200 = arith.addf %199, %198 : vector<1x32xf32>
    %201 = arith.divf %199, %200 : vector<1x32xf32>
    %202 = vector.extract_strided_slice %189 {offsets = [0, 64], sizes = [1, 32], strides = [1, 1]} : vector<1x128xf32> to vector<1x32xf32>
    %203 = math.tanh %202 : vector<1x32xf32>
    %204 = vector.extract_strided_slice %189 {offsets = [0, 96], sizes = [1, 32], strides = [1, 1]} : vector<1x128xf32> to vector<1x32xf32>
    %205 = arith.negf %204 : vector<1x32xf32>
    %206 = math.exp %205 : vector<1x32xf32>
    %cst_97 = arith.constant 1.000000e+00 : f32
    %207 = vector.broadcast %cst_97 : f32 to vector<1x32xf32>
    %208 = arith.addf %207, %206 : vector<1x32xf32>
    %209 = arith.divf %207, %208 : vector<1x32xf32>
    %210 = arith.mulf %201, %183 : vector<1x32xf32>
    %211 = arith.mulf %195, %203 : vector<1x32xf32>
    %212 = arith.addf %210, %211 : vector<1x32xf32>
    %213 = math.tanh %212 : vector<1x32xf32>
    %214 = arith.mulf %209, %213 : vector<1x32xf32>
    %215 = vector.extract_strided_slice %67 {offsets = [5, 0, 0], sizes = [1, 1, 128], strides = [1, 1, 1]} : vector<8x1x128xf32> to vector<1x1x128xf32>
    %216 = vector.shape_cast %215 : vector<1x1x128xf32> to vector<1x128xf32>
    %cst_98 = arith.constant dense<0.000000e+00> : vector<1x128xf32>
    %217 = tpu.matmul %214, %29, %cst_98 {dimension_numbers = #tpu.dot_dimension_numbers<[1], [0], [0], [1], [0, 0, 1, 1], [], []>} : vector<1x32xf32>, vector<32x128xf32>, vector<1x128xf32> -> vector<1x128xf32>
    %218 = arith.addf %216, %217 : vector<1x128xf32>
    %219 = vector.extract_strided_slice %218 {offsets = [0, 0], sizes = [1, 32], strides = [1, 1]} : vector<1x128xf32> to vector<1x32xf32>
    %220 = arith.negf %219 : vector<1x32xf32>
    %221 = math.exp %220 : vector<1x32xf32>
    %cst_99 = arith.constant 1.000000e+00 : f32
    %222 = vector.broadcast %cst_99 : f32 to vector<1x32xf32>
    %223 = arith.addf %222, %221 : vector<1x32xf32>
    %224 = arith.divf %222, %223 : vector<1x32xf32>
    %225 = vector.extract_strided_slice %218 {offsets = [0, 32], sizes = [1, 32], strides = [1, 1]} : vector<1x128xf32> to vector<1x32xf32>
    %226 = arith.negf %225 : vector<1x32xf32>
    %227 = math.exp %226 : vector<1x32xf32>
    %cst_100 = arith.constant 1.000000e+00 : f32
    %228 = vector.broadcast %cst_100 : f32 to vector<1x32xf32>
    %229 = arith.addf %228, %227 : vector<1x32xf32>
    %230 = arith.divf %228, %229 : vector<1x32xf32>
    %231 = vector.extract_strided_slice %218 {offsets = [0, 64], sizes = [1, 32], strides = [1, 1]} : vector<1x128xf32> to vector<1x32xf32>
    %232 = math.tanh %231 : vector<1x32xf32>
    %233 = vector.extract_strided_slice %218 {offsets = [0, 96], sizes = [1, 32], strides = [1, 1]} : vector<1x128xf32> to vector<1x32xf32>
    %234 = arith.negf %233 : vector<1x32xf32>
    %235 = math.exp %234 : vector<1x32xf32>
    %cst_101 = arith.constant 1.000000e+00 : f32
    %236 = vector.broadcast %cst_101 : f32 to vector<1x32xf32>
    %237 = arith.addf %236, %235 : vector<1x32xf32>
    %238 = arith.divf %236, %237 : vector<1x32xf32>
    %239 = arith.mulf %230, %212 : vector<1x32xf32>
    %240 = arith.mulf %224, %232 : vector<1x32xf32>
    %241 = arith.addf %239, %240 : vector<1x32xf32>
    %242 = math.tanh %241 : vector<1x32xf32>
    %243 = arith.mulf %238, %242 : vector<1x32xf32>
    %244 = vector.extract_strided_slice %67 {offsets = [6, 0, 0], sizes = [1, 1, 128], strides = [1, 1, 1]} : vector<8x1x128xf32> to vector<1x1x128xf32>
    %245 = vector.shape_cast %244 : vector<1x1x128xf32> to vector<1x128xf32>
    %cst_102 = arith.constant dense<0.000000e+00> : vector<1x128xf32>
    %246 = tpu.matmul %243, %29, %cst_102 {dimension_numbers = #tpu.dot_dimension_numbers<[1], [0], [0], [1], [0, 0, 1, 1], [], []>} : vector<1x32xf32>, vector<32x128xf32>, vector<1x128xf32> -> vector<1x128xf32>
    %247 = arith.addf %245, %246 : vector<1x128xf32>
    %248 = vector.extract_strided_slice %247 {offsets = [0, 0], sizes = [1, 32], strides = [1, 1]} : vector<1x128xf32> to vector<1x32xf32>
    %249 = arith.negf %248 : vector<1x32xf32>
    %250 = math.exp %249 : vector<1x32xf32>
    %cst_103 = arith.constant 1.000000e+00 : f32
    %251 = vector.broadcast %cst_103 : f32 to vector<1x32xf32>
    %252 = arith.addf %251, %250 : vector<1x32xf32>
    %253 = arith.divf %251, %252 : vector<1x32xf32>
    %254 = vector.extract_strided_slice %247 {offsets = [0, 32], sizes = [1, 32], strides = [1, 1]} : vector<1x128xf32> to vector<1x32xf32>
    %255 = arith.negf %254 : vector<1x32xf32>
    %256 = math.exp %255 : vector<1x32xf32>
    %cst_104 = arith.constant 1.000000e+00 : f32
    %257 = vector.broadcast %cst_104 : f32 to vector<1x32xf32>
    %258 = arith.addf %257, %256 : vector<1x32xf32>
    %259 = arith.divf %257, %258 : vector<1x32xf32>
    %260 = vector.extract_strided_slice %247 {offsets = [0, 64], sizes = [1, 32], strides = [1, 1]} : vector<1x128xf32> to vector<1x32xf32>
    %261 = math.tanh %260 : vector<1x32xf32>
    %262 = vector.extract_strided_slice %247 {offsets = [0, 96], sizes = [1, 32], strides = [1, 1]} : vector<1x128xf32> to vector<1x32xf32>
    %263 = arith.negf %262 : vector<1x32xf32>
    %264 = math.exp %263 : vector<1x32xf32>
    %cst_105 = arith.constant 1.000000e+00 : f32
    %265 = vector.broadcast %cst_105 : f32 to vector<1x32xf32>
    %266 = arith.addf %265, %264 : vector<1x32xf32>
    %267 = arith.divf %265, %266 : vector<1x32xf32>
    %268 = arith.mulf %259, %241 : vector<1x32xf32>
    %269 = arith.mulf %253, %261 : vector<1x32xf32>
    %270 = arith.addf %268, %269 : vector<1x32xf32>
    %271 = math.tanh %270 : vector<1x32xf32>
    %272 = arith.mulf %267, %271 : vector<1x32xf32>
    %273 = vector.extract_strided_slice %67 {offsets = [7, 0, 0], sizes = [1, 1, 128], strides = [1, 1, 1]} : vector<8x1x128xf32> to vector<1x1x128xf32>
    %274 = vector.shape_cast %273 : vector<1x1x128xf32> to vector<1x128xf32>
    %cst_106 = arith.constant dense<0.000000e+00> : vector<1x128xf32>
    %275 = tpu.matmul %272, %29, %cst_106 {dimension_numbers = #tpu.dot_dimension_numbers<[1], [0], [0], [1], [0, 0, 1, 1], [], []>} : vector<1x32xf32>, vector<32x128xf32>, vector<1x128xf32> -> vector<1x128xf32>
    %276 = arith.addf %274, %275 : vector<1x128xf32>
    %277 = vector.extract_strided_slice %276 {offsets = [0, 0], sizes = [1, 32], strides = [1, 1]} : vector<1x128xf32> to vector<1x32xf32>
    %278 = arith.negf %277 : vector<1x32xf32>
    %279 = math.exp %278 : vector<1x32xf32>
    %cst_107 = arith.constant 1.000000e+00 : f32
    %280 = vector.broadcast %cst_107 : f32 to vector<1x32xf32>
    %281 = arith.addf %280, %279 : vector<1x32xf32>
    %282 = arith.divf %280, %281 : vector<1x32xf32>
    %283 = vector.extract_strided_slice %276 {offsets = [0, 32], sizes = [1, 32], strides = [1, 1]} : vector<1x128xf32> to vector<1x32xf32>
    %284 = arith.negf %283 : vector<1x32xf32>
    %285 = math.exp %284 : vector<1x32xf32>
    %cst_108 = arith.constant 1.000000e+00 : f32
    %286 = vector.broadcast %cst_108 : f32 to vector<1x32xf32>
    %287 = arith.addf %286, %285 : vector<1x32xf32>
    %288 = arith.divf %286, %287 : vector<1x32xf32>
    %289 = vector.extract_strided_slice %276 {offsets = [0, 64], sizes = [1, 32], strides = [1, 1]} : vector<1x128xf32> to vector<1x32xf32>
    %290 = math.tanh %289 : vector<1x32xf32>
    %291 = vector.extract_strided_slice %276 {offsets = [0, 96], sizes = [1, 32], strides = [1, 1]} : vector<1x128xf32> to vector<1x32xf32>
    %292 = arith.negf %291 : vector<1x32xf32>
    %293 = math.exp %292 : vector<1x32xf32>
    %cst_109 = arith.constant 1.000000e+00 : f32
    %294 = vector.broadcast %cst_109 : f32 to vector<1x32xf32>
    %295 = arith.addf %294, %293 : vector<1x32xf32>
    %296 = arith.divf %294, %295 : vector<1x32xf32>
    %297 = arith.mulf %288, %270 : vector<1x32xf32>
    %298 = arith.mulf %282, %290 : vector<1x32xf32>
    %299 = arith.addf %297, %298 : vector<1x32xf32>
    %300 = math.tanh %299 : vector<1x32xf32>
    %301 = arith.mulf %296, %300 : vector<1x32xf32>
    %302 = tpu.concatenate %98, %127, %156, %185, %214, %243, %272, %301 in 0 : vector<1x32xf32>, vector<1x32xf32>, vector<1x32xf32>, vector<1x32xf32>, vector<1x32xf32>, vector<1x32xf32>, vector<1x32xf32>, vector<1x32xf32> -> vector<8x32xf32>
    %c0_110 = arith.constant 0 : index
    %c0_111 = arith.constant 0 : index
    %303 = vector.load %arg8[%c0_110, %c0_111] : memref<32x128xf32, #tpu.memory_space<vmem>>, vector<32x128xf32>
    %cst_112 = arith.constant dense<0.000000e+00> : vector<8x128xf32>
    %304 = tpu.matmul %302, %303, %cst_112 {dimension_numbers = #tpu.dot_dimension_numbers<[1], [0], [0], [1], [0, 0, 1, 1], [], []>} : vector<8x32xf32>, vector<32x128xf32>, vector<8x128xf32> -> vector<8x128xf32>
    %c0_113 = arith.constant 0 : index
    %c0_114 = arith.constant 0 : index
    %305 = vector.load %arg9[%c0_113, %c0_114] : memref<1x128xf32, #tpu.memory_space<vmem>>, vector<1x128xf32>
    %306 = vector.broadcast %305 : vector<1x128xf32> to vector<8x128xf32>
    %307 = arith.addf %304, %306 : vector<8x128xf32>
    %308 = tpu.iota {dimensions = array<i32: 1>} : vector<8x128xi32>
    %c12_i32 = arith.constant 12 : i32
    %309 = vector.broadcast %c12_i32 : i32 to vector<8x128xi32>
    %310 = arith.cmpi sge, %308, %309 : vector<8x128xi32>
    %c24_i32 = arith.constant 24 : i32
    %311 = vector.broadcast %c24_i32 : i32 to vector<8x128xi32>
    %312 = arith.cmpi slt, %308, %311 : vector<8x128xi32>
    %313 = arith.andi %310, %312 : vector<8x128xi1>
    %c24_i32_115 = arith.constant 24 : i32
    %314 = vector.broadcast %c24_i32_115 : i32 to vector<8x128xi32>
    %315 = arith.cmpi sge, %308, %314 : vector<8x128xi32>
    %c27_i32 = arith.constant 27 : i32
    %316 = vector.broadcast %c27_i32 : i32 to vector<8x128xi32>
    %317 = arith.cmpi slt, %308, %316 : vector<8x128xi32>
    %318 = arith.andi %315, %317 : vector<8x128xi1>
    %cst_116 = arith.constant 0.000000e+00 : f32
    %319 = vector.broadcast %cst_116 : f32 to vector<8x128xf32>
    %320 = arith.select %313, %307, %319 : vector<8x128xi1>, vector<8x128xf32>
    %321 = math.exp %320 : vector<8x128xf32>
    %322 = arith.select %313, %321, %307 : vector<8x128xi1>, vector<8x128xf32>
    %cst_117 = arith.constant -1.000000e+30 : f32
    %323 = vector.broadcast %cst_117 : f32 to vector<8x128xf32>
    %324 = arith.select %318, %307, %323 : vector<8x128xi1>, vector<8x128xf32>
    %cst_118 = arith.constant dense<0xFF800000> : vector<8xf32>
    %325 = vector.multi_reduction <maximumf>, %324, %cst_118 [1] : vector<8x128xf32> to vector<8xf32>
    %326 = vector.shape_cast %325 : vector<8xf32> to vector<8x1xf32>
    %327 = vector.broadcast %326 : vector<8x1xf32> to vector<8x128xf32>
    %328 = arith.subf %324, %327 : vector<8x128xf32>
    %329 = math.exp %328 : vector<8x128xf32>
    %cst_119 = arith.constant dense<0.000000e+00> : vector<8xf32>
    %330 = vector.multi_reduction <add>, %329, %cst_119 [1] : vector<8x128xf32> to vector<8xf32>
    %331 = vector.shape_cast %330 : vector<8xf32> to vector<8x1xf32>
    %332 = vector.broadcast %331 : vector<8x1xf32> to vector<8x128xf32>
    %333 = arith.divf %329, %332 : vector<8x128xf32>
    %334 = arith.select %318, %333, %322 : vector<8x128xi1>, vector<8x128xf32>
    %335 = vector.shape_cast %334 : vector<8x128xf32> to vector<8x1x128xf32>
    %336 = vector.shape_cast %335 : vector<8x1x128xf32> to vector<8x128xf32>
    %c0_120 = arith.constant 0 : index
    %c0_121 = arith.constant 0 : index
    %c0_122 = arith.constant 0 : index
    %337 = vector.load %arg10[%c0_120, %c0_121, %c0_122] : memref<1x8x128xf32, #tpu.memory_space<vmem>>, vector<1x8x128xf32>
    %338 = vector.shape_cast %337 : vector<1x8x128xf32> to vector<8x128xf32>
    %339 = vector.shape_cast %336 : vector<8x128xf32> to vector<1x8x128xf32>
    tpu.vector_store %arg10[%c0_120, %c0_121, %c0_122], %339 {strides = array<i32>} : memref<1x8x128xf32, #tpu.memory_space<vmem>>, vector<1x8x128xf32>,
    return
  }
  func.func @transform_0(%arg0: i32) -> (i32, i32, i32) {
    %c0_i32 = arith.constant 0 : i32
    %c0_i32_0 = arith.constant 0 : i32
    %c0_i32_1 = arith.constant 0 : i32
    return %arg0, %c0_i32, %c0_i32_0 : i32, i32, i32
  }
  func.func @transform_1(%arg0: i32) -> (i32, i32, i32, i32) {
    %c0_i32 = arith.constant 0 : i32
    %c0_i32_0 = arith.constant 0 : i32
    %c0_i32_1 = arith.constant 0 : i32
    %c0_i32_2 = arith.constant 0 : i32
    return %arg0, %c0_i32, %c0_i32_0, %c0_i32_1 : i32, i32, i32, i32
  }
  func.func @transform_2(%arg0: i32) -> (i32, i32, i32) {
    %c0_i32 = arith.constant 0 : i32
    %c0_i32_0 = arith.constant 0 : i32
    %c0_i32_1 = arith.constant 0 : i32
    %c0_i32_2 = arith.constant 0 : i32
    return %c0_i32, %c0_i32_0, %c0_i32_1 : i32, i32, i32
  }
  func.func @transform_3(%arg0: i32) -> (i32, i32, i32) {
    %c0_i32 = arith.constant 0 : i32
    %c0_i32_0 = arith.constant 0 : i32
    %c0_i32_1 = arith.constant 0 : i32
    %c0_i32_2 = arith.constant 0 : i32
    return %c0_i32, %c0_i32_0, %c0_i32_1 : i32, i32, i32
  }
  func.func @transform_4(%arg0: i32) -> (i32, i32, i32) {
    %c0_i32 = arith.constant 0 : i32
    %c0_i32_0 = arith.constant 0 : i32
    %c0_i32_1 = arith.constant 0 : i32
    %c0_i32_2 = arith.constant 0 : i32
    return %c0_i32, %c0_i32_0, %c0_i32_1 : i32, i32, i32
  }
  func.func @transform_5(%arg0: i32) -> (i32, i32) {
    %c0_i32 = arith.constant 0 : i32
    %c0_i32_0 = arith.constant 0 : i32
    %c0_i32_1 = arith.constant 0 : i32
    return %c0_i32, %c0_i32_0 : i32, i32
  }
  func.func @transform_6(%arg0: i32) -> (i32, i32) {
    %c0_i32 = arith.constant 0 : i32
    %c0_i32_0 = arith.constant 0 : i32
    %c0_i32_1 = arith.constant 0 : i32
    return %c0_i32, %c0_i32_0 : i32, i32
  }
  func.func @transform_7(%arg0: i32) -> (i32, i32) {
    %c0_i32 = arith.constant 0 : i32
    %c0_i32_0 = arith.constant 0 : i32
    %c0_i32_1 = arith.constant 0 : i32
    return %c0_i32, %c0_i32_0 : i32, i32
  }
  func.func @transform_8(%arg0: i32) -> (i32, i32) {
    %c0_i32 = arith.constant 0 : i32
    %c0_i32_0 = arith.constant 0 : i32
    %c0_i32_1 = arith.constant 0 : i32
    return %c0_i32, %c0_i32_0 : i32, i32
  }
  func.func @transform_9(%arg0: i32) -> (i32, i32, i32) {
    %c0_i32 = arith.constant 0 : i32
    %c0_i32_0 = arith.constant 0 : i32
    %c0_i32_1 = arith.constant 0 : i32
    return %arg0, %c0_i32, %c0_i32_0 : i32, i32, i32
  }
}

</mosaic_0001>

<llo_original>
// kernel: tpu_custom_call.1
$region0: #{tpu_custom_call.1}
  #allocation0 [shape = 'u32[]', space=smem, size = 0x4, offset = 0x4, fixed_abs, tag = 'smem constant byte address 0x4 - core index']
  #allocation1 [shape = 'u32[144,128]{1,0:T(1,128)}', space=vmem, size = 0x12000, scoped, tag = 'internal scratch']
  %s0 = inlined_call_operand.vmem [shape: f32[2,8,4], index: 0, kind: input, shape index: {}]
  %s1 = inlined_call_operand.hbm [shape: f32[2,4,8,8], index: 1, kind: input, shape index: {}]
  %s2 = inlined_call_operand.hbm [shape: f32[4,4,4], index: 2, kind: input, shape index: {}]
  %s3 = inlined_call_operand.vmem [shape: f32[4,8,8], index: 3, kind: input, shape index: {}]
  %s4 = inlined_call_operand.hbm [shape: f32[6,4,128], index: 4, kind: input, shape index: {}]
  %s5 = inlined_call_operand.hbm [shape: f32[32,128], index: 5, kind: input, shape index: {}]
  %s6 = inlined_call_operand.vmem [shape: f32[8,128], index: 6, kind: input, shape index: {}]
  %s7 = inlined_call_operand.hbm [shape: f32[32,128], index: 7, kind: input, shape index: {}]
  %s8 = inlined_call_operand.vmem [shape: f32[1,128], index: 8, kind: input, shape index: {}]
  %s9 = inlined_call_operand.hbm [shape: f32[2,8,128], index: 9, kind: output, shape index: {}]
  %s10 = sld [smem:[#allocation0]]
  $region89: #{tpu_custom_call.1} parent=0
    _
  %s12 = ssub.s32 1, %s10
  %s13 = scalar_select 0, %s12, %s10
  $region1: #{tpu_custom_call.1} parent=0
    #allocation2 [shape = 'u8[32768]{0}', space=vmem, size = 0x8000, scoped, tag = 'input window, operand 1']
    #allocation3 [shape = 's32[2]{0}', space=sflag, size = 0x8, scoped, tag = 'scoped memory for tpu_custom_call.1']
    #allocation4 [shape = 's32[2]{0}', space=sflag, size = 0x8, scoped, tag = 'scoped memory for tpu_custom_call.1']
    #allocation5 [shape = 'u8[8192]{0}', space=vmem, size = 0x2000, scoped, tag = 'input window, operand 2, single buffered']
    #allocation6 [shape = 's32[1]{0}', space=sflag, size = 0x4, scoped, tag = 'scoped memory for tpu_custom_call.1']
    #allocation7 [shape = 'u8[12288]{0}', space=vmem, size = 0x3000, scoped, tag = 'input window, operand 4, single buffered']
    #allocation8 [shape = 'u8[16384]{0}', space=vmem, size = 0x4000, scoped, tag = 'input window, operand 5, single buffered']
    #allocation9 [shape = 's32[1]{0}', space=sflag, size = 0x4, scoped, tag = 'scoped memory for tpu_custom_call.1']
    #allocation10 [shape = 'u8[16384]{0}', space=vmem, size = 0x4000, scoped, tag = 'input window, operand 7, single buffered']
    #allocation11 [shape = 'u8[8192]{0}', space=vmem, size = 0x2000, scoped, tag = 'output window, operand 0']
    %14 = vsyncpa [#allocation3], 0
    %s15 = scalar_lea.sflag [#allocation3], 1
    %16 = vsyncpa %s15, 0
    %17 = vsyncpa [#allocation6], 0
    %18 = vsyncpa [#allocation9], 0
    %19 = vsyncpa [#allocation4], 0
    %s20 = scalar_lea.sflag [#allocation4], 1
    %21 = vsyncpa %s20, 0
    loop: start=0, step=1, limit=4
    $region2: #{tpu_custom_call.1} parent=1 // loop_pre_header
      _
    $region3: #{tpu_custom_call.1} parent=1 // loop_header
      %s23 = sphi 0, %s27
      %p24 = scmp.ge.s32.totalorder %s23, 4
      %s33 = sphi 0, %s35
      %s36 = sphi 0, %s33
      %s37 = sphi 0, %s36
      %s53 = sphi 0, %s37
      %s59 = sphi 0, %s61
      %s62 = sphi 0, %s59
      %s63 = sphi 0, %s62
      %s79 = sphi 0, %s63
      %s83 = sphi 0, %s83
      %s85 = sphi 0, %s83
      %s86 = sphi 0, %s85
      %s100 = sphi 0, %s86
      %s104 = sphi 0, %s104
      %s106 = sphi 0, %s104
      %s107 = sphi 0, %s106
      %s121 = sphi 0, %s107
      %s125 = sphi 0, %s125
      %s127 = sphi 0, %s125
      %s128 = sphi 0, %s127
      %s142 = sphi 0, %s128
      %s146 = sphi 0, %s146
      %s148 = sphi 0, %s146
      %s149 = sphi 0, %s148
      %s163 = sphi 0, %s149
      %s167 = sphi 0, %s167
      %s169 = sphi 0, %s167
      %s170 = sphi 0, %s169
      %s184 = sphi 0, %s170
      %s188 = sphi 0, %s188
      %s190 = sphi 0, %s188
      %s191 = sphi 0, %s190
      %s205 = sphi 0, %s191
      %s209 = sphi 0, %s209
      %s211 = sphi 0, %s209
      %s212 = sphi 0, %s211
      %s226 = sphi 0, %s212
      %s232 = sphi 0, %s234
      %s235 = sphi 0, %s232
      %s236 = sphi 0, %s235
      %s252 = sphi 0, %s236
    $region4: #{tpu_custom_call.1} parent=1 // loop_header_branch
      %26 = sbr.rel (%p24) target = $region8
    $region5: #{tpu_custom_call.1} parent=1 // loop_body
      %s28 = ssub.s32 %s23, 1
      %s29 = ssub.s32 %s23, 2
      %s30 = sadd.s32 %s23, 1
      %s31 = ssub.s32 %s23, %s30
      %p32 = scmp.eq.s32.totalorder %s31, 0
      %s34 = sadd.s32 %s33, 1
      %s35 = scalar_select %p32, %s33, %s34
      %p38 = pneg %p32
      %p39 = scmp.eq.s32.totalorder %s23, 1
      %p40 = por %p38, %p39
      %p41 = scmp.ne.s32.totalorder %s33, %s36
      %p42 = scmp.eq.s32.totalorder %s23, 0
      %p43 = por %p41, %p42
      %p44 = scmp.ne.s32.totalorder %s33, %s36
      %p45 = scmp.eq.s32.totalorder %s28, 1
      %p46 = por %p44, %p45
      %p47 = scmp.ne.s32.totalorder %s36, %s37
      %p48 = scmp.eq.s32.totalorder %s28, 0
      %p49 = por %p47, %p48
      %p50 = scmp.ne.s32.totalorder %s36, %s37
      %p51 = scmp.eq.s32.totalorder %s29, 1
      %p52 = por %p50, %p51
      %p54 = scmp.ne.s32.totalorder %s37, %s53
      %p55 = scmp.eq.s32.totalorder %s29, 0
      %p56 = por %p54, %p55
      %s57 = ssub.s32 %s23, %s30
      %p58 = scmp.eq.s32.totalorder %s57, 0
      %s60 = sadd.s32 %s59, 1
      %s61 = scalar_select %p58, %s59, %s60
      %p64 = pneg %p58
      %p65 = scmp.eq.s32.totalorder %s23, 1
      %p66 = por %p64, %p65
      %p67 = scmp.ne.s32.totalorder %s59, %s62
      %p68 = scmp.eq.s32.totalorder %s23, 0
      %p69 = por %p67, %p68
      %p70 = scmp.ne.s32.totalorder %s59, %s62
      %p71 = scmp.eq.s32.totalorder %s28, 1
      %p72 = por %p70, %p71
      %p73 = scmp.ne.s32.totalorder %s62, %s63
      %p74 = scmp.eq.s32.totalorder %s28, 0
      %p75 = por %p73, %p74
      %p76 = scmp.ne.s32.totalorder %s62, %s63
      %p77 = scmp.eq.s32.totalorder %s29, 1
      %p78 = por %p76, %p77
      %p80 = scmp.ne.s32.totalorder %s63, %s79
      %p81 = scmp.eq.s32.totalorder %s29, 0
      %p82 = por %p80, %p81
      %s84 = sadd.s32 %s83, 1
      %p87 = scmp.eq.s32.totalorder %s23, 1
      %p88 = scmp.ne.s32.totalorder %s83, %s85
      %p89 = scmp.eq.s32.totalorder %s23, 0
      %p90 = por %p88, %p89
      %p91 = scmp.ne.s32.totalorder %s83, %s85
      %p92 = scmp.eq.s32.totalorder %s28, 1
      %p93 = por %p91, %p92
      %p94 = scmp.ne.s32.totalorder %s85, %s86
      %p95 = scmp.eq.s32.totalorder %s28, 0
      %p96 = por %p94, %p95
      %p97 = scmp.ne.s32.totalorder %s85, %s86
      %p98 = scmp.eq.s32.totalorder %s29, 1
      %p99 = por %p97, %p98
      %p101 = scmp.ne.s32.totalorder %s86, %s100
      %p102 = scmp.eq.s32.totalorder %s29, 0
      %p103 = por %p101, %p102
      %s105 = sadd.s32 %s104, 1
      %p108 = scmp.eq.s32.totalorder %s23, 1
      %p109 = scmp.ne.s32.totalorder %s104, %s106
      %p110 = scmp.eq.s32.totalorder %s23, 0
      %p111 = por %p109, %p110
      %p112 = scmp.ne.s32.totalorder %s104, %s106
      %p113 = scmp.eq.s32.totalorder %s28, 1
      %p114 = por %p112, %p113
      %p115 = scmp.ne.s32.totalorder %s106, %s107
      %p116 = scmp.eq.s32.totalorder %s28, 0
      %p117 = por %p115, %p116
      %p118 = scmp.ne.s32.totalorder %s106, %s107
      %p119 = scmp.eq.s32.totalorder %s29, 1
      %p120 = por %p118, %p119
      %p122 = scmp.ne.s32.totalorder %s107, %s121
      %p123 = scmp.eq.s32.totalorder %s29, 0
      %p124 = por %p122, %p123
      %s126 = sadd.s32 %s125, 1
      %p129 = scmp.eq.s32.totalorder %s23, 1
      %p130 = scmp.ne.s32.totalorder %s125, %s127
      %p131 = scmp.eq.s32.totalorder %s23, 0
      %p132 = por %p130, %p131
      %p133 = scmp.ne.s32.totalorder %s125, %s127
      %p134 = scmp.eq.s32.totalorder %s28, 1
      %p135 = por %p133, %p134
      %p136 = scmp.ne.s32.totalorder %s127, %s128
      %p137 = scmp.eq.s32.totalorder %s28, 0
      %p138 = por %p136, %p137
      %p139 = scmp.ne.s32.totalorder %s127, %s128
      %p140 = scmp.eq.s32.totalorder %s29, 1
      %p141 = por %p139, %p140
      %p143 = scmp.ne.s32.totalorder %s128, %s142
      %p144 = scmp.eq.s32.totalorder %s29, 0
      %p145 = por %p143, %p144
      %s147 = sadd.s32 %s146, 1
      %p150 = scmp.eq.s32.totalorder %s23, 1
      %p151 = scmp.ne.s32.totalorder %s146, %s148
      %p152 = scmp.eq.s32.totalorder %s23, 0
      %p153 = por %p151, %p152
      %p154 = scmp.ne.s32.totalorder %s146, %s148
      %p155 = scmp.eq.s32.totalorder %s28, 1
      %p156 = por %p154, %p155
      %p157 = scmp.ne.s32.totalorder %s148, %s149
      %p158 = scmp.eq.s32.totalorder %s28, 0
      %p159 = por %p157, %p158
      %p160 = scmp.ne.s32.totalorder %s148, %s149
      %p161 = scmp.eq.s32.totalorder %s29, 1
      %p162 = por %p160, %p161
      %p164 = scmp.ne.s32.totalorder %s149, %s163
      %p165 = scmp.eq.s32.totalorder %s29, 0
      %p166 = por %p164, %p165
      %s168 = sadd.s32 %s167, 1
      %p171 = scmp.eq.s32.totalorder %s23, 1
      %p172 = scmp.ne.s32.totalorder %s167, %s169
      %p173 = scmp.eq.s32.totalorder %s23, 0
      %p174 = por %p172, %p173
      %p175 = scmp.ne.s32.totalorder %s167, %s169
      %p176 = scmp.eq.s32.totalorder %s28, 1
      %p177 = por %p175, %p176
      %p178 = scmp.ne.s32.totalorder %s169, %s170
      %p179 = scmp.eq.s32.totalorder %s28, 0
      %p180 = por %p178, %p179
      %p181 = scmp.ne.s32.totalorder %s169, %s170
      %p182 = scmp.eq.s32.totalorder %s29, 1
      %p183 = por %p181, %p182
      %p185 = scmp.ne.s32.totalorder %s170, %s184
      %p186 = scmp.eq.s32.totalorder %s29, 0
      %p187 = por %p185, %p186
      %s189 = sadd.s32 %s188, 1
      %p192 = scmp.eq.s32.totalorder %s23, 1
      %p193 = scmp.ne.s32.totalorder %s188, %s190
      %p194 = scmp.eq.s32.totalorder %s23, 0
      %p195 = por %p193, %p194
      %p196 = scmp.ne.s32.totalorder %s188, %s190
      %p197 = scmp.eq.s32.totalorder %s28, 1
      %p198 = por %p196, %p197
      %p199 = scmp.ne.s32.totalorder %s190, %s191
      %p200 = scmp.eq.s32.totalorder %s28, 0
      %p201 = por %p199, %p200
      %p202 = scmp.ne.s32.totalorder %s190, %s191
      %p203 = scmp.eq.s32.totalorder %s29, 1
      %p204 = por %p202, %p203
      %p206 = scmp.ne.s32.totalorder %s191, %s205
      %p207 = scmp.eq.s32.totalorder %s29, 0
      %p208 = por %p206, %p207
      %s210 = sadd.s32 %s209, 1
      %p213 = scmp.eq.s32.totalorder %s23, 1
      %p214 = scmp.ne.s32.totalorder %s209, %s211
      %p215 = scmp.eq.s32.totalorder %s23, 0
      %p216 = por %p214, %p215
      %p217 = scmp.ne.s32.totalorder %s209, %s211
      %p218 = scmp.eq.s32.totalorder %s28, 1
      %p219 = por %p217, %p218
      %p220 = scmp.ne.s32.totalorder %s211, %s212
      %p221 = scmp.eq.s32.totalorder %s28, 0
      %p222 = por %p220, %p221
      %p223 = scmp.ne.s32.totalorder %s211, %s212
      %p224 = scmp.eq.s32.totalorder %s29, 1
      %p225 = por %p223, %p224
      %p227 = scmp.ne.s32.totalorder %s212, %s226
      %p228 = scmp.eq.s32.totalorder %s29, 0
      %p229 = por %p227, %p228
      %s230 = ssub.s32 %s23, %s30
      %p231 = scmp.eq.s32.totalorder %s230, 0
      %s233 = sadd.s32 %s232, 1
      %s234 = scalar_select %p231, %s232, %s233
      %p237 = pneg %p231
      %p238 = scmp.eq.s32.totalorder %s23, 1
      %p239 = por %p237, %p238
      %p240 = scmp.ne.s32.totalorder %s232, %s235
      %p241 = scmp.eq.s32.totalorder %s23, 0
      %p242 = por %p240, %p241
      %p243 = scmp.ne.s32.totalorder %s232, %s235
      %p244 = scmp.eq.s32.totalorder %s28, 1
      %p245 = por %p243, %p244
      %p246 = scmp.ne.s32.totalorder %s235, %s236
      %p247 = scmp.eq.s32.totalorder %s28, 0
      %p248 = por %p246, %p247
      %p249 = scmp.ne.s32.totalorder %s235, %s236
      %p250 = scmp.eq.s32.totalorder %s29, 1
      %p251 = por %p249, %p250
      %p253 = scmp.ne.s32.totalorder %s236, %s252
      %p254 = scmp.eq.s32.totalorder %s29, 0
      %p255 = por %p253, %p254
      %p256 = scmp.le.s32.totalorder 1, %s23
      %p257 = scmp.lt.s32.totalorder %s23, 3
      %p258 = pnand %p256, %p257
      %p259 = pneg %p258
      // Predicated region
      $region9: #{tpu_custom_call.1} parent=5 // pred_check
        _
      $region10: #{tpu_custom_call.1} parent=5 // pred_check_branch
        %261 = sbr.rel (%p258) target = $region12
      $region11: #{tpu_custom_call.1} parent=5 // pred_region
        %s262 = ssub.s32 %s23, 1
        // Predicated region
        $region13: #{tpu_custom_call.1} parent=11 // pred_check
          %p263 = pneg %p96
        $region14: #{tpu_custom_call.1} parent=11 // pred_check_branch
          %265 = sbr.rel (%p263) target = $region16
        $region15: #{tpu_custom_call.1} parent=11 // pred_region
          %s267 = ssub.s32 256, 256
          %268 = vsyncadd [#allocation6], %s267
          %s269 = sshll.u32 [#allocation5], 4
          %s270 = int_to_ptr.vmem [resolvable:$true] %s269
          %275 = dma.hbm_to_vmem [thread:$0]  %s2, 256, %s270, [#allocation6], 64, 64, 4
        $region16: #{tpu_custom_call.1} parent=11 // pred_fallthru
          _
        // Predicated region
        $region17: #{tpu_custom_call.1} parent=11 // pred_check
          %p276 = pneg %p117
        $region18: #{tpu_custom_call.1} parent=11 // pred_check_branch
          %278 = sbr.rel (%p276) target = $region20
        $region19: #{tpu_custom_call.1} parent=11 // pred_region
          _
        $region20: #{tpu_custom_call.1} parent=11 // pred_fallthru
          _
        // Predicated region
        $region21: #{tpu_custom_call.1} parent=11 // pred_check
          %p279 = pneg %p138
        $region22: #{tpu_custom_call.1} parent=11 // pred_check_branch
          %281 = sbr.rel (%p279) target = $region24
        $region23: #{tpu_custom_call.1} parent=11 // pred_region
          %s283 = ssub.s32 384, 384
          %284 = vsyncadd [#allocation6], %s283
          %s285 = sshll.u32 [#allocation7], 4
          %s286 = int_to_ptr.vmem [resolvable:$true] %s285
          %291 = dma.hbm_to_vmem [thread:$0]  %s4, 384, %s286, [#allocation6], 64, 64, 4
        $region24: #{tpu_custom_call.1} parent=11 // pred_fallthru
          _
        // Predicated region
        $region25: #{tpu_custom_call.1} parent=11 // pred_check
          %p292 = pneg %p159
        $region26: #{tpu_custom_call.1} parent=11 // pred_check_branch
          %294 = sbr.rel (%p292) target = $region28
        $region27: #{tpu_custom_call.1} parent=11 // pred_region
          %s296 = ssub.s32 512, 512
          %297 = vsyncadd [#allocation9], %s296
          %s298 = sshll.u32 [#allocation8], 4
          %s299 = int_to_ptr.vmem [resolvable:$true] %s298
          %304 = dma.hbm_to_vmem [thread:$0]  %s5, 512, %s299, [#allocation9], 128, 128, 8
        $region28: #{tpu_custom_call.1} parent=11 // pred_fallthru
          _
        // Predicated region
        $region29: #{tpu_custom_call.1} parent=11 // pred_check
          %p305 = pneg %p180
        $region30: #{tpu_custom_call.1} parent=11 // pred_check_branch
          %307 = sbr.rel (%p305) target = $region32
        $region31: #{tpu_custom_call.1} parent=11 // pred_region
          _
        $region32: #{tpu_custom_call.1} parent=11 // pred_fallthru
          _
        // Predicated region
        $region33: #{tpu_custom_call.1} parent=11 // pred_check
          %p308 = pneg %p201
        $region34: #{tpu_custom_call.1} parent=11 // pred_check_branch
          %310 = sbr.rel (%p308) target = $region36
        $region35: #{tpu_custom_call.1} parent=11 // pred_region
          %s312 = ssub.s32 512, 512
          %313 = vsyncadd [#allocation9], %s312
          %s314 = sshll.u32 [#allocation10], 4
          %s315 = int_to_ptr.vmem [resolvable:$true] %s314
          %320 = dma.hbm_to_vmem [thread:$0]  %s7, 512, %s315, [#allocation9], 128, 128, 8
        $region36: #{tpu_custom_call.1} parent=11 // pred_fallthru
          _
        // Predicated region
        $region37: #{tpu_custom_call.1} parent=11 // pred_check
          %p321 = pneg %p222
        $region38: #{tpu_custom_call.1} parent=11 // pred_check_branch
          %323 = sbr.rel (%p321) target = $region40
        $region39: #{tpu_custom_call.1} parent=11 // pred_region
          _
        $region40: #{tpu_custom_call.1} parent=11 // pred_fallthru
          _
      $region12: #{tpu_custom_call.1} parent=5 // pred_fallthru
        _
      %p324 = scmp.lt.s32.totalorder %s23, 2
      // Predicated region
      $region41: #{tpu_custom_call.1} parent=5 // pred_check
        %p325 = pneg %p324
      $region42: #{tpu_custom_call.1} parent=5 // pred_check_branch
        %327 = sbr.rel (%p325) target = $region44
      $region43: #{tpu_custom_call.1} parent=5 // pred_region
        // Predicated region
        $region45: #{tpu_custom_call.1} parent=43 // pred_check
          %p328 = pneg %p43
        $region46: #{tpu_custom_call.1} parent=43 // pred_check_branch
          %330 = sbr.rel (%p328) target = $region48
        $region47: #{tpu_custom_call.1} parent=43 // pred_region
          %p331 = scmp.lt.s32.totalorder %s23, 1
          %s332 = scalar_select %p331, %s23, 1
          %s333 = smul.addr %s332, 8
          %s334 = scalar_lea.vmem %s0, %s333
        $region48: #{tpu_custom_call.1} parent=43 // pred_fallthru
          _
        // Predicated region
        $region49: #{tpu_custom_call.1} parent=43 // pred_check
          %p335 = pneg %p69
        $region50: #{tpu_custom_call.1} parent=43 // pred_check_branch
          %337 = sbr.rel (%p335) target = $region52
        $region51: #{tpu_custom_call.1} parent=43 // pred_region
          %s338 = sand.u32 %s59, 1
          %s339 = scalar_lea.sflag [#allocation3], %s338
          %s340 = sand.u32 %s59, 1
          %s341 = smul.addr %s340, 32
          %s342 = scalar_lea.vmem [#allocation2], %s341
          %s344 = ssub.s32 512, 512
          %345 = vsyncadd %s339, %s344
          %s346 = smul.addr %s23, 4
          %s347 = smul.addr %s346, 128
          %s348 = scalar_lea.hbm %s1, %s347
          %s349 = sshll.u32 %s342, 4
          %s350 = int_to_ptr.vmem [resolvable:$true] %s349
          %355 = dma.hbm_to_vmem [thread:$0]  %s348, 512, %s350, %s339, 128, 128, 8
        $region52: #{tpu_custom_call.1} parent=43 // pred_fallthru
          _
      $region44: #{tpu_custom_call.1} parent=5 // pred_fallthru
        _
      %p356 = scmp.le.s32.totalorder 1, %s23
      %p357 = scmp.lt.s32.totalorder %s23, 3
      %p358 = pnand %p356, %p357
      %p359 = pneg %p358
      // Predicated region
      $region53: #{tpu_custom_call.1} parent=5 // pred_check
        _
      $region54: #{tpu_custom_call.1} parent=5 // pred_check_branch
        %361 = sbr.rel (%p358) target = $region56
      $region55: #{tpu_custom_call.1} parent=5 // pred_region
        %s362 = ssub.s32 %s23, 1
        %s363 = sand.u32 %s62, 1
        %s364 = scalar_lea.sflag [#allocation3], %s363
        %s365 = sand.u32 %s62, 1
        %s366 = smul.addr %s365, 32
        %s367 = scalar_lea.vmem [#allocation2], %s366
        // Predicated region
        $region57: #{tpu_custom_call.1} parent=55 // pred_check
          %p368 = pneg %p75
        $region58: #{tpu_custom_call.1} parent=55 // pred_check_branch
          %370 = sbr.rel (%p368) target = $region60
        $region59: #{tpu_custom_call.1} parent=55 // pred_region
          %371 = dma.done %s364, 512
        $region60: #{tpu_custom_call.1} parent=55 // pred_fallthru
          _
        // Predicated region
        $region61: #{tpu_custom_call.1} parent=55 // pred_check
          %p372 = pneg %p96
        $region62: #{tpu_custom_call.1} parent=55 // pred_check_branch
          %374 = sbr.rel (%p372) target = $region64
        $region63: #{tpu_custom_call.1} parent=55 // pred_region
          %375 = dma.done [#allocation6], 256
        $region64: #{tpu_custom_call.1} parent=55 // pred_fallthru
          _
        // Predicated region
        $region65: #{tpu_custom_call.1} parent=55 // pred_check
          %p376 = pneg %p138
        $region66: #{tpu_custom_call.1} parent=55 // pred_check_branch
          %378 = sbr.rel (%p376) target = $region68
        $region67: #{tpu_custom_call.1} parent=55 // pred_region
          %379 = dma.done [#allocation6], 384
        $region68: #{tpu_custom_call.1} parent=55 // pred_fallthru
          _
        // Predicated region
        $region69: #{tpu_custom_call.1} parent=55 // pred_check
          %p380 = pneg %p159
        $region70: #{tpu_custom_call.1} parent=55 // pred_check_branch
          %382 = sbr.rel (%p380) target = $region72
        $region71: #{tpu_custom_call.1} parent=55 // pred_region
          %383 = dma.done [#allocation9], 512
        $region72: #{tpu_custom_call.1} parent=55 // pred_fallthru
          _
        // Predicated region
        $region73: #{tpu_custom_call.1} parent=55 // pred_check
          %p384 = pneg %p201
        $region74: #{tpu_custom_call.1} parent=55 // pred_check_branch
          %386 = sbr.rel (%p384) target = $region76
        $region75: #{tpu_custom_call.1} parent=55 // pred_region
          %387 = dma.done [#allocation9], 512
        $region76: #{tpu_custom_call.1} parent=55 // pred_fallthru
          _
        %p388 = scmp.lt.s32.totalorder %s28, 1
        %s389 = scalar_select %p388, %s28, 1
        %s390 = smul.addr %s389, 8
        %s391 = scalar_lea.vmem %s0, %s390
        %p392 = pneg %p49
        %p393 = pneg %p46
        %s394 = sand.u32 %s62, 1
        %s395 = scalar_lea.sflag [#allocation3], %s394
        %s396 = sand.u32 %s62, 1
        %s397 = smul.addr %s396, 32
        %s398 = scalar_lea.vmem [#allocation2], %s397
        %p399 = pneg %p75
        %p400 = pneg %p72
        %p401 = pneg %p96
        %p402 = pneg %p93
        %p403 = pneg %p117
        %p404 = pneg %p114
        %p405 = pneg %p138
        %p406 = pneg %p135
        %p407 = pneg %p159
        %p408 = pneg %p156
        %p409 = pneg %p180
        %p410 = pneg %p177
        %p411 = pneg %p201
        %p412 = pneg %p198
        %p413 = pneg %p222
        %p414 = pneg %p219
        %p415 = pneg %p248
        %p416 = pneg %p245
        %s417 = sand.u32 %s235, 1
        %s418 = scalar_lea.sflag [#allocation4], %s417
        %s419 = sand.u32 %s235, 1
        %s420 = smul.addr %s419, 8
        %s421 = scalar_lea.vmem [#allocation11], %s420
        %p422 = scmp.lt.s32.totalorder %s28, 1
        %s423 = scalar_select %p422, %s28, 1
        %s424 = smul.addr %s423, 8
        %s425 = scalar_lea.vmem %s0, %s424
        %v426 = vld [vmem:[#allocation7] sm:$0xf]
        %s427 = scalar_lea.vmem [#allocation7], 4
        %v428 = vld [vmem:[%s427] sm:$0xf]
        %s429 = scalar_lea.vmem [#allocation7], 8
        %v430 = vld [vmem:[%s429] sm:$0xf]
        %s431 = scalar_lea.vmem [#allocation7], 12
        %v432 = vld [vmem:[%s431] sm:$0xf]
        %s433 = scalar_lea.vmem [#allocation7], 16
        %v434 = vld [vmem:[%s433] sm:$0xf]
        %s435 = scalar_lea.vmem [#allocation7], 20
        %v436 = vld [vmem:[%s435] sm:$0xf]
        %v437 = vld [vmem:[#allocation5] sm:$0xf]
        %s438 = scalar_lea.vmem [#allocation5], 4
        %v439 = vld [vmem:[%s438] sm:$0xf]
        %s440 = scalar_lea.vmem [#allocation5], 8
        %v441 = vld [vmem:[%s440] sm:$0xf]
        %s442 = scalar_lea.vmem [#allocation5], 12
        %v443 = vld [vmem:[%s442] sm:$0xf]
        %v444 = vld [vmem:[%s3] sm:$0xff]
        %s445 = scalar_lea.vmem %s3, 8
        %v446 = vld [vmem:[%s445] sm:$0xff]
        %s447 = scalar_lea.vmem %s3, 16
        %v448 = vld [vmem:[%s447] sm:$0xff]
        %s449 = scalar_lea.vmem %s3, 24
        %v450 = vld [vmem:[%s449] sm:$0xff]
        %v451 = vld [vmem:[%s6] sm:$0xff]
        %v452 = vld [vmem:[#allocation8] sm:$0xff]
        %v453 = vld [vmem:[#allocation8 + $0x8] sm:$0xff]
        %v454 = vld [vmem:[#allocation8 + $0x10] sm:$0xff]
        %v455 = vld [vmem:[#allocation8 + $0x18] sm:$0xff]
        %v456 = vld [vmem:[%s425] sm:$0xff]
        %vm457 = vcmask 31744
        %v459 = vsel %vm457, %v456, 0
        %vm461 = vcmask 1043456
        %v463 = vsel %vm461, %v436, 0
        %465 = vmatprep.subr.mxu0 0.0
        %466 = vmatpush1.msra.mxu0 %v463
        %467 = vmatprep.subr.mxu0 0.0
        %468 = vmatpush1.msra.mxu0 0.0
        %469 = vmatprep.subr.mxu0 0.0
        %470 = vmatpush1.msra.mxu0 0.0
        %471 = vmatprep.subr.mxu0 0.0
        %472 = vmatpush1.msra.mxu0 0.0
        %473 = vmatprep.subr.mxu0 0.0
        %474 = vmatpush1.msra.mxu0 0.0
        %475 = vmatprep.subr.mxu0 0.0
        %476 = vmatpush1.msra.mxu0 0.0
        %477 = vmatprep.subr.mxu0 0.0
        %478 = vmatpush1.msra.mxu0 0.0
        %479 = vmatprep.subr.mxu0 0.0
        %480 = vmatpush1.msra.mxu0 0.0
        %481 = vmatprep.subr.mxu0 0.0
        %482 = vmatpush1.msra.mxu0 0.0
        %483 = vmatprep.subr.mxu0 0.0
        %484 = vmatpush1.msra.mxu0 0.0
        %485 = vmatprep.subr.mxu0 0.0
        %486 = vmatpush1.msra.mxu0 0.0
        %487 = vmatprep.subr.mxu0 0.0
        %488 = vmatpush1.msra.mxu0 0.0
        %489 = vmatprep.subr.mxu0 0.0
        %490 = vmatpush1.msra.mxu0 0.0
        %491 = vmatprep.subr.mxu0 0.0
        %492 = vmatpush1.msra.mxu0 0.0
        %493 = vmatprep.subr.mxu0 0.0
        %494 = vmatpush1.msra.mxu0 0.0
        %495 = vmatprep.subr.mxu0 0.0
        %496 = vmatpush1.msra.mxu0 0.0
        %497 = vmatprep.subr.mxu0 0.0
        %498 = vmatpush1.msra.mxu0 0.0
        %499 = vmatprep.subr.mxu0 0.0
        %500 = vmatpush1.msra.mxu0 0.0
        %501 = vmatprep.subr.mxu0 0.0
        %502 = vmatpush1.msra.mxu0 0.0
        %503 = vmatprep.subr.mxu0 0.0
        %504 = vmatpush1.msra.mxu0 0.0
        %505 = vmatprep.subr.mxu0 0.0
        %506 = vmatpush1.msra.mxu0 0.0
        %507 = vmatprep.subr.mxu0 0.0
        %508 = vmatpush1.msra.mxu0 0.0
        %509 = vmatprep.subr.mxu0 0.0
        %510 = vmatpush1.msra.mxu0 0.0
        %511 = vmatprep.subr.mxu0 0.0
        %512 = vmatpush1.msra.mxu0 0.0
        %513 = vmatprep.subr.mxu0 0.0
        %514 = vmatpush1.msra.mxu0 0.0
        %515 = vmatprep.subr.mxu0 0.0
        %516 = vmatpush1.msra.mxu0 0.0
        %517 = vmatprep.subr.mxu0 0.0
        %518 = vmatpush1.msra.mxu0 0.0
        %519 = vmatprep.subr.mxu0 0.0
        %520 = vmatpush1.msra.mxu0 0.0
        %521 = vmatprep.subr.mxu0 0.0
        %522 = vmatpush1.msra.mxu0 0.0
        %523 = vmatprep.subr.mxu0 0.0
        %524 = vmatpush1.msra.mxu0 0.0
        %525 = vmatprep.subr.mxu0 0.0
        %526 = vmatpush1.msra.mxu0 0.0
        %527 = vmatprep.subr.mxu0 0.0
        %528 = vmatpush1.msra.mxu0 0.0
        %529 = vmatprep.mubr.f32.mxu0 0.0
        %530 = vmatmul.mubr.f32.gmra.mrb[0].mxu0 %v459
        %v531 = vpop.f32.mrb[0].mxu0
        %v532 = vadd.f32 0.0, %v531
        %v533 = vpop.f32.mrb[0].mxu0
        %534 = vdwg.mxu0
        %v535 = vadd.f32 %v451, %v532
        %v536 = vld [vmem:[%s367] sm:$0xff]
        %vm537 = vcmask 64512
        %v539 = vsel %vm537, %v536, 0
        %541 = vmatprep.subr.mxu0 0.0
        %542 = vmatpush1.msra.mxu0 %v456
        %543 = vmatprep.subr.mxu0 0.0
        %544 = vmatpush1.msra.mxu0 0.0
        %545 = vmatprep.subr.mxu0 0.0
        %546 = vmatpush1.msra.mxu0 0.0
        %547 = vmatprep.subr.mxu0 0.0
        %548 = vmatpush1.msra.mxu0 0.0
        %549 = vmatprep.subr.mxu0 0.0
        %550 = vmatpush1.msra.mxu0 0.0
        %551 = vmatprep.subr.mxu0 0.0
        %552 = vmatpush1.msra.mxu0 0.0
        %553 = vmatprep.subr.mxu0 0.0
        %554 = vmatpush1.msra.mxu0 0.0
        %555 = vmatprep.subr.mxu0 0.0
        %556 = vmatpush1.msra.mxu0 0.0
        %557 = vmatprep.subr.mxu0 0.0
        %558 = vmatpush1.msra.mxu0 0.0
        %559 = vmatprep.subr.mxu0 0.0
        %560 = vmatpush1.msra.mxu0 0.0
        %561 = vmatprep.subr.mxu0 0.0
        %562 = vmatpush1.msra.mxu0 0.0
        %563 = vmatprep.subr.mxu0 0.0
        %564 = vmatpush1.msra.mxu0 0.0
        %565 = vmatprep.subr.mxu0 0.0
        %566 = vmatpush1.msra.mxu0 0.0
        %567 = vmatprep.subr.mxu0 0.0
        %568 = vmatpush1.msra.mxu0 0.0
        %569 = vmatprep.subr.mxu0 0.0
        %570 = vmatpush1.msra.mxu0 0.0
        %571 = vmatprep.subr.mxu0 0.0
        %572 = vmatpush1.msra.mxu0 0.0
        %573 = vmatprep.subr.mxu0 0.0
        %574 = vmatpush1.msra.mxu0 0.0
        %575 = vmatprep.subr.mxu0 0.0
        %576 = vmatpush1.msra.mxu0 0.0
        %577 = vmatprep.subr.mxu0 0.0
        %578 = vmatpush1.msra.mxu0 0.0
        %579 = vmatprep.subr.mxu0 0.0
        %580 = vmatpush1.msra.mxu0 0.0
        %581 = vmatprep.subr.mxu0 0.0
        %582 = vmatpush1.msra.mxu0 0.0
        %583 = vmatprep.subr.mxu0 0.0
        %584 = vmatpush1.msra.mxu0 0.0
        %585 = vmatprep.subr.mxu0 0.0
        %586 = vmatpush1.msra.mxu0 0.0
        %587 = vmatprep.subr.mxu0 0.0
        %588 = vmatpush1.msra.mxu0 0.0
        %589 = vmatprep.subr.mxu0 0.0
        %590 = vmatpush1.msra.mxu0 0.0
        %591 = vmatprep.subr.mxu0 0.0
        %592 = vmatpush1.msra.mxu0 0.0
        %593 = vmatprep.subr.mxu0 0.0
        %594 = vmatpush1.msra.mxu0 0.0
        %595 = vmatprep.subr.mxu0 0.0
        %596 = vmatpush1.msra.mxu0 0.0
        %597 = vmatprep.subr.mxu0 0.0
        %598 = vmatpush1.msra.mxu0 0.0
        %599 = vmatprep.subr.mxu0 0.0
        %600 = vmatpush1.msra.mxu0 0.0
        %601 = vmatprep.subr.mxu0 0.0
        %602 = vmatpush1.msra.mxu0 0.0
        %603 = vmatprep.subr.mxu0 0.0
        %604 = vmatpush1.msra.mxu0 0.0
        %605 = vmatprep.mubr.f32.mxu0 0.0
        %606 = vmatmul.mubr.f32.gmra.mrb[0].mxu0 %v539
        %v607 = vpop.f32.mrb[0].mxu0
        %v608 = vadd.f32 0.0, %v607
        %v609 = vpop.f32.mrb[0].mxu0
        %610 = vdwg.mxu0
        %v612 = vsel %vm457, %v608, 0
        %v615 = vsel %vm461, %v426, 0
        %617 = vmatprep.subr.mxu0 0.0
        %618 = vmatpush1.msra.mxu0 %v615
        %619 = vmatprep.subr.mxu0 0.0
        %620 = vmatpush1.msra.mxu0 0.0
        %621 = vmatprep.subr.mxu0 0.0
        %622 = vmatpush1.msra.mxu0 0.0
        %623 = vmatprep.subr.mxu0 0.0
        %624 = vmatpush1.msra.mxu0 0.0
        %625 = vmatprep.subr.mxu0 0.0
        %626 = vmatpush1.msra.mxu0 0.0
        %627 = vmatprep.subr.mxu0 0.0
        %628 = vmatpush1.msra.mxu0 0.0
        %629 = vmatprep.subr.mxu0 0.0
        %630 = vmatpush1.msra.mxu0 0.0
        %631 = vmatprep.subr.mxu0 0.0
        %632 = vmatpush1.msra.mxu0 0.0
        %633 = vmatprep.subr.mxu0 0.0
        %634 = vmatpush1.msra.mxu0 0.0
        %635 = vmatprep.subr.mxu0 0.0
        %636 = vmatpush1.msra.mxu0 0.0
        %637 = vmatprep.subr.mxu0 0.0
        %638 = vmatpush1.msra.mxu0 0.0
        %639 = vmatprep.subr.mxu0 0.0
        %640 = vmatpush1.msra.mxu0 0.0
        %641 = vmatprep.subr.mxu0 0.0
        %642 = vmatpush1.msra.mxu0 0.0
        %643 = vmatprep.subr.mxu0 0.0
        %644 = vmatpush1.msra.mxu0 0.0
        %645 = vmatprep.subr.mxu0 0.0
        %646 = vmatpush1.msra.mxu0 0.0
        %647 = vmatprep.subr.mxu0 0.0
        %648 = vmatpush1.msra.mxu0 0.0
        %649 = vmatprep.subr.mxu0 0.0
        %650 = vmatpush1.msra.mxu0 0.0
        %651 = vmatprep.subr.mxu0 0.0
        %652 = vmatpush1.msra.mxu0 0.0
        %653 = vmatprep.subr.mxu0 0.0
        %654 = vmatpush1.msra.mxu0 0.0
        %655 = vmatprep.subr.mxu0 0.0
        %656 = vmatpush1.msra.mxu0 0.0
        %657 = vmatprep.subr.mxu0 0.0
        %658 = vmatpush1.msra.mxu0 0.0
        %659 = vmatprep.subr.mxu0 0.0
        %660 = vmatpush1.msra.mxu0 0.0
        %661 = vmatprep.subr.mxu0 0.0
        %662 = vmatpush1.msra.mxu0 0.0
        %663 = vmatprep.subr.mxu0 0.0
        %664 = vmatpush1.msra.mxu0 0.0
        %665 = vmatprep.subr.mxu0 0.0
        %666 = vmatpush1.msra.mxu0 0.0
        %667 = vmatprep.subr.mxu0 0.0
        %668 = vmatpush1.msra.mxu0 0.0
        %669 = vmatprep.subr.mxu0 0.0
        %670 = vmatpush1.msra.mxu0 0.0
        %671 = vmatprep.subr.mxu0 0.0
        %672 = vmatpush1.msra.mxu0 0.0
        %673 = vmatprep.subr.mxu0 0.0
        %674 = vmatpush1.msra.mxu0 0.0
        %675 = vmatprep.subr.mxu0 0.0
        %676 = vmatpush1.msra.mxu0 0.0
        %677 = vmatprep.subr.mxu0 0.0
        %678 = vmatpush1.msra.mxu0 0.0
        %679 = vmatprep.subr.mxu0 0.0
        %680 = vmatpush1.msra.mxu0 0.0
        %681 = vmatprep.mubr.f32.mxu0 0.0
        %682 = vmatmul.mubr.f32.gmra.mrb[0].mxu0 %v612
        %v683 = vpop.f32.mrb[0].mxu0
        %v684 = vadd.f32 0.0, %v683
        %v685 = vpop.f32.mrb[0].mxu0
        %686 = vdwg.mxu0
        %v687 = vadd.f32 %v535, %v684
        %s688 = scalar_lea.vmem %s367, 8 [#allocation2]
        %v689 = vld [vmem:[%s688] sm:$0xff]
        %v691 = vsel %vm537, %v689, 0
        %693 = vmatprep.subr.mxu0 0.0
        %694 = vmatpush1.msra.mxu0 %v456
        %695 = vmatprep.subr.mxu0 0.0
        %696 = vmatpush1.msra.mxu0 0.0
        %697 = vmatprep.subr.mxu0 0.0
        %698 = vmatpush1.msra.mxu0 0.0
        %699 = vmatprep.subr.mxu0 0.0
        %700 = vmatpush1.msra.mxu0 0.0
        %701 = vmatprep.subr.mxu0 0.0
        %702 = vmatpush1.msra.mxu0 0.0
        %703 = vmatprep.subr.mxu0 0.0
        %704 = vmatpush1.msra.mxu0 0.0
        %705 = vmatprep.subr.mxu0 0.0
        %706 = vmatpush1.msra.mxu0 0.0
        %707 = vmatprep.subr.mxu0 0.0
        %708 = vmatpush1.msra.mxu0 0.0
        %709 = vmatprep.subr.mxu0 0.0
        %710 = vmatpush1.msra.mxu0 0.0
        %711 = vmatprep.subr.mxu0 0.0
        %712 = vmatpush1.msra.mxu0 0.0
        %713 = vmatprep.subr.mxu0 0.0
        %714 = vmatpush1.msra.mxu0 0.0
        %715 = vmatprep.subr.mxu0 0.0
        %716 = vmatpush1.msra.mxu0 0.0
        %717 = vmatprep.subr.mxu0 0.0
        %718 = vmatpush1.msra.mxu0 0.0
        %719 = vmatprep.subr.mxu0 0.0
        %720 = vmatpush1.msra.mxu0 0.0
        %721 = vmatprep.subr.mxu0 0.0
        %722 = vmatpush1.msra.mxu0 0.0
        %723 = vmatprep.subr.mxu0 0.0
        %724 = vmatpush1.msra.mxu0 0.0
        %725 = vmatprep.subr.mxu0 0.0
        %726 = vmatpush1.msra.mxu0 0.0
        %727 = vmatprep.subr.mxu0 0.0
        %728 = vmatpush1.msra.mxu0 0.0
        %729 = vmatprep.subr.mxu0 0.0
        %730 = vmatpush1.msra.mxu0 0.0
        %731 = vmatprep.subr.mxu0 0.0
        %732 = vmatpush1.msra.mxu0 0.0
        %733 = vmatprep.subr.mxu0 0.0
        %734 = vmatpush1.msra.mxu0 0.0
        %735 = vmatprep.subr.mxu0 0.0
        %736 = vmatpush1.msra.mxu0 0.0
        %737 = vmatprep.subr.mxu0 0.0
        %738 = vmatpush1.msra.mxu0 0.0
        %739 = vmatprep.subr.mxu0 0.0
        %740 = vmatpush1.msra.mxu0 0.0
        %741 = vmatprep.subr.mxu0 0.0
        %742 = vmatpush1.msra.mxu0 0.0
        %743 = vmatprep.subr.mxu0 0.0
        %744 = vmatpush1.msra.mxu0 0.0
        %745 = vmatprep.subr.mxu0 0.0
        %746 = vmatpush1.msra.mxu0 0.0
        %747 = vmatprep.subr.mxu0 0.0
        %748 = vmatpush1.msra.mxu0 0.0
        %749 = vmatprep.subr.mxu0 0.0
        %750 = vmatpush1.msra.mxu0 0.0
        %751 = vmatprep.subr.mxu0 0.0
        %752 = vmatpush1.msra.mxu0 0.0
        %753 = vmatprep.subr.mxu0 0.0
        %754 = vmatpush1.msra.mxu0 0.0
        %755 = vmatprep.subr.mxu0 0.0
        %756 = vmatpush1.msra.mxu0 0.0
        %757 = vmatprep.mubr.f32.mxu0 0.0
        %758 = vmatmul.mubr.f32.gmra.mrb[0].mxu0 %v691
        %v759 = vpop.f32.mrb[0].mxu0
        %v760 = vadd.f32 0.0, %v759
        %v761 = vpop.f32.mrb[0].mxu0
        %762 = vdwg.mxu0
        %v764 = vsel %vm457, %v760, 0
        %v767 = vsel %vm461, %v428, 0
        %769 = vmatprep.subr.mxu0 0.0
        %770 = vmatpush1.msra.mxu0 %v767
        %771 = vmatprep.subr.mxu0 0.0
        %772 = vmatpush1.msra.mxu0 0.0
        %773 = vmatprep.subr.mxu0 0.0
        %774 = vmatpush1.msra.mxu0 0.0
        %775 = vmatprep.subr.mxu0 0.0
        %776 = vmatpush1.msra.mxu0 0.0
        %777 = vmatprep.subr.mxu0 0.0
        %778 = vmatpush1.msra.mxu0 0.0
        %779 = vmatprep.subr.mxu0 0.0
        %780 = vmatpush1.msra.mxu0 0.0
        %781 = vmatprep.subr.mxu0 0.0
        %782 = vmatpush1.msra.mxu0 0.0
        %783 = vmatprep.subr.mxu0 0.0
        %784 = vmatpush1.msra.mxu0 0.0
        %785 = vmatprep.subr.mxu0 0.0
        %786 = vmatpush1.msra.mxu0 0.0
        %787 = vmatprep.subr.mxu0 0.0
        %788 = vmatpush1.msra.mxu0 0.0
        %789 = vmatprep.subr.mxu0 0.0
        %790 = vmatpush1.msra.mxu0 0.0
        %791 = vmatprep.subr.mxu0 0.0
        %792 = vmatpush1.msra.mxu0 0.0
        %793 = vmatprep.subr.mxu0 0.0
        %794 = vmatpush1.msra.mxu0 0.0
        %795 = vmatprep.subr.mxu0 0.0
        %796 = vmatpush1.msra.mxu0 0.0
        %797 = vmatprep.subr.mxu0 0.0
        %798 = vmatpush1.msra.mxu0 0.0
        %799 = vmatprep.subr.mxu0 0.0
        %800 = vmatpush1.msra.mxu0 0.0
        %801 = vmatprep.subr.mxu0 0.0
        %802 = vmatpush1.msra.mxu0 0.0
        %803 = vmatprep.subr.mxu0 0.0
        %804 = vmatpush1.msra.mxu0 0.0
        %805 = vmatprep.subr.mxu0 0.0
        %806 = vmatpush1.msra.mxu0 0.0
        %807 = vmatprep.subr.mxu0 0.0
        %808 = vmatpush1.msra.mxu0 0.0
        %809 = vmatprep.subr.mxu0 0.0
        %810 = vmatpush1.msra.mxu0 0.0
        %811 = vmatprep.subr.mxu0 0.0
        %812 = vmatpush1.msra.mxu0 0.0
        %813 = vmatprep.subr.mxu0 0.0
        %814 = vmatpush1.msra.mxu0 0.0
        %815 = vmatprep.subr.mxu0 0.0
        %816 = vmatpush1.msra.mxu0 0.0
        %817 = vmatprep.subr.mxu0 0.0
        %818 = vmatpush1.msra.mxu0 0.0
        %819 = vmatprep.subr.mxu0 0.0
        %820 = vmatpush1.msra.mxu0 0.0
        %821 = vmatprep.subr.mxu0 0.0
        %822 = vmatpush1.msra.mxu0 0.0
        %823 = vmatprep.subr.mxu0 0.0
        %824 = vmatpush1.msra.mxu0 0.0
        %825 = vmatprep.subr.mxu0 0.0
        %826 = vmatpush1.msra.mxu0 0.0
        %827 = vmatprep.subr.mxu0 0.0
        %828 = vmatpush1.msra.mxu0 0.0
        %829 = vmatprep.subr.mxu0 0.0
        %830 = vmatpush1.msra.mxu0 0.0
        %831 = vmatprep.subr.mxu0 0.0
        %832 = vmatpush1.msra.mxu0 0.0
        %833 = vmatprep.mubr.f32.mxu0 0.0
        %834 = vmatmul.mubr.f32.gmra.mrb[0].mxu0 %v764
        %v835 = vpop.f32.mrb[0].mxu0
        %v836 = vadd.f32 0.0, %v835
        %v837 = vpop.f32.mrb[0].mxu0
        %838 = vdwg.mxu0
        %v839 = vadd.f32 %v687, %v836
        %s840 = scalar_lea.vmem %s367, 16 [#allocation2]
        %v841 = vld [vmem:[%s840] sm:$0xff]
        %v843 = vsel %vm537, %v841, 0
        %845 = vmatprep.subr.mxu0 0.0
        %846 = vmatpush1.msra.mxu0 %v456
        %847 = vmatprep.subr.mxu0 0.0
        %848 = vmatpush1.msra.mxu0 0.0
        %849 = vmatprep.subr.mxu0 0.0
        %850 = vmatpush1.msra.mxu0 0.0
        %851 = vmatprep.subr.mxu0 0.0
        %852 = vmatpush1.msra.mxu0 0.0
        %853 = vmatprep.subr.mxu0 0.0
        %854 = vmatpush1.msra.mxu0 0.0
        %855 = vmatprep.subr.mxu0 0.0
        %856 = vmatpush1.msra.mxu0 0.0
        %857 = vmatprep.subr.mxu0 0.0
        %858 = vmatpush1.msra.mxu0 0.0
        %859 = vmatprep.subr.mxu0 0.0
        %860 = vmatpush1.msra.mxu0 0.0
        %861 = vmatprep.subr.mxu0 0.0
        %862 = vmatpush1.msra.mxu0 0.0
        %863 = vmatprep.subr.mxu0 0.0
        %864 = vmatpush1.msra.mxu0 0.0
        %865 = vmatprep.subr.mxu0 0.0
        %866 = vmatpush1.msra.mxu0 0.0
        %867 = vmatprep.subr.mxu0 0.0
        %868 = vmatpush1.msra.mxu0 0.0
        %869 = vmatprep.subr.mxu0 0.0
        %870 = vmatpush1.msra.mxu0 0.0
        %871 = vmatprep.subr.mxu0 0.0
        %872 = vmatpush1.msra.mxu0 0.0
        %873 = vmatprep.subr.mxu0 0.0
        %874 = vmatpush1.msra.mxu0 0.0
        %875 = vmatprep.subr.mxu0 0.0
        %876 = vmatpush1.msra.mxu0 0.0
        %877 = vmatprep.subr.mxu0 0.0
        %878 = vmatpush1.msra.mxu0 0.0
        %879 = vmatprep.subr.mxu0 0.0
        %880 = vmatpush1.msra.mxu0 0.0
        %881 = vmatprep.subr.mxu0 0.0
        %882 = vmatpush1.msra.mxu0 0.0
        %883 = vmatprep.subr.mxu0 0.0
        %884 = vmatpush1.msra.mxu0 0.0
        %885 = vmatprep.subr.mxu0 0.0
        %886 = vmatpush1.msra.mxu0 0.0
        %887 = vmatprep.subr.mxu0 0.0
        %888 = vmatpush1.msra.mxu0 0.0
        %889 = vmatprep.subr.mxu0 0.0
        %890 = vmatpush1.msra.mxu0 0.0
        %891 = vmatprep.subr.mxu0 0.0
        %892 = vmatpush1.msra.mxu0 0.0
        %893 = vmatprep.subr.mxu0 0.0
        %894 = vmatpush1.msra.mxu0 0.0
        %895 = vmatprep.subr.mxu0 0.0
        %896 = vmatpush1.msra.mxu0 0.0
        %897 = vmatprep.subr.mxu0 0.0
        %898 = vmatpush1.msra.mxu0 0.0
        %899 = vmatprep.subr.mxu0 0.0
        %900 = vmatpush1.msra.mxu0 0.0
        %901 = vmatprep.subr.mxu0 0.0
        %902 = vmatpush1.msra.mxu0 0.0
        %903 = vmatprep.subr.mxu0 0.0
        %904 = vmatpush1.msra.mxu0 0.0
        %905 = vmatprep.subr.mxu0 0.0
        %906 = vmatpush1.msra.mxu0 0.0
        %907 = vmatprep.subr.mxu0 0.0
        %908 = vmatpush1.msra.mxu0 0.0
        %909 = vmatprep.mubr.f32.mxu0 0.0
        %910 = vmatmul.mubr.f32.gmra.mrb[0].mxu0 %v843
        %v911 = vpop.f32.mrb[0].mxu0
        %v912 = vadd.f32 0.0, %v911
        %v913 = vpop.f32.mrb[0].mxu0
        %914 = vdwg.mxu0
        %v916 = vsel %vm457, %v912, 0
        %v919 = vsel %vm461, %v430, 0
        %921 = vmatprep.subr.mxu0 0.0
        %922 = vmatpush1.msra.mxu0 %v919
        %923 = vmatprep.subr.mxu0 0.0
        %924 = vmatpush1.msra.mxu0 0.0
        %925 = vmatprep.subr.mxu0 0.0
        %926 = vmatpush1.msra.mxu0 0.0
        %927 = vmatprep.subr.mxu0 0.0
        %928 = vmatpush1.msra.mxu0 0.0
        %929 = vmatprep.subr.mxu0 0.0
        %930 = vmatpush1.msra.mxu0 0.0
        %931 = vmatprep.subr.mxu0 0.0
        %932 = vmatpush1.msra.mxu0 0.0
        %933 = vmatprep.subr.mxu0 0.0
        %934 = vmatpush1.msra.mxu0 0.0
        %935 = vmatprep.subr.mxu0 0.0
        %936 = vmatpush1.msra.mxu0 0.0
        %937 = vmatprep.subr.mxu0 0.0
        %938 = vmatpush1.msra.mxu0 0.0
        %939 = vmatprep.subr.mxu0 0.0
        %940 = vmatpush1.msra.mxu0 0.0
        %941 = vmatprep.subr.mxu0 0.0
        %942 = vmatpush1.msra.mxu0 0.0
        %943 = vmatprep.subr.mxu0 0.0
        %944 = vmatpush1.msra.mxu0 0.0
        %945 = vmatprep.subr.mxu0 0.0
        %946 = vmatpush1.msra.mxu0 0.0
        %947 = vmatprep.subr.mxu0 0.0
        %948 = vmatpush1.msra.mxu0 0.0
        %949 = vmatprep.subr.mxu0 0.0
        %950 = vmatpush1.msra.mxu0 0.0
        %951 = vmatprep.subr.mxu0 0.0
        %952 = vmatpush1.msra.mxu0 0.0
        %953 = vmatprep.subr.mxu0 0.0
        %954 = vmatpush1.msra.mxu0 0.0
        %955 = vmatprep.subr.mxu0 0.0
        %956 = vmatpush1.msra.mxu0 0.0
        %957 = vmatprep.subr.mxu0 0.0
        %958 = vmatpush1.msra.mxu0 0.0
        %959 = vmatprep.subr.mxu0 0.0
        %960 = vmatpush1.msra.mxu0 0.0
        %961 = vmatprep.subr.mxu0 0.0
        %962 = vmatpush1.msra.mxu0 0.0
        %963 = vmatprep.subr.mxu0 0.0
        %964 = vmatpush1.msra.mxu0 0.0
        %965 = vmatprep.subr.mxu0 0.0
        %966 = vmatpush1.msra.mxu0 0.0
        %967 = vmatprep.subr.mxu0 0.0
        %968 = vmatpush1.msra.mxu0 0.0
        %969 = vmatprep.subr.mxu0 0.0
        %970 = vmatpush1.msra.mxu0 0.0
        %971 = vmatprep.subr.mxu0 0.0
        %972 = vmatpush1.msra.mxu0 0.0
        %973 = vmatprep.subr.mxu0 0.0
        %974 = vmatpush1.msra.mxu0 0.0
        %975 = vmatprep.subr.mxu0 0.0
        %976 = vmatpush1.msra.mxu0 0.0
        %977 = vmatprep.subr.mxu0 0.0
        %978 = vmatpush1.msra.mxu0 0.0
        %979 = vmatprep.subr.mxu0 0.0
        %980 = vmatpush1.msra.mxu0 0.0
        %981 = vmatprep.subr.mxu0 0.0
        %982 = vmatpush1.msra.mxu0 0.0
        %983 = vmatprep.subr.mxu0 0.0
        %984 = vmatpush1.msra.mxu0 0.0
        %985 = vmatprep.mubr.f32.mxu0 0.0
        %986 = vmatmul.mubr.f32.gmra.mrb[0].mxu0 %v916
        %v987 = vpop.f32.mrb[0].mxu0
        %v988 = vadd.f32 0.0, %v987
        %v989 = vpop.f32.mrb[0].mxu0
        %990 = vdwg.mxu0
        %v991 = vadd.f32 %v839, %v988
        %s992 = scalar_lea.vmem %s367, 24 [#allocation2]
        %v993 = vld [vmem:[%s992] sm:$0xff]
        %v995 = vsel %vm537, %v993, 0
        %997 = vmatprep.subr.mxu0 0.0
        %998 = vmatpush1.msra.mxu0 %v456
        %999 = vmatprep.subr.mxu0 0.0
        %1000 = vmatpush1.msra.mxu0 0.0
        %1001 = vmatprep.subr.mxu0 0.0
        %1002 = vmatpush1.msra.mxu0 0.0
        %1003 = vmatprep.subr.mxu0 0.0
        %1004 = vmatpush1.msra.mxu0 0.0
        %1005 = vmatprep.subr.mxu0 0.0
        %1006 = vmatpush1.msra.mxu0 0.0
        %1007 = vmatprep.subr.mxu0 0.0
        %1008 = vmatpush1.msra.mxu0 0.0
        %1009 = vmatprep.subr.mxu0 0.0
        %1010 = vmatpush1.msra.mxu0 0.0
        %1011 = vmatprep.subr.mxu0 0.0
        %1012 = vmatpush1.msra.mxu0 0.0
        %1013 = vmatprep.subr.mxu0 0.0
        %1014 = vmatpush1.msra.mxu0 0.0
        %1015 = vmatprep.subr.mxu0 0.0
        %1016 = vmatpush1.msra.mxu0 0.0
        %1017 = vmatprep.subr.mxu0 0.0
        %1018 = vmatpush1.msra.mxu0 0.0
        %1019 = vmatprep.subr.mxu0 0.0
        %1020 = vmatpush1.msra.mxu0 0.0
        %1021 = vmatprep.subr.mxu0 0.0
        %1022 = vmatpush1.msra.mxu0 0.0
        %1023 = vmatprep.subr.mxu0 0.0
        %1024 = vmatpush1.msra.mxu0 0.0
        %1025 = vmatprep.subr.mxu0 0.0
        %1026 = vmatpush1.msra.mxu0 0.0
        %1027 = vmatprep.subr.mxu0 0.0
        %1028 = vmatpush1.msra.mxu0 0.0
        %1029 = vmatprep.subr.mxu0 0.0
        %1030 = vmatpush1.msra.mxu0 0.0
        %1031 = vmatprep.subr.mxu0 0.0
        %1032 = vmatpush1.msra.mxu0 0.0
        %1033 = vmatprep.subr.mxu0 0.0
        %1034 = vmatpush1.msra.mxu0 0.0
        %1035 = vmatprep.subr.mxu0 0.0
        %1036 = vmatpush1.msra.mxu0 0.0
        %1037 = vmatprep.subr.mxu0 0.0
        %1038 = vmatpush1.msra.mxu0 0.0
        %1039 = vmatprep.subr.mxu0 0.0
        %1040 = vmatpush1.msra.mxu0 0.0
        %1041 = vmatprep.subr.mxu0 0.0
        %1042 = vmatpush1.msra.mxu0 0.0
        %1043 = vmatprep.subr.mxu0 0.0
        %1044 = vmatpush1.msra.mxu0 0.0
        %1045 = vmatprep.subr.mxu0 0.0
        %1046 = vmatpush1.msra.mxu0 0.0
        %1047 = vmatprep.subr.mxu0 0.0
        %1048 = vmatpush1.msra.mxu0 0.0
        %1049 = vmatprep.subr.mxu0 0.0
        %1050 = vmatpush1.msra.mxu0 0.0
        %1051 = vmatprep.subr.mxu0 0.0
        %1052 = vmatpush1.msra.mxu0 0.0
        %1053 = vmatprep.subr.mxu0 0.0
        %1054 = vmatpush1.msra.mxu0 0.0
        %1055 = vmatprep.subr.mxu0 0.0
        %1056 = vmatpush1.msra.mxu0 0.0
        %1057 = vmatprep.subr.mxu0 0.0
        %1058 = vmatpush1.msra.mxu0 0.0
        %1059 = vmatprep.subr.mxu0 0.0
        %1060 = vmatpush1.msra.mxu0 0.0
        %1061 = vmatprep.mubr.f32.mxu0 0.0
        %1062 = vmatmul.mubr.f32.gmra.mrb[0].mxu0 %v995
        %v1063 = vpop.f32.mrb[0].mxu0
        %v1064 = vadd.f32 0.0, %v1063
        %v1065 = vpop.f32.mrb[0].mxu0
        %1066 = vdwg.mxu0
        %v1068 = vsel %vm457, %v1064, 0
        %v1071 = vsel %vm461, %v432, 0
        %1073 = vmatprep.subr.mxu0 0.0
        %1074 = vmatpush1.msra.mxu0 %v1071
        %1075 = vmatprep.subr.mxu0 0.0
        %1076 = vmatpush1.msra.mxu0 0.0
        %1077 = vmatprep.subr.mxu0 0.0
        %1078 = vmatpush1.msra.mxu0 0.0
        %1079 = vmatprep.subr.mxu0 0.0
        %1080 = vmatpush1.msra.mxu0 0.0
        %1081 = vmatprep.subr.mxu0 0.0
        %1082 = vmatpush1.msra.mxu0 0.0
        %1083 = vmatprep.subr.mxu0 0.0
        %1084 = vmatpush1.msra.mxu0 0.0
        %1085 = vmatprep.subr.mxu0 0.0
        %1086 = vmatpush1.msra.mxu0 0.0
        %1087 = vmatprep.subr.mxu0 0.0
        %1088 = vmatpush1.msra.mxu0 0.0
        %1089 = vmatprep.subr.mxu0 0.0
        %1090 = vmatpush1.msra.mxu0 0.0
        %1091 = vmatprep.subr.mxu0 0.0
        %1092 = vmatpush1.msra.mxu0 0.0
        %1093 = vmatprep.subr.mxu0 0.0
        %1094 = vmatpush1.msra.mxu0 0.0
        %1095 = vmatprep.subr.mxu0 0.0
        %1096 = vmatpush1.msra.mxu0 0.0
        %1097 = vmatprep.subr.mxu0 0.0
        %1098 = vmatpush1.msra.mxu0 0.0
        %1099 = vmatprep.subr.mxu0 0.0
        %1100 = vmatpush1.msra.mxu0 0.0
        %1101 = vmatprep.subr.mxu0 0.0
        %1102 = vmatpush1.msra.mxu0 0.0
        %1103 = vmatprep.subr.mxu0 0.0
        %1104 = vmatpush1.msra.mxu0 0.0
        %1105 = vmatprep.subr.mxu0 0.0
        %1106 = vmatpush1.msra.mxu0 0.0
        %1107 = vmatprep.subr.mxu0 0.0
        %1108 = vmatpush1.msra.mxu0 0.0
        %1109 = vmatprep.subr.mxu0 0.0
        %1110 = vmatpush1.msra.mxu0 0.0
        %1111 = vmatprep.subr.mxu0 0.0
        %1112 = vmatpush1.msra.mxu0 0.0
        %1113 = vmatprep.subr.mxu0 0.0
        %1114 = vmatpush1.msra.mxu0 0.0
        %1115 = vmatprep.subr.mxu0 0.0
        %1116 = vmatpush1.msra.mxu0 0.0
        %1117 = vmatprep.subr.mxu0 0.0
        %1118 = vmatpush1.msra.mxu0 0.0
        %1119 = vmatprep.subr.mxu0 0.0
        %1120 = vmatpush1.msra.mxu0 0.0
        %1121 = vmatprep.subr.mxu0 0.0
        %1122 = vmatpush1.msra.mxu0 0.0
        %1123 = vmatprep.subr.mxu0 0.0
        %1124 = vmatpush1.msra.mxu0 0.0
        %1125 = vmatprep.subr.mxu0 0.0
        %1126 = vmatpush1.msra.mxu0 0.0
        %1127 = vmatprep.subr.mxu0 0.0
        %1128 = vmatpush1.msra.mxu0 0.0
        %1129 = vmatprep.subr.mxu0 0.0
        %1130 = vmatpush1.msra.mxu0 0.0
        %1131 = vmatprep.subr.mxu0 0.0
        %1132 = vmatpush1.msra.mxu0 0.0
        %1133 = vmatprep.subr.mxu0 0.0
        %1134 = vmatpush1.msra.mxu0 0.0
        %1135 = vmatprep.subr.mxu0 0.0
        %1136 = vmatpush1.msra.mxu0 0.0
        %1137 = vmatprep.mubr.f32.mxu0 0.0
        %1138 = vmatmul.mubr.f32.gmra.mrb[0].mxu0 %v1068
        %v1139 = vpop.f32.mrb[0].mxu0
        %v1140 = vadd.f32 0.0, %v1139
        %v1141 = vpop.f32.mrb[0].mxu0
        %1142 = vdwg.mxu0
        %v1143 = vadd.f32 %v991, %v1140
        %v1145 = vsel %vm461, %v437, 0
        %1147 = vmatprep.subr.mxu0 0.0
        %1148 = vmatpush1.msra.mxu0 %v1145
        %1149 = vmatprep.subr.mxu0 0.0
        %1150 = vmatpush1.msra.mxu0 0.0
        %1151 = vmatprep.subr.mxu0 0.0
        %1152 = vmatpush1.msra.mxu0 0.0
        %1153 = vmatprep.subr.mxu0 0.0
        %1154 = vmatpush1.msra.mxu0 0.0
        %1155 = vmatprep.subr.mxu0 0.0
        %1156 = vmatpush1.msra.mxu0 0.0
        %1157 = vmatprep.subr.mxu0 0.0
        %1158 = vmatpush1.msra.mxu0 0.0
        %1159 = vmatprep.subr.mxu0 0.0
        %1160 = vmatpush1.msra.mxu0 0.0
        %1161 = vmatprep.subr.mxu0 0.0
        %1162 = vmatpush1.msra.mxu0 0.0
        %1163 = vmatprep.subr.mxu0 0.0
        %1164 = vmatpush1.msra.mxu0 0.0
        %1165 = vmatprep.subr.mxu0 0.0
        %1166 = vmatpush1.msra.mxu0 0.0
        %1167 = vmatprep.subr.mxu0 0.0
        %1168 = vmatpush1.msra.mxu0 0.0
        %1169 = vmatprep.subr.mxu0 0.0
        %1170 = vmatpush1.msra.mxu0 0.0
        %1171 = vmatprep.subr.mxu0 0.0
        %1172 = vmatpush1.msra.mxu0 0.0
        %1173 = vmatprep.subr.mxu0 0.0
        %1174 = vmatpush1.msra.mxu0 0.0
        %1175 = vmatprep.subr.mxu0 0.0
        %1176 = vmatpush1.msra.mxu0 0.0
        %1177 = vmatprep.subr.mxu0 0.0
        %1178 = vmatpush1.msra.mxu0 0.0
        %1179 = vmatprep.subr.mxu0 0.0
        %1180 = vmatpush1.msra.mxu0 0.0
        %1181 = vmatprep.subr.mxu0 0.0
        %1182 = vmatpush1.msra.mxu0 0.0
        %1183 = vmatprep.subr.mxu0 0.0
        %1184 = vmatpush1.msra.mxu0 0.0
        %1185 = vmatprep.subr.mxu0 0.0
        %1186 = vmatpush1.msra.mxu0 0.0
        %1187 = vmatprep.subr.mxu0 0.0
        %1188 = vmatpush1.msra.mxu0 0.0
        %1189 = vmatprep.subr.mxu0 0.0
        %1190 = vmatpush1.msra.mxu0 0.0
        %1191 = vmatprep.subr.mxu0 0.0
        %1192 = vmatpush1.msra.mxu0 0.0
        %1193 = vmatprep.subr.mxu0 0.0
        %1194 = vmatpush1.msra.mxu0 0.0
        %1195 = vmatprep.subr.mxu0 0.0
        %1196 = vmatpush1.msra.mxu0 0.0
        %1197 = vmatprep.subr.mxu0 0.0
        %1198 = vmatpush1.msra.mxu0 0.0
        %1199 = vmatprep.subr.mxu0 0.0
        %1200 = vmatpush1.msra.mxu0 0.0
        %1201 = vmatprep.subr.mxu0 0.0
        %1202 = vmatpush1.msra.mxu0 0.0
        %1203 = vmatprep.subr.mxu0 0.0
        %1204 = vmatpush1.msra.mxu0 0.0
        %1205 = vmatprep.subr.mxu0 0.0
        %1206 = vmatpush1.msra.mxu0 0.0
        %1207 = vmatprep.subr.mxu0 0.0
        %1208 = vmatpush1.msra.mxu0 0.0
        %1209 = vmatprep.subr.mxu0 0.0
        %1210 = vmatpush1.msra.mxu0 0.0
        %1211 = vmatprep.mubr.f32.mxu0 0.0
        %1212 = vmatmul.mubr.f32.gmra.mrb[0].mxu0 %v459
        %v1213 = vpop.f32.mrb[0].mxu0
        %v1214 = vadd.f32 0.0, %v1213
        %v1215 = vpop.f32.mrb[0].mxu0
        %1216 = vdwg.mxu0
        %v1218 = vsel %vm461, %v439, 0
        %1220 = vmatprep.subr.mxu0 0.0
        %1221 = vmatpush1.msra.mxu0 %v1218
        %1222 = vmatprep.subr.mxu0 0.0
        %1223 = vmatpush1.msra.mxu0 0.0
        %1224 = vmatprep.subr.mxu0 0.0
        %1225 = vmatpush1.msra.mxu0 0.0
        %1226 = vmatprep.subr.mxu0 0.0
        %1227 = vmatpush1.msra.mxu0 0.0
        %1228 = vmatprep.subr.mxu0 0.0
        %1229 = vmatpush1.msra.mxu0 0.0
        %1230 = vmatprep.subr.mxu0 0.0
        %1231 = vmatpush1.msra.mxu0 0.0
        %1232 = vmatprep.subr.mxu0 0.0
        %1233 = vmatpush1.msra.mxu0 0.0
        %1234 = vmatprep.subr.mxu0 0.0
        %1235 = vmatpush1.msra.mxu0 0.0
        %1236 = vmatprep.subr.mxu0 0.0
        %1237 = vmatpush1.msra.mxu0 0.0
        %1238 = vmatprep.subr.mxu0 0.0
        %1239 = vmatpush1.msra.mxu0 0.0
        %1240 = vmatprep.subr.mxu0 0.0
        %1241 = vmatpush1.msra.mxu0 0.0
        %1242 = vmatprep.subr.mxu0 0.0
        %1243 = vmatpush1.msra.mxu0 0.0
        %1244 = vmatprep.subr.mxu0 0.0
        %1245 = vmatpush1.msra.mxu0 0.0
        %1246 = vmatprep.subr.mxu0 0.0
        %1247 = vmatpush1.msra.mxu0 0.0
        %1248 = vmatprep.subr.mxu0 0.0
        %1249 = vmatpush1.msra.mxu0 0.0
        %1250 = vmatprep.subr.mxu0 0.0
        %1251 = vmatpush1.msra.mxu0 0.0
        %1252 = vmatprep.subr.mxu0 0.0
        %1253 = vmatpush1.msra.mxu0 0.0
        %1254 = vmatprep.subr.mxu0 0.0
        %1255 = vmatpush1.msra.mxu0 0.0
        %1256 = vmatprep.subr.mxu0 0.0
        %1257 = vmatpush1.msra.mxu0 0.0
        %1258 = vmatprep.subr.mxu0 0.0
        %1259 = vmatpush1.msra.mxu0 0.0
        %1260 = vmatprep.subr.mxu0 0.0
        %1261 = vmatpush1.msra.mxu0 0.0
        %1262 = vmatprep.subr.mxu0 0.0
        %1263 = vmatpush1.msra.mxu0 0.0
        %1264 = vmatprep.subr.mxu0 0.0
        %1265 = vmatpush1.msra.mxu0 0.0
        %1266 = vmatprep.subr.mxu0 0.0
        %1267 = vmatpush1.msra.mxu0 0.0
        %1268 = vmatprep.subr.mxu0 0.0
        %1269 = vmatpush1.msra.mxu0 0.0
        %1270 = vmatprep.subr.mxu0 0.0
        %1271 = vmatpush1.msra.mxu0 0.0
        %1272 = vmatprep.subr.mxu0 0.0
        %1273 = vmatpush1.msra.mxu0 0.0
        %1274 = vmatprep.subr.mxu0 0.0
        %1275 = vmatpush1.msra.mxu0 0.0
        %1276 = vmatprep.subr.mxu0 0.0
        %1277 = vmatpush1.msra.mxu0 0.0
        %1278 = vmatprep.subr.mxu0 0.0
        %1279 = vmatpush1.msra.mxu0 0.0
        %1280 = vmatprep.subr.mxu0 0.0
        %1281 = vmatpush1.msra.mxu0 0.0
        %1282 = vmatprep.subr.mxu0 0.0
        %1283 = vmatpush1.msra.mxu0 0.0
        %1284 = vmatprep.mubr.f32.mxu0 0.0
        %1285 = vmatmul.mubr.f32.gmra.mrb[0].mxu0 %v459
        %v1286 = vpop.f32.mrb[0].mxu0
        %v1287 = vadd.f32 0.0, %v1286
        %v1288 = vpop.f32.mrb[0].mxu0
        %1289 = vdwg.mxu0
        %v1291 = vsel %vm537, %v446, 0
        %1293 = vmatprep.subr.mxu0 0.0
        %1294 = vmatpush1.msra.mxu0 %v1287
        %1295 = vmatprep.subr.mxu0 0.0
        %1296 = vmatpush1.msra.mxu0 0.0
        %1297 = vmatprep.subr.mxu0 0.0
        %1298 = vmatpush1.msra.mxu0 0.0
        %1299 = vmatprep.subr.mxu0 0.0
        %1300 = vmatpush1.msra.mxu0 0.0
        %1301 = vmatprep.subr.mxu0 0.0
        %1302 = vmatpush1.msra.mxu0 0.0
        %1303 = vmatprep.subr.mxu0 0.0
        %1304 = vmatpush1.msra.mxu0 0.0
        %1305 = vmatprep.subr.mxu0 0.0
        %1306 = vmatpush1.msra.mxu0 0.0
        %1307 = vmatprep.subr.mxu0 0.0
        %1308 = vmatpush1.msra.mxu0 0.0
        %1309 = vmatprep.subr.mxu0 0.0
        %1310 = vmatpush1.msra.mxu0 0.0
        %1311 = vmatprep.subr.mxu0 0.0
        %1312 = vmatpush1.msra.mxu0 0.0
        %1313 = vmatprep.subr.mxu0 0.0
        %1314 = vmatpush1.msra.mxu0 0.0
        %1315 = vmatprep.subr.mxu0 0.0
        %1316 = vmatpush1.msra.mxu0 0.0
        %1317 = vmatprep.subr.mxu0 0.0
        %1318 = vmatpush1.msra.mxu0 0.0
        %1319 = vmatprep.subr.mxu0 0.0
        %1320 = vmatpush1.msra.mxu0 0.0
        %1321 = vmatprep.subr.mxu0 0.0
        %1322 = vmatpush1.msra.mxu0 0.0
        %1323 = vmatprep.subr.mxu0 0.0
        %1324 = vmatpush1.msra.mxu0 0.0
        %1325 = vmatprep.subr.mxu0 0.0
        %1326 = vmatpush1.msra.mxu0 0.0
        %1327 = vmatprep.subr.mxu0 0.0
        %1328 = vmatpush1.msra.mxu0 0.0
        %1329 = vmatprep.subr.mxu0 0.0
        %1330 = vmatpush1.msra.mxu0 0.0
        %1331 = vmatprep.subr.mxu0 0.0
        %1332 = vmatpush1.msra.mxu0 0.0
        %1333 = vmatprep.subr.mxu0 0.0
        %1334 = vmatpush1.msra.mxu0 0.0
        %1335 = vmatprep.subr.mxu0 0.0
        %1336 = vmatpush1.msra.mxu0 0.0
        %1337 = vmatprep.subr.mxu0 0.0
        %1338 = vmatpush1.msra.mxu0 0.0
        %1339 = vmatprep.subr.mxu0 0.0
        %1340 = vmatpush1.msra.mxu0 0.0
        %1341 = vmatprep.subr.mxu0 0.0
        %1342 = vmatpush1.msra.mxu0 0.0
        %1343 = vmatprep.subr.mxu0 0.0
        %1344 = vmatpush1.msra.mxu0 0.0
        %1345 = vmatprep.subr.mxu0 0.0
        %1346 = vmatpush1.msra.mxu0 0.0
        %1347 = vmatprep.subr.mxu0 0.0
        %1348 = vmatpush1.msra.mxu0 0.0
        %1349 = vmatprep.subr.mxu0 0.0
        %1350 = vmatpush1.msra.mxu0 0.0
        %1351 = vmatprep.subr.mxu0 0.0
        %1352 = vmatpush1.msra.mxu0 0.0
        %1353 = vmatprep.subr.mxu0 0.0
        %1354 = vmatpush1.msra.mxu0 0.0
        %1355 = vmatprep.subr.mxu0 0.0
        %1356 = vmatpush1.msra.mxu0 0.0
        %1357 = vmatprep.mubr.f32.mxu0 0.0
        %1358 = vmatmul.mubr.f32.gmra.mrb[0].mxu0 %v1291
        %v1359 = vpop.f32.mrb[0].mxu0
        %v1360 = vadd.f32 0.0, %v1359
        %v1361 = vpop.f32.mrb[0].mxu0
        %1362 = vdwg.mxu0
        %v1364 = vsel %vm537, %v444, 0
        %1366 = vmatprep.subr.mxu0 0.0
        %1367 = vmatpush1.msra.mxu0 %v1214
        %1368 = vmatprep.subr.mxu0 0.0
        %1369 = vmatpush1.msra.mxu0 0.0
        %1370 = vmatprep.subr.mxu0 0.0
        %1371 = vmatpush1.msra.mxu0 0.0
        %1372 = vmatprep.subr.mxu0 0.0
        %1373 = vmatpush1.msra.mxu0 0.0
        %1374 = vmatprep.subr.mxu0 0.0
        %1375 = vmatpush1.msra.mxu0 0.0
        %1376 = vmatprep.subr.mxu0 0.0
        %1377 = vmatpush1.msra.mxu0 0.0
        %1378 = vmatprep.subr.mxu0 0.0
        %1379 = vmatpush1.msra.mxu0 0.0
        %1380 = vmatprep.subr.mxu0 0.0
        %1381 = vmatpush1.msra.mxu0 0.0
        %1382 = vmatprep.subr.mxu0 0.0
        %1383 = vmatpush1.msra.mxu0 0.0
        %1384 = vmatprep.subr.mxu0 0.0
        %1385 = vmatpush1.msra.mxu0 0.0
        %1386 = vmatprep.subr.mxu0 0.0
        %1387 = vmatpush1.msra.mxu0 0.0
        %1388 = vmatprep.subr.mxu0 0.0
        %1389 = vmatpush1.msra.mxu0 0.0
        %1390 = vmatprep.subr.mxu0 0.0
        %1391 = vmatpush1.msra.mxu0 0.0
        %1392 = vmatprep.subr.mxu0 0.0
        %1393 = vmatpush1.msra.mxu0 0.0
        %1394 = vmatprep.subr.mxu0 0.0
        %1395 = vmatpush1.msra.mxu0 0.0
        %1396 = vmatprep.subr.mxu0 0.0
        %1397 = vmatpush1.msra.mxu0 0.0
        %1398 = vmatprep.subr.mxu0 0.0
        %1399 = vmatpush1.msra.mxu0 0.0
        %1400 = vmatprep.subr.mxu0 0.0
        %1401 = vmatpush1.msra.mxu0 0.0
        %1402 = vmatprep.subr.mxu0 0.0
        %1403 = vmatpush1.msra.mxu0 0.0
        %1404 = vmatprep.subr.mxu0 0.0
        %1405 = vmatpush1.msra.mxu0 0.0
        %1406 = vmatprep.subr.mxu0 0.0
        %1407 = vmatpush1.msra.mxu0 0.0
        %1408 = vmatprep.subr.mxu0 0.0
        %1409 = vmatpush1.msra.mxu0 0.0
        %1410 = vmatprep.subr.mxu0 0.0
        %1411 = vmatpush1.msra.mxu0 0.0
        %1412 = vmatprep.subr.mxu0 0.0
        %1413 = vmatpush1.msra.mxu0 0.0
        %1414 = vmatprep.subr.mxu0 0.0
        %1415 = vmatpush1.msra.mxu0 0.0
        %1416 = vmatprep.subr.mxu0 0.0
        %1417 = vmatpush1.msra.mxu0 0.0
        %1418 = vmatprep.subr.mxu0 0.0
        %1419 = vmatpush1.msra.mxu0 0.0
        %1420 = vmatprep.subr.mxu0 0.0
        %1421 = vmatpush1.msra.mxu0 0.0
        %1422 = vmatprep.subr.mxu0 0.0
        %1423 = vmatpush1.msra.mxu0 0.0
        %1424 = vmatprep.subr.mxu0 0.0
        %1425 = vmatpush1.msra.mxu0 0.0
        %1426 = vmatprep.subr.mxu0 0.0
        %1427 = vmatpush1.msra.mxu0 0.0
        %1428 = vmatprep.subr.mxu0 0.0
        %1429 = vmatpush1.msra.mxu0 0.0
        %1430 = vmatprep.mubr.f32.mxu0 0.0
        %1431 = vmatmul.mubr.f32.gmra.mrb[0].mxu0 %v1364
        %v1432 = vpop.f32.mrb[0].mxu0
        %v1433 = vadd.f32 %v1360, %v1432
        %v1434 = vpop.f32.mrb[0].mxu0
        %1435 = vdwg.mxu0
        %v1437 = vsel %vm461, %v441, 0
        %1439 = vmatprep.subr.mxu0 0.0
        %1440 = vmatpush1.msra.mxu0 %v1437
        %1441 = vmatprep.subr.mxu0 0.0
        %1442 = vmatpush1.msra.mxu0 0.0
        %1443 = vmatprep.subr.mxu0 0.0
        %1444 = vmatpush1.msra.mxu0 0.0
        %1445 = vmatprep.subr.mxu0 0.0
        %1446 = vmatpush1.msra.mxu0 0.0
        %1447 = vmatprep.subr.mxu0 0.0
        %1448 = vmatpush1.msra.mxu0 0.0
        %1449 = vmatprep.subr.mxu0 0.0
        %1450 = vmatpush1.msra.mxu0 0.0
        %1451 = vmatprep.subr.mxu0 0.0
        %1452 = vmatpush1.msra.mxu0 0.0
        %1453 = vmatprep.subr.mxu0 0.0
        %1454 = vmatpush1.msra.mxu0 0.0
        %1455 = vmatprep.subr.mxu0 0.0
        %1456 = vmatpush1.msra.mxu0 0.0
        %1457 = vmatprep.subr.mxu0 0.0
        %1458 = vmatpush1.msra.mxu0 0.0
        %1459 = vmatprep.subr.mxu0 0.0
        %1460 = vmatpush1.msra.mxu0 0.0
        %1461 = vmatprep.subr.mxu0 0.0
        %1462 = vmatpush1.msra.mxu0 0.0
        %1463 = vmatprep.subr.mxu0 0.0
        %1464 = vmatpush1.msra.mxu0 0.0
        %1465 = vmatprep.subr.mxu0 0.0
        %1466 = vmatpush1.msra.mxu0 0.0
        %1467 = vmatprep.subr.mxu0 0.0
        %1468 = vmatpush1.msra.mxu0 0.0
        %1469 = vmatprep.subr.mxu0 0.0
        %1470 = vmatpush1.msra.mxu0 0.0
        %1471 = vmatprep.subr.mxu0 0.0
        %1472 = vmatpush1.msra.mxu0 0.0
        %1473 = vmatprep.subr.mxu0 0.0
        %1474 = vmatpush1.msra.mxu0 0.0
        %1475 = vmatprep.subr.mxu0 0.0
        %1476 = vmatpush1.msra.mxu0 0.0
        %1477 = vmatprep.subr.mxu0 0.0
        %1478 = vmatpush1.msra.mxu0 0.0
        %1479 = vmatprep.subr.mxu0 0.0
        %1480 = vmatpush1.msra.mxu0 0.0
        %1481 = vmatprep.subr.mxu0 0.0
        %1482 = vmatpush1.msra.mxu0 0.0
        %1483 = vmatprep.subr.mxu0 0.0
        %1484 = vmatpush1.msra.mxu0 0.0
        %1485 = vmatprep.subr.mxu0 0.0
        %1486 = vmatpush1.msra.mxu0 0.0
        %1487 = vmatprep.subr.mxu0 0.0
        %1488 = vmatpush1.msra.mxu0 0.0
        %1489 = vmatprep.subr.mxu0 0.0
        %1490 = vmatpush1.msra.mxu0 0.0
        %1491 = vmatprep.subr.mxu0 0.0
        %1492 = vmatpush1.msra.mxu0 0.0
        %1493 = vmatprep.subr.mxu0 0.0
        %1494 = vmatpush1.msra.mxu0 0.0
        %1495 = vmatprep.subr.mxu0 0.0
        %1496 = vmatpush1.msra.mxu0 0.0
        %1497 = vmatprep.subr.mxu0 0.0
        %1498 = vmatpush1.msra.mxu0 0.0
        %1499 = vmatprep.subr.mxu0 0.0
        %1500 = vmatpush1.msra.mxu0 0.0
        %1501 = vmatprep.subr.mxu0 0.0
        %1502 = vmatpush1.msra.mxu0 0.0
        %1503 = vmatprep.mubr.f32.mxu0 0.0
        %1504 = vmatmul.mubr.f32.gmra.mrb[0].mxu0 %v459
        %v1505 = vpop.f32.mrb[0].mxu0
        %v1506 = vadd.f32 0.0, %v1505
        %v1507 = vpop.f32.mrb[0].mxu0
        %1508 = vdwg.mxu0
        %v1510 = vsel %vm537, %v448, 0
        %1512 = vmatprep.subr.mxu0 0.0
        %1513 = vmatpush1.msra.mxu0 %v1506
        %1514 = vmatprep.subr.mxu0 0.0
        %1515 = vmatpush1.msra.mxu0 0.0
        %1516 = vmatprep.subr.mxu0 0.0
        %1517 = vmatpush1.msra.mxu0 0.0
        %1518 = vmatprep.subr.mxu0 0.0
        %1519 = vmatpush1.msra.mxu0 0.0
        %1520 = vmatprep.subr.mxu0 0.0
        %1521 = vmatpush1.msra.mxu0 0.0
        %1522 = vmatprep.subr.mxu0 0.0
        %1523 = vmatpush1.msra.mxu0 0.0
        %1524 = vmatprep.subr.mxu0 0.0
        %1525 = vmatpush1.msra.mxu0 0.0
        %1526 = vmatprep.subr.mxu0 0.0
        %1527 = vmatpush1.msra.mxu0 0.0
        %1528 = vmatprep.subr.mxu0 0.0
        %1529 = vmatpush1.msra.mxu0 0.0
        %1530 = vmatprep.subr.mxu0 0.0
        %1531 = vmatpush1.msra.mxu0 0.0
        %1532 = vmatprep.subr.mxu0 0.0
        %1533 = vmatpush1.msra.mxu0 0.0
        %1534 = vmatprep.subr.mxu0 0.0
        %1535 = vmatpush1.msra.mxu0 0.0
        %1536 = vmatprep.subr.mxu0 0.0
        %1537 = vmatpush1.msra.mxu0 0.0
        %1538 = vmatprep.subr.mxu0 0.0
        %1539 = vmatpush1.msra.mxu0 0.0
        %1540 = vmatprep.subr.mxu0 0.0
        %1541 = vmatpush1.msra.mxu0 0.0
        %1542 = vmatprep.subr.mxu0 0.0
        %1543 = vmatpush1.msra.mxu0 0.0
        %1544 = vmatprep.subr.mxu0 0.0
        %1545 = vmatpush1.msra.mxu0 0.0
        %1546 = vmatprep.subr.mxu0 0.0
        %1547 = vmatpush1.msra.mxu0 0.0
        %1548 = vmatprep.subr.mxu0 0.0
        %1549 = vmatpush1.msra.mxu0 0.0
        %1550 = vmatprep.subr.mxu0 0.0
        %1551 = vmatpush1.msra.mxu0 0.0
        %1552 = vmatprep.subr.mxu0 0.0
        %1553 = vmatpush1.msra.mxu0 0.0
        %1554 = vmatprep.subr.mxu0 0.0
        %1555 = vmatpush1.msra.mxu0 0.0
        %1556 = vmatprep.subr.mxu0 0.0
        %1557 = vmatpush1.msra.mxu0 0.0
        %1558 = vmatprep.subr.mxu0 0.0
        %1559 = vmatpush1.msra.mxu0 0.0
        %1560 = vmatprep.subr.mxu0 0.0
        %1561 = vmatpush1.msra.mxu0 0.0
        %1562 = vmatprep.subr.mxu0 0.0
        %1563 = vmatpush1.msra.mxu0 0.0
        %1564 = vmatprep.subr.mxu0 0.0
        %1565 = vmatpush1.msra.mxu0 0.0
        %1566 = vmatprep.subr.mxu0 0.0
        %1567 = vmatpush1.msra.mxu0 0.0
        %1568 = vmatprep.subr.mxu0 0.0
        %1569 = vmatpush1.msra.mxu0 0.0
        %1570 = vmatprep.subr.mxu0 0.0
        %1571 = vmatpush1.msra.mxu0 0.0
        %1572 = vmatprep.subr.mxu0 0.0
        %1573 = vmatpush1.msra.mxu0 0.0
        %1574 = vmatprep.subr.mxu0 0.0
        %1575 = vmatpush1.msra.mxu0 0.0
        %1576 = vmatprep.mubr.f32.mxu0 0.0
        %1577 = vmatmul.mubr.f32.gmra.mrb[0].mxu0 %v1510
        %v1578 = vpop.f32.mrb[0].mxu0
        %v1579 = vadd.f32 0.0, %v1578
        %v1580 = vpop.f32.mrb[0].mxu0
        %1581 = vdwg.mxu0
        %v1582 = vadd.f32 %v1433, %v1579
        %v1584 = vsel %vm461, %v443, 0
        %1586 = vmatprep.subr.mxu0 0.0
        %1587 = vmatpush1.msra.mxu0 %v1584
        %1588 = vmatprep.subr.mxu0 0.0
        %1589 = vmatpush1.msra.mxu0 0.0
        %1590 = vmatprep.subr.mxu0 0.0
        %1591 = vmatpush1.msra.mxu0 0.0
        %1592 = vmatprep.subr.mxu0 0.0
        %1593 = vmatpush1.msra.mxu0 0.0
        %1594 = vmatprep.subr.mxu0 0.0
        %1595 = vmatpush1.msra.mxu0 0.0
        %1596 = vmatprep.subr.mxu0 0.0
        %1597 = vmatpush1.msra.mxu0 0.0
        %1598 = vmatprep.subr.mxu0 0.0
        %1599 = vmatpush1.msra.mxu0 0.0
        %1600 = vmatprep.subr.mxu0 0.0
        %1601 = vmatpush1.msra.mxu0 0.0
        %1602 = vmatprep.subr.mxu0 0.0
        %1603 = vmatpush1.msra.mxu0 0.0
        %1604 = vmatprep.subr.mxu0 0.0
        %1605 = vmatpush1.msra.mxu0 0.0
        %1606 = vmatprep.subr.mxu0 0.0
        %1607 = vmatpush1.msra.mxu0 0.0
        %1608 = vmatprep.subr.mxu0 0.0
        %1609 = vmatpush1.msra.mxu0 0.0
        %1610 = vmatprep.subr.mxu0 0.0
        %1611 = vmatpush1.msra.mxu0 0.0
        %1612 = vmatprep.subr.mxu0 0.0
        %1613 = vmatpush1.msra.mxu0 0.0
        %1614 = vmatprep.subr.mxu0 0.0
        %1615 = vmatpush1.msra.mxu0 0.0
        %1616 = vmatprep.subr.mxu0 0.0
        %1617 = vmatpush1.msra.mxu0 0.0
        %1618 = vmatprep.subr.mxu0 0.0
        %1619 = vmatpush1.msra.mxu0 0.0
        %1620 = vmatprep.subr.mxu0 0.0
        %1621 = vmatpush1.msra.mxu0 0.0
        %1622 = vmatprep.subr.mxu0 0.0
        %1623 = vmatpush1.msra.mxu0 0.0
        %1624 = vmatprep.subr.mxu0 0.0
        %1625 = vmatpush1.msra.mxu0 0.0
        %1626 = vmatprep.subr.mxu0 0.0
        %1627 = vmatpush1.msra.mxu0 0.0
        %1628 = vmatprep.subr.mxu0 0.0
        %1629 = vmatpush1.msra.mxu0 0.0
        %1630 = vmatprep.subr.mxu0 0.0
        %1631 = vmatpush1.msra.mxu0 0.0
        %1632 = vmatprep.subr.mxu0 0.0
        %1633 = vmatpush1.msra.mxu0 0.0
        %1634 = vmatprep.subr.mxu0 0.0
        %1635 = vmatpush1.msra.mxu0 0.0
        %1636 = vmatprep.subr.mxu0 0.0
        %1637 = vmatpush1.msra.mxu0 0.0
        %1638 = vmatprep.subr.mxu0 0.0
        %1639 = vmatpush1.msra.mxu0 0.0
        %1640 = vmatprep.subr.mxu0 0.0
        %1641 = vmatpush1.msra.mxu0 0.0
        %1642 = vmatprep.subr.mxu0 0.0
        %1643 = vmatpush1.msra.mxu0 0.0
        %1644 = vmatprep.subr.mxu0 0.0
        %1645 = vmatpush1.msra.mxu0 0.0
        %1646 = vmatprep.subr.mxu0 0.0
        %1647 = vmatpush1.msra.mxu0 0.0
        %1648 = vmatprep.subr.mxu0 0.0
        %1649 = vmatpush1.msra.mxu0 0.0
        %1650 = vmatprep.mubr.f32.mxu0 0.0
        %1651 = vmatmul.mubr.f32.gmra.mrb[0].mxu0 %v459
        %v1652 = vpop.f32.mrb[0].mxu0
        %v1653 = vadd.f32 0.0, %v1652
        %v1654 = vpop.f32.mrb[0].mxu0
        %1655 = vdwg.mxu0
        %v1657 = vsel %vm537, %v450, 0
        %1659 = vmatprep.subr.mxu0 0.0
        %1660 = vmatpush1.msra.mxu0 %v1653
        %1661 = vmatprep.subr.mxu0 0.0
        %1662 = vmatpush1.msra.mxu0 0.0
        %1663 = vmatprep.subr.mxu0 0.0
        %1664 = vmatpush1.msra.mxu0 0.0
        %1665 = vmatprep.subr.mxu0 0.0
        %1666 = vmatpush1.msra.mxu0 0.0
        %1667 = vmatprep.subr.mxu0 0.0
        %1668 = vmatpush1.msra.mxu0 0.0
        %1669 = vmatprep.subr.mxu0 0.0
        %1670 = vmatpush1.msra.mxu0 0.0
        %1671 = vmatprep.subr.mxu0 0.0
        %1672 = vmatpush1.msra.mxu0 0.0
        %1673 = vmatprep.subr.mxu0 0.0
        %1674 = vmatpush1.msra.mxu0 0.0
        %1675 = vmatprep.subr.mxu0 0.0
        %1676 = vmatpush1.msra.mxu0 0.0
        %1677 = vmatprep.subr.mxu0 0.0
        %1678 = vmatpush1.msra.mxu0 0.0
        %1679 = vmatprep.subr.mxu0 0.0
        %1680 = vmatpush1.msra.mxu0 0.0
        %1681 = vmatprep.subr.mxu0 0.0
        %1682 = vmatpush1.msra.mxu0 0.0
        %1683 = vmatprep.subr.mxu0 0.0
        %1684 = vmatpush1.msra.mxu0 0.0
        %1685 = vmatprep.subr.mxu0 0.0
        %1686 = vmatpush1.msra.mxu0 0.0
        %1687 = vmatprep.subr.mxu0 0.0
        %1688 = vmatpush1.msra.mxu0 0.0
        %1689 = vmatprep.subr.mxu0 0.0
        %1690 = vmatpush1.msra.mxu0 0.0
        %1691 = vmatprep.subr.mxu0 0.0
        %1692 = vmatpush1.msra.mxu0 0.0
        %1693 = vmatprep.subr.mxu0 0.0
        %1694 = vmatpush1.msra.mxu0 0.0
        %1695 = vmatprep.subr.mxu0 0.0
        %1696 = vmatpush1.msra.mxu0 0.0
        %1697 = vmatprep.subr.mxu0 0.0
        %1698 = vmatpush1.msra.mxu0 0.0
        %1699 = vmatprep.subr.mxu0 0.0
        %1700 = vmatpush1.msra.mxu0 0.0
        %1701 = vmatprep.subr.mxu0 0.0
        %1702 = vmatpush1.msra.mxu0 0.0
        %1703 = vmatprep.subr.mxu0 0.0
        %1704 = vmatpush1.msra.mxu0 0.0
        %1705 = vmatprep.subr.mxu0 0.0
        %1706 = vmatpush1.msra.mxu0 0.0
        %1707 = vmatprep.subr.mxu0 0.0
        %1708 = vmatpush1.msra.mxu0 0.0
        %1709 = vmatprep.subr.mxu0 0.0
        %1710 = vmatpush1.msra.mxu0 0.0
        %1711 = vmatprep.subr.mxu0 0.0
        %1712 = vmatpush1.msra.mxu0 0.0
        %1713 = vmatprep.subr.mxu0 0.0
        %1714 = vmatpush1.msra.mxu0 0.0
        %1715 = vmatprep.subr.mxu0 0.0
        %1716 = vmatpush1.msra.mxu0 0.0
        %1717 = vmatprep.subr.mxu0 0.0
        %1718 = vmatpush1.msra.mxu0 0.0
        %1719 = vmatprep.subr.mxu0 0.0
        %1720 = vmatpush1.msra.mxu0 0.0
        %1721 = vmatprep.subr.mxu0 0.0
        %1722 = vmatpush1.msra.mxu0 0.0
        %1723 = vmatprep.mubr.f32.mxu0 0.0
        %1724 = vmatmul.mubr.f32.gmra.mrb[0].mxu0 %v1657
        %v1725 = vpop.f32.mrb[0].mxu0
        %v1726 = vadd.f32 0.0, %v1725
        %v1727 = vpop.f32.mrb[0].mxu0
        %1728 = vdwg.mxu0
        %v1729 = vadd.f32 %v1582, %v1726
        %v1731 = vsel %vm457, %v1729, 0
        %v1734 = vsel %vm461, %v434, 0
        %1736 = vmatprep.subr.mxu0 0.0
        %1737 = vmatpush1.msra.mxu0 %v1734
        %1738 = vmatprep.subr.mxu0 0.0
        %1739 = vmatpush1.msra.mxu0 0.0
        %1740 = vmatprep.subr.mxu0 0.0
        %1741 = vmatpush1.msra.mxu0 0.0
        %1742 = vmatprep.subr.mxu0 0.0
        %1743 = vmatpush1.msra.mxu0 0.0
        %1744 = vmatprep.subr.mxu0 0.0
        %1745 = vmatpush1.msra.mxu0 0.0
        %1746 = vmatprep.subr.mxu0 0.0
        %1747 = vmatpush1.msra.mxu0 0.0
        %1748 = vmatprep.subr.mxu0 0.0
        %1749 = vmatpush1.msra.mxu0 0.0
        %1750 = vmatprep.subr.mxu0 0.0
        %1751 = vmatpush1.msra.mxu0 0.0
        %1752 = vmatprep.subr.mxu0 0.0
        %1753 = vmatpush1.msra.mxu0 0.0
        %1754 = vmatprep.subr.mxu0 0.0
        %1755 = vmatpush1.msra.mxu0 0.0
        %1756 = vmatprep.subr.mxu0 0.0
        %1757 = vmatpush1.msra.mxu0 0.0
        %1758 = vmatprep.subr.mxu0 0.0
        %1759 = vmatpush1.msra.mxu0 0.0
        %1760 = vmatprep.subr.mxu0 0.0
        %1761 = vmatpush1.msra.mxu0 0.0
        %1762 = vmatprep.subr.mxu0 0.0
        %1763 = vmatpush1.msra.mxu0 0.0
        %1764 = vmatprep.subr.mxu0 0.0
        %1765 = vmatpush1.msra.mxu0 0.0
        %1766 = vmatprep.subr.mxu0 0.0
        %1767 = vmatpush1.msra.mxu0 0.0
        %1768 = vmatprep.subr.mxu0 0.0
        %1769 = vmatpush1.msra.mxu0 0.0
        %1770 = vmatprep.subr.mxu0 0.0
        %1771 = vmatpush1.msra.mxu0 0.0
        %1772 = vmatprep.subr.mxu0 0.0
        %1773 = vmatpush1.msra.mxu0 0.0
        %1774 = vmatprep.subr.mxu0 0.0
        %1775 = vmatpush1.msra.mxu0 0.0
        %1776 = vmatprep.subr.mxu0 0.0
        %1777 = vmatpush1.msra.mxu0 0.0
        %1778 = vmatprep.subr.mxu0 0.0
        %1779 = vmatpush1.msra.mxu0 0.0
        %1780 = vmatprep.subr.mxu0 0.0
        %1781 = vmatpush1.msra.mxu0 0.0
        %1782 = vmatprep.subr.mxu0 0.0
        %1783 = vmatpush1.msra.mxu0 0.0
        %1784 = vmatprep.subr.mxu0 0.0
        %1785 = vmatpush1.msra.mxu0 0.0
        %1786 = vmatprep.subr.mxu0 0.0
        %1787 = vmatpush1.msra.mxu0 0.0
        %1788 = vmatprep.subr.mxu0 0.0
        %1789 = vmatpush1.msra.mxu0 0.0
        %1790 = vmatprep.subr.mxu0 0.0
        %1791 = vmatpush1.msra.mxu0 0.0
        %1792 = vmatprep.subr.mxu0 0.0
        %1793 = vmatpush1.msra.mxu0 0.0
        %1794 = vmatprep.subr.mxu0 0.0
        %1795 = vmatpush1.msra.mxu0 0.0
        %1796 = vmatprep.subr.mxu0 0.0
        %1797 = vmatpush1.msra.mxu0 0.0
        %1798 = vmatprep.subr.mxu0 0.0
        %1799 = vmatpush1.msra.mxu0 0.0
        %1800 = vmatprep.mubr.f32.mxu0 0.0
        %1801 = vmatmul.mubr.f32.gmra.mrb[0].mxu0 %v1731
        %v1802 = vpop.f32.mrb[0].mxu0
        %v1803 = vadd.f32 0.0, %v1802
        %v1804 = vpop.f32.mrb[0].mxu0
        %1805 = vdwg.mxu0
        %v1806 = vadd.f32 %v1143, %v1803
        %vm1807 = vcmask 261120
        %v1809 = vsel %vm1807, 0.0, 0
        %1811 = vmatprep.subr.mxu0 0.0
        %1812 = vmatpush1.msra.mxu0 %v452
        %1813 = vmatprep.subr.mxu0 0.0
        %1814 = vmatpush1.msra.mxu0 %v453
        %1815 = vmatprep.subr.mxu0 0.0
        %1816 = vmatpush1.msra.mxu0 %v454
        %1817 = vmatprep.subr.mxu0 0.0
        %1818 = vmatpush1.msra.mxu0 %v455
        %1819 = vmatprep.subr.mxu0 0.0
        %1820 = vmatpush1.msra.mxu0 0.0
        %1821 = vmatprep.subr.mxu0 0.0
        %1822 = vmatpush1.msra.mxu0 0.0
        %1823 = vmatprep.subr.mxu0 0.0
        %1824 = vmatpush1.msra.mxu0 0.0
        %1825 = vmatprep.subr.mxu0 0.0
        %1826 = vmatpush1.msra.mxu0 0.0
        %1827 = vmatprep.subr.mxu0 0.0
        %1828 = vmatpush1.msra.mxu0 0.0
        %1829 = vmatprep.subr.mxu0 0.0
        %1830 = vmatpush1.msra.mxu0 0.0
        %1831 = vmatprep.subr.mxu0 0.0
        %1832 = vmatpush1.msra.mxu0 0.0
        %1833 = vmatprep.subr.mxu0 0.0
        %1834 = vmatpush1.msra.mxu0 0.0
        %1835 = vmatprep.subr.mxu0 0.0
        %1836 = vmatpush1.msra.mxu0 0.0
        %1837 = vmatprep.subr.mxu0 0.0
        %1838 = vmatpush1.msra.mxu0 0.0
        %1839 = vmatprep.subr.mxu0 0.0
        %1840 = vmatpush1.msra.mxu0 0.0
        %1841 = vmatprep.subr.mxu0 0.0
        %1842 = vmatpush1.msra.mxu0 0.0
        %1843 = vmatprep.subr.mxu0 0.0
        %1844 = vmatpush1.msra.mxu0 0.0
        %1845 = vmatprep.subr.mxu0 0.0
        %1846 = vmatpush1.msra.mxu0 0.0
        %1847 = vmatprep.subr.mxu0 0.0
        %1848 = vmatpush1.msra.mxu0 0.0
        %1849 = vmatprep.subr.mxu0 0.0
        %1850 = vmatpush1.msra.mxu0 0.0
        %1851 = vmatprep.subr.mxu0 0.0
        %1852 = vmatpush1.msra.mxu0 0.0
        %1853 = vmatprep.subr.mxu0 0.0
        %1854 = vmatpush1.msra.mxu0 0.0
        %1855 = vmatprep.subr.mxu0 0.0
        %1856 = vmatpush1.msra.mxu0 0.0
        %1857 = vmatprep.subr.mxu0 0.0
        %1858 = vmatpush1.msra.mxu0 0.0
        %1859 = vmatprep.subr.mxu0 0.0
        %1860 = vmatpush1.msra.mxu0 0.0
        %1861 = vmatprep.subr.mxu0 0.0
        %1862 = vmatpush1.msra.mxu0 0.0
        %1863 = vmatprep.subr.mxu0 0.0
        %1864 = vmatpush1.msra.mxu0 0.0
        %1865 = vmatprep.subr.mxu0 0.0
        %1866 = vmatpush1.msra.mxu0 0.0
        %1867 = vmatprep.subr.mxu0 0.0
        %1868 = vmatpush1.msra.mxu0 0.0
        %1869 = vmatprep.subr.mxu0 0.0
        %1870 = vmatpush1.msra.mxu0 0.0
        %1871 = vmatprep.subr.mxu0 0.0
        %1872 = vmatpush1.msra.mxu0 0.0
        %1873 = vmatprep.subr.mxu0 0.0
        %1874 = vmatpush1.msra.mxu0 0.0
        %1875 = vmatprep.mubr.f32.mxu0 0.0
        %1876 = vmatmul.mubr.f32.gmra.mrb[0].mxu0 %v1809
        %v1877 = vpop.f32.mrb[0].mxu0
        %v1878 = vadd.f32 0.0, %v1877
        %v1879 = vpop.f32.mrb[0].mxu0
        %1880 = vdwg.mxu0
        %v1881 = vadd.f32 %v1806, %v1878
        %v1882 = vxor.u32 %v1881, 2147483648
        %v1883 = vmul.f32 %v1882, 1.442695
        %v1884 = vpow.pop %v1883
        %v1885 = vadd.f32 %v1884, 1.0
        %v1886 = vrcp.pop %v1885
        %v1887 = vmul.f32 1.0, %v1886
        %v1888 = vtanh.pop %v1881
        %v1889 = vmul.f32 %v1887, 0.0
        %1891 = vrot.lane.b32.xlu0 %v1888, 64
        %v1892 = vpop.permute.xlu0 %1891
        %v1894 = vmul.f32 %v1887, %v1892
        %1896 = vrot.lane.b32.xlu0 %v1894, 32
        %v1897 = vpop.permute.xlu0 %1896
        %v1899 = vadd.f32 %v1889, %v1897
        %v1900 = vtanh.pop %v1899
        %1902 = vrot.lane.b32.xlu0 %v1900, 64
        %v1903 = vpop.permute.xlu0 %1902
        %v1905 = vmul.f32 %v1887, %v1903
        %1907 = vrot.lane.b32.xlu0 %v1905, 32
        %v1908 = vpop.permute.xlu0 %1907
        %v1909 = vsel %vm1807, %v1908, 0
        %1911 = vmatprep.subr.mxu0 0.0
        %1912 = vmatpush1.msra.mxu0 %v452
        %1913 = vmatprep.subr.mxu0 0.0
        %1914 = vmatpush1.msra.mxu0 %v453
        %1915 = vmatprep.subr.mxu0 0.0
        %1916 = vmatpush1.msra.mxu0 %v454
        %1917 = vmatprep.subr.mxu0 0.0
        %1918 = vmatpush1.msra.mxu0 %v455
        %1919 = vmatprep.subr.mxu0 0.0
        %1920 = vmatpush1.msra.mxu0 0.0
        %1921 = vmatprep.subr.mxu0 0.0
        %1922 = vmatpush1.msra.mxu0 0.0
        %1923 = vmatprep.subr.mxu0 0.0
        %1924 = vmatpush1.msra.mxu0 0.0
        %1925 = vmatprep.subr.mxu0 0.0
        %1926 = vmatpush1.msra.mxu0 0.0
        %1927 = vmatprep.subr.mxu0 0.0
        %1928 = vmatpush1.msra.mxu0 0.0
        %1929 = vmatprep.subr.mxu0 0.0
        %1930 = vmatpush1.msra.mxu0 0.0
        %1931 = vmatprep.subr.mxu0 0.0
        %1932 = vmatpush1.msra.mxu0 0.0
        %1933 = vmatprep.subr.mxu0 0.0
        %1934 = vmatpush1.msra.mxu0 0.0
        %1935 = vmatprep.subr.mxu0 0.0
        %1936 = vmatpush1.msra.mxu0 0.0
        %1937 = vmatprep.subr.mxu0 0.0
        %1938 = vmatpush1.msra.mxu0 0.0
        %1939 = vmatprep.subr.mxu0 0.0
        %1940 = vmatpush1.msra.mxu0 0.0
        %1941 = vmatprep.subr.mxu0 0.0
        %1942 = vmatpush1.msra.mxu0 0.0
        %1943 = vmatprep.subr.mxu0 0.0
        %1944 = vmatpush1.msra.mxu0 0.0
        %1945 = vmatprep.subr.mxu0 0.0
        %1946 = vmatpush1.msra.mxu0 0.0
        %1947 = vmatprep.subr.mxu0 0.0
        %1948 = vmatpush1.msra.mxu0 0.0
        %1949 = vmatprep.subr.mxu0 0.0
        %1950 = vmatpush1.msra.mxu0 0.0
        %1951 = vmatprep.subr.mxu0 0.0
        %1952 = vmatpush1.msra.mxu0 0.0
        %1953 = vmatprep.subr.mxu0 0.0
        %1954 = vmatpush1.msra.mxu0 0.0
        %1955 = vmatprep.subr.mxu0 0.0
        %1956 = vmatpush1.msra.mxu0 0.0
        %1957 = vmatprep.subr.mxu0 0.0
        %1958 = vmatpush1.msra.mxu0 0.0
        %1959 = vmatprep.subr.mxu0 0.0
        %1960 = vmatpush1.msra.mxu0 0.0
        %1961 = vmatprep.subr.mxu0 0.0
        %1962 = vmatpush1.msra.mxu0 0.0
        %1963 = vmatprep.subr.mxu0 0.0
        %1964 = vmatpush1.msra.mxu0 0.0
        %1965 = vmatprep.subr.mxu0 0.0
        %1966 = vmatpush1.msra.mxu0 0.0
        %1967 = vmatprep.subr.mxu0 0.0
        %1968 = vmatpush1.msra.mxu0 0.0
        %1969 = vmatprep.subr.mxu0 0.0
        %1970 = vmatpush1.msra.mxu0 0.0
        %1971 = vmatprep.subr.mxu0 0.0
        %1972 = vmatpush1.msra.mxu0 0.0
        %1973 = vmatprep.subr.mxu0 0.0
        %1974 = vmatpush1.msra.mxu0 0.0
        %1975 = vmatprep.mubr.f32.mxu0 0.0
        %1976 = vmatmul.mubr.f32.gmra.mrb[0].mxu0 %v1909
        %v1977 = vpop.f32.mrb[0].mxu0
        %v1978 = vadd.f32 0.0, %v1977
        %v1979 = vpop.f32.mrb[0].mxu0
        %1980 = vdwg.mxu0
        %v1982 = vrot.slane %v1978, 7
        %v1984 = vadd.f32 %v1806, %v1982
        %v1985 = vxor.u32 %v1984, 2147483648
        %v1986 = vmul.f32 %v1985, 1.442695
        %v1987 = vpow.pop %v1986
        %v1988 = vadd.f32 %v1987, 1.0
        %v1989 = vrcp.pop %v1988
        %v1990 = vmul.f32 1.0, %v1989
        %v1991 = vtanh.pop %v1984
        %v1993 = vrot.slane %v1899, 7
        %v1995 = vmul.f32 %v1990, %v1993
        %1997 = vrot.lane.b32.xlu0 %v1991, 64
        %v1998 = vpop.permute.xlu0 %1997
        %v2000 = vmul.f32 %v1990, %v1998
        %2002 = vrot.lane.b32.xlu0 %v2000, 32
        %v2003 = vpop.permute.xlu0 %2002
        %v2005 = vadd.f32 %v1995, %v2003
        %v2006 = vtanh.pop %v2005
        %2008 = vrot.lane.b32.xlu0 %v2006, 64
        %v2009 = vpop.permute.xlu0 %2008
        %v2011 = vmul.f32 %v1990, %v2009
        %v2013 = vrot.slane %v2011, 1
        %2014 = vrot.lane.b32.xlu0 %v2013, 32
        %v2015 = vpop.permute.xlu0 %2014
        %v2016 = vsel %vm1807, %v2015, 0
        %2018 = vmatprep.subr.mxu0 0.0
        %2019 = vmatpush1.msra.mxu0 %v452
        %2020 = vmatprep.subr.mxu0 0.0
        %2021 = vmatpush1.msra.mxu0 %v453
        %2022 = vmatprep.subr.mxu0 0.0
        %2023 = vmatpush1.msra.mxu0 %v454
        %2024 = vmatprep.subr.mxu0 0.0
        %2025 = vmatpush1.msra.mxu0 %v455
        %2026 = vmatprep.subr.mxu0 0.0
        %2027 = vmatpush1.msra.mxu0 0.0
        %2028 = vmatprep.subr.mxu0 0.0
        %2029 = vmatpush1.msra.mxu0 0.0
        %2030 = vmatprep.subr.mxu0 0.0
        %2031 = vmatpush1.msra.mxu0 0.0
        %2032 = vmatprep.subr.mxu0 0.0
        %2033 = vmatpush1.msra.mxu0 0.0
        %2034 = vmatprep.subr.mxu0 0.0
        %2035 = vmatpush1.msra.mxu0 0.0
        %2036 = vmatprep.subr.mxu0 0.0
        %2037 = vmatpush1.msra.mxu0 0.0
        %2038 = vmatprep.subr.mxu0 0.0
        %2039 = vmatpush1.msra.mxu0 0.0
        %2040 = vmatprep.subr.mxu0 0.0
        %2041 = vmatpush1.msra.mxu0 0.0
        %2042 = vmatprep.subr.mxu0 0.0
        %2043 = vmatpush1.msra.mxu0 0.0
        %2044 = vmatprep.subr.mxu0 0.0
        %2045 = vmatpush1.msra.mxu0 0.0
        %2046 = vmatprep.subr.mxu0 0.0
        %2047 = vmatpush1.msra.mxu0 0.0
        %2048 = vmatprep.subr.mxu0 0.0
        %2049 = vmatpush1.msra.mxu0 0.0
        %2050 = vmatprep.subr.mxu0 0.0
        %2051 = vmatpush1.msra.mxu0 0.0
        %2052 = vmatprep.subr.mxu0 0.0
        %2053 = vmatpush1.msra.mxu0 0.0
        %2054 = vmatprep.subr.mxu0 0.0
        %2055 = vmatpush1.msra.mxu0 0.0
        %2056 = vmatprep.subr.mxu0 0.0
        %2057 = vmatpush1.msra.mxu0 0.0
        %2058 = vmatprep.subr.mxu0 0.0
        %2059 = vmatpush1.msra.mxu0 0.0
        %2060 = vmatprep.subr.mxu0 0.0
        %2061 = vmatpush1.msra.mxu0 0.0
        %2062 = vmatprep.subr.mxu0 0.0
        %2063 = vmatpush1.msra.mxu0 0.0
        %2064 = vmatprep.subr.mxu0 0.0
        %2065 = vmatpush1.msra.mxu0 0.0
        %2066 = vmatprep.subr.mxu0 0.0
        %2067 = vmatpush1.msra.mxu0 0.0
        %2068 = vmatprep.subr.mxu0 0.0
        %2069 = vmatpush1.msra.mxu0 0.0
        %2070 = vmatprep.subr.mxu0 0.0
        %2071 = vmatpush1.msra.mxu0 0.0
        %2072 = vmatprep.subr.mxu0 0.0
        %2073 = vmatpush1.msra.mxu0 0.0
        %2074 = vmatprep.subr.mxu0 0.0
        %2075 = vmatpush1.msra.mxu0 0.0
        %2076 = vmatprep.subr.mxu0 0.0
        %2077 = vmatpush1.msra.mxu0 0.0
        %2078 = vmatprep.subr.mxu0 0.0
        %2079 = vmatpush1.msra.mxu0 0.0
        %2080 = vmatprep.subr.mxu0 0.0
        %2081 = vmatpush1.msra.mxu0 0.0
        %2082 = vmatprep.mubr.f32.mxu0 0.0
        %2083 = vmatmul.mubr.f32.gmra.mrb[0].mxu0 %v2016
        %v2084 = vpop.f32.mrb[0].mxu0
        %v2085 = vadd.f32 0.0, %v2084
        %v2086 = vpop.f32.mrb[0].mxu0
        %2087 = vdwg.mxu0
        %v2089 = vrot.slane %v2085, 6
        %v2091 = vadd.f32 %v1806, %v2089
        %v2092 = vxor.u32 %v2091, 2147483648
        %v2093 = vmul.f32 %v2092, 1.442695
        %v2094 = vpow.pop %v2093
        %v2095 = vadd.f32 %v2094, 1.0
        %v2096 = vrcp.pop %v2095
        %v2097 = vmul.f32 1.0, %v2096
        %v2098 = vtanh.pop %v2091
        %v2100 = vrot.slane %v2005, 7
        %v2102 = vmul.f32 %v2097, %v2100
        %2104 = vrot.lane.b32.xlu0 %v2098, 64
        %v2105 = vpop.permute.xlu0 %2104
        %v2107 = vmul.f32 %v2097, %v2105
        %2109 = vrot.lane.b32.xlu0 %v2107, 32
        %v2110 = vpop.permute.xlu0 %2109
        %v2112 = vadd.f32 %v2102, %v2110
        %v2113 = vtanh.pop %v2112
        %2115 = vrot.lane.b32.xlu0 %v2113, 64
        %v2116 = vpop.permute.xlu0 %2115
        %v2118 = vmul.f32 %v2097, %v2116
        %v2120 = vrot.slane %v2118, 2
        %2121 = vrot.lane.b32.xlu0 %v2120, 32
        %v2122 = vpop.permute.xlu0 %2121
        %v2123 = vsel %vm1807, %v2122, 0
        %2125 = vmatprep.subr.mxu0 0.0
        %2126 = vmatpush1.msra.mxu0 %v452
        %2127 = vmatprep.subr.mxu0 0.0
        %2128 = vmatpush1.msra.mxu0 %v453
        %2129 = vmatprep.subr.mxu0 0.0
        %2130 = vmatpush1.msra.mxu0 %v454
        %2131 = vmatprep.subr.mxu0 0.0
        %2132 = vmatpush1.msra.mxu0 %v455
        %2133 = vmatprep.subr.mxu0 0.0
        %2134 = vmatpush1.msra.mxu0 0.0
        %2135 = vmatprep.subr.mxu0 0.0
        %2136 = vmatpush1.msra.mxu0 0.0
        %2137 = vmatprep.subr.mxu0 0.0
        %2138 = vmatpush1.msra.mxu0 0.0
        %2139 = vmatprep.subr.mxu0 0.0
        %2140 = vmatpush1.msra.mxu0 0.0
        %2141 = vmatprep.subr.mxu0 0.0
        %2142 = vmatpush1.msra.mxu0 0.0
        %2143 = vmatprep.subr.mxu0 0.0
        %2144 = vmatpush1.msra.mxu0 0.0
        %2145 = vmatprep.subr.mxu0 0.0
        %2146 = vmatpush1.msra.mxu0 0.0
        %2147 = vmatprep.subr.mxu0 0.0
        %2148 = vmatpush1.msra.mxu0 0.0
        %2149 = vmatprep.subr.mxu0 0.0
        %2150 = vmatpush1.msra.mxu0 0.0
        %2151 = vmatprep.subr.mxu0 0.0
        %2152 = vmatpush1.msra.mxu0 0.0
        %2153 = vmatprep.subr.mxu0 0.0
        %2154 = vmatpush1.msra.mxu0 0.0
        %2155 = vmatprep.subr.mxu0 0.0
        %2156 = vmatpush1.msra.mxu0 0.0
        %2157 = vmatprep.subr.mxu0 0.0
        %2158 = vmatpush1.msra.mxu0 0.0
        %2159 = vmatprep.subr.mxu0 0.0
        %2160 = vmatpush1.msra.mxu0 0.0
        %2161 = vmatprep.subr.mxu0 0.0
        %2162 = vmatpush1.msra.mxu0 0.0
        %2163 = vmatprep.subr.mxu0 0.0
        %2164 = vmatpush1.msra.mxu0 0.0
        %2165 = vmatprep.subr.mxu0 0.0
        %2166 = vmatpush1.msra.mxu0 0.0
        %2167 = vmatprep.subr.mxu0 0.0
        %2168 = vmatpush1.msra.mxu0 0.0
        %2169 = vmatprep.subr.mxu0 0.0
        %2170 = vmatpush1.msra.mxu0 0.0
        %2171 = vmatprep.subr.mxu0 0.0
        %2172 = vmatpush1.msra.mxu0 0.0
        %2173 = vmatprep.subr.mxu0 0.0
        %2174 = vmatpush1.msra.mxu0 0.0
        %2175 = vmatprep.subr.mxu0 0.0
        %2176 = vmatpush1.msra.mxu0 0.0
        %2177 = vmatprep.subr.mxu0 0.0
        %2178 = vmatpush1.msra.mxu0 0.0
        %2179 = vmatprep.subr.mxu0 0.0
        %2180 = vmatpush1.msra.mxu0 0.0
        %2181 = vmatprep.subr.mxu0 0.0
        %2182 = vmatpush1.msra.mxu0 0.0
        %2183 = vmatprep.subr.mxu0 0.0
        %2184 = vmatpush1.msra.mxu0 0.0
        %2185 = vmatprep.subr.mxu0 0.0
        %2186 = vmatpush1.msra.mxu0 0.0
        %2187 = vmatprep.subr.mxu0 0.0
        %2188 = vmatpush1.msra.mxu0 0.0
        %2189 = vmatprep.mubr.f32.mxu0 0.0
        %2190 = vmatmul.mubr.f32.gmra.mrb[0].mxu0 %v2123
        %v2191 = vpop.f32.mrb[0].mxu0
        %v2192 = vadd.f32 0.0, %v2191
        %v2193 = vpop.f32.mrb[0].mxu0
        %2194 = vdwg.mxu0
        %v2196 = vrot.slane %v2192, 5
        %v2198 = vadd.f32 %v1806, %v2196
        %v2199 = vxor.u32 %v2198, 2147483648
        %v2200 = vmul.f32 %v2199, 1.442695
        %v2201 = vpow.pop %v2200
        %v2202 = vadd.f32 %v2201, 1.0
        %v2203 = vrcp.pop %v2202
        %v2204 = vmul.f32 1.0, %v2203
        %v2205 = vtanh.pop %v2198
        %v2207 = vrot.slane %v2112, 7
        %v2209 = vmul.f32 %v2204, %v2207
        %2211 = vrot.lane.b32.xlu0 %v2205, 64
        %v2212 = vpop.permute.xlu0 %2211
        %v2214 = vmul.f32 %v2204, %v2212
        %2216 = vrot.lane.b32.xlu0 %v2214, 32
        %v2217 = vpop.permute.xlu0 %2216
        %v2219 = vadd.f32 %v2209, %v2217
        %v2220 = vtanh.pop %v2219
        %2222 = vrot.lane.b32.xlu0 %v2220, 64
        %v2223 = vpop.permute.xlu0 %2222
        %v2225 = vmul.f32 %v2204, %v2223
        %v2227 = vrot.slane %v2225, 3
        %2228 = vrot.lane.b32.xlu0 %v2227, 32
        %v2229 = vpop.permute.xlu0 %2228
        %v2230 = vsel %vm1807, %v2229, 0
        %2232 = vmatprep.subr.mxu0 0.0
        %2233 = vmatpush1.msra.mxu0 %v452
        %2234 = vmatprep.subr.mxu0 0.0
        %2235 = vmatpush1.msra.mxu0 %v453
        %2236 = vmatprep.subr.mxu0 0.0
        %2237 = vmatpush1.msra.mxu0 %v454
        %2238 = vmatprep.subr.mxu0 0.0
        %2239 = vmatpush1.msra.mxu0 %v455
        %2240 = vmatprep.subr.mxu0 0.0
        %2241 = vmatpush1.msra.mxu0 0.0
        %2242 = vmatprep.subr.mxu0 0.0
        %2243 = vmatpush1.msra.mxu0 0.0
        %2244 = vmatprep.subr.mxu0 0.0
        %2245 = vmatpush1.msra.mxu0 0.0
        %2246 = vmatprep.subr.mxu0 0.0
        %2247 = vmatpush1.msra.mxu0 0.0
        %2248 = vmatprep.subr.mxu0 0.0
        %2249 = vmatpush1.msra.mxu0 0.0
        %2250 = vmatprep.subr.mxu0 0.0
        %2251 = vmatpush1.msra.mxu0 0.0
        %2252 = vmatprep.subr.mxu0 0.0
        %2253 = vmatpush1.msra.mxu0 0.0
        %2254 = vmatprep.subr.mxu0 0.0
        %2255 = vmatpush1.msra.mxu0 0.0
        %2256 = vmatprep.subr.mxu0 0.0
        %2257 = vmatpush1.msra.mxu0 0.0
        %2258 = vmatprep.subr.mxu0 0.0
        %2259 = vmatpush1.msra.mxu0 0.0
        %2260 = vmatprep.subr.mxu0 0.0
        %2261 = vmatpush1.msra.mxu0 0.0
        %2262 = vmatprep.subr.mxu0 0.0
        %2263 = vmatpush1.msra.mxu0 0.0
        %2264 = vmatprep.subr.mxu0 0.0
        %2265 = vmatpush1.msra.mxu0 0.0
        %2266 = vmatprep.subr.mxu0 0.0
        %2267 = vmatpush1.msra.mxu0 0.0
        %2268 = vmatprep.subr.mxu0 0.0
        %2269 = vmatpush1.msra.mxu0 0.0
        %2270 = vmatprep.subr.mxu0 0.0
        %2271 = vmatpush1.msra.mxu0 0.0
        %2272 = vmatprep.subr.mxu0 0.0
        %2273 = vmatpush1.msra.mxu0 0.0
        %2274 = vmatprep.subr.mxu0 0.0
        %2275 = vmatpush1.msra.mxu0 0.0
        %2276 = vmatprep.subr.mxu0 0.0
        %2277 = vmatpush1.msra.mxu0 0.0
        %2278 = vmatprep.subr.mxu0 0.0
        %2279 = vmatpush1.msra.mxu0 0.0
        %2280 = vmatprep.subr.mxu0 0.0
        %2281 = vmatpush1.msra.mxu0 0.0
        %2282 = vmatprep.subr.mxu0 0.0
        %2283 = vmatpush1.msra.mxu0 0.0
        %2284 = vmatprep.subr.mxu0 0.0
        %2285 = vmatpush1.msra.mxu0 0.0
        %2286 = vmatprep.subr.mxu0 0.0
        %2287 = vmatpush1.msra.mxu0 0.0
        %2288 = vmatprep.subr.mxu0 0.0
        %2289 = vmatpush1.msra.mxu0 0.0
        %2290 = vmatprep.subr.mxu0 0.0
        %2291 = vmatpush1.msra.mxu0 0.0
        %2292 = vmatprep.subr.mxu0 0.0
        %2293 = vmatpush1.msra.mxu0 0.0
        %2294 = vmatprep.subr.mxu0 0.0
        %2295 = vmatpush1.msra.mxu0 0.0
        %2296 = vmatprep.mubr.f32.mxu0 0.0
        %2297 = vmatmul.mubr.f32.gmra.mrb[0].mxu0 %v2230
        %v2298 = vpop.f32.mrb[0].mxu0
        %v2299 = vadd.f32 0.0, %v2298
        %v2300 = vpop.f32.mrb[0].mxu0
        %2301 = vdwg.mxu0
        %v2303 = vrot.slane %v2299, 4
        %v2305 = vadd.f32 %v1806, %v2303
        %v2306 = vxor.u32 %v2305, 2147483648
        %v2307 = vmul.f32 %v2306, 1.442695
        %v2308 = vpow.pop %v2307
        %v2309 = vadd.f32 %v2308, 1.0
        %v2310 = vrcp.pop %v2309
        %v2311 = vmul.f32 1.0, %v2310
        %v2312 = vtanh.pop %v2305
        %v2314 = vrot.slane %v2219, 7
        %v2316 = vmul.f32 %v2311, %v2314
        %2318 = vrot.lane.b32.xlu0 %v2312, 64
        %v2319 = vpop.permute.xlu0 %2318
        %v2321 = vmul.f32 %v2311, %v2319
        %2323 = vrot.lane.b32.xlu0 %v2321, 32
        %v2324 = vpop.permute.xlu0 %2323
        %v2326 = vadd.f32 %v2316, %v2324
        %v2327 = vtanh.pop %v2326
        %2329 = vrot.lane.b32.xlu0 %v2327, 64
        %v2330 = vpop.permute.xlu0 %2329
        %v2332 = vmul.f32 %v2311, %v2330
        %v2334 = vrot.slane %v2332, 4
        %2335 = vrot.lane.b32.xlu0 %v2334, 32
        %v2336 = vpop.permute.xlu0 %2335
        %v2337 = vsel %vm1807, %v2336, 0
        %2339 = vmatprep.subr.mxu0 0.0
        %2340 = vmatpush1.msra.mxu0 %v452
        %2341 = vmatprep.subr.mxu0 0.0
        %2342 = vmatpush1.msra.mxu0 %v453
        %2343 = vmatprep.subr.mxu0 0.0
        %2344 = vmatpush1.msra.mxu0 %v454
        %2345 = vmatprep.subr.mxu0 0.0
        %2346 = vmatpush1.msra.mxu0 %v455
        %2347 = vmatprep.subr.mxu0 0.0
        %2348 = vmatpush1.msra.mxu0 0.0
        %2349 = vmatprep.subr.mxu0 0.0
        %2350 = vmatpush1.msra.mxu0 0.0
        %2351 = vmatprep.subr.mxu0 0.0
        %2352 = vmatpush1.msra.mxu0 0.0
        %2353 = vmatprep.subr.mxu0 0.0
        %2354 = vmatpush1.msra.mxu0 0.0
        %2355 = vmatprep.subr.mxu0 0.0
        %2356 = vmatpush1.msra.mxu0 0.0
        %2357 = vmatprep.subr.mxu0 0.0
        %2358 = vmatpush1.msra.mxu0 0.0
        %2359 = vmatprep.subr.mxu0 0.0
        %2360 = vmatpush1.msra.mxu0 0.0
        %2361 = vmatprep.subr.mxu0 0.0
        %2362 = vmatpush1.msra.mxu0 0.0
        %2363 = vmatprep.subr.mxu0 0.0
        %2364 = vmatpush1.msra.mxu0 0.0
        %2365 = vmatprep.subr.mxu0 0.0
        %2366 = vmatpush1.msra.mxu0 0.0
        %2367 = vmatprep.subr.mxu0 0.0
        %2368 = vmatpush1.msra.mxu0 0.0
        %2369 = vmatprep.subr.mxu0 0.0
        %2370 = vmatpush1.msra.mxu0 0.0
        %2371 = vmatprep.subr.mxu0 0.0
        %2372 = vmatpush1.msra.mxu0 0.0
        %2373 = vmatprep.subr.mxu0 0.0
        %2374 = vmatpush1.msra.mxu0 0.0
        %2375 = vmatprep.subr.mxu0 0.0
        %2376 = vmatpush1.msra.mxu0 0.0
        %2377 = vmatprep.subr.mxu0 0.0
        %2378 = vmatpush1.msra.mxu0 0.0
        %2379 = vmatprep.subr.mxu0 0.0
        %2380 = vmatpush1.msra.mxu0 0.0
        %2381 = vmatprep.subr.mxu0 0.0
        %2382 = vmatpush1.msra.mxu0 0.0
        %2383 = vmatprep.subr.mxu0 0.0
        %2384 = vmatpush1.msra.mxu0 0.0
        %2385 = vmatprep.subr.mxu0 0.0
        %2386 = vmatpush1.msra.mxu0 0.0
        %2387 = vmatprep.subr.mxu0 0.0
        %2388 = vmatpush1.msra.mxu0 0.0
        %2389 = vmatprep.subr.mxu0 0.0
        %2390 = vmatpush1.msra.mxu0 0.0
        %2391 = vmatprep.subr.mxu0 0.0
        %2392 = vmatpush1.msra.mxu0 0.0
        %2393 = vmatprep.subr.mxu0 0.0
        %2394 = vmatpush1.msra.mxu0 0.0
        %2395 = vmatprep.subr.mxu0 0.0
        %2396 = vmatpush1.msra.mxu0 0.0
        %2397 = vmatprep.subr.mxu0 0.0
        %2398 = vmatpush1.msra.mxu0 0.0
        %2399 = vmatprep.subr.mxu0 0.0
        %2400 = vmatpush1.msra.mxu0 0.0
        %2401 = vmatprep.subr.mxu0 0.0
        %2402 = vmatpush1.msra.mxu0 0.0
        %2403 = vmatprep.mubr.f32.mxu0 0.0
        %2404 = vmatmul.mubr.f32.gmra.mrb[0].mxu0 %v2337
        %v2405 = vpop.f32.mrb[0].mxu0
        %v2406 = vadd.f32 0.0, %v2405
        %v2407 = vpop.f32.mrb[0].mxu0
        %2408 = vdwg.mxu0
        %v2410 = vrot.slane %v2406, 3
        %v2412 = vadd.f32 %v1806, %v2410
        %v2413 = vxor.u32 %v2412, 2147483648
        %v2414 = vmul.f32 %v2413, 1.442695
        %v2415 = vpow.pop %v2414
        %v2416 = vadd.f32 %v2415, 1.0
        %v2417 = vrcp.pop %v2416
        %v2418 = vmul.f32 1.0, %v2417
        %v2419 = vtanh.pop %v2412
        %v2421 = vrot.slane %v2326, 7
        %v2423 = vmul.f32 %v2418, %v2421
        %2425 = vrot.lane.b32.xlu0 %v2419, 64
        %v2426 = vpop.permute.xlu0 %2425
        %v2428 = vmul.f32 %v2418, %v2426
        %2430 = vrot.lane.b32.xlu0 %v2428, 32
        %v2431 = vpop.permute.xlu0 %2430
        %v2433 = vadd.f32 %v2423, %v2431
        %v2434 = vtanh.pop %v2433
        %2436 = vrot.lane.b32.xlu0 %v2434, 64
        %v2437 = vpop.permute.xlu0 %2436
        %v2439 = vmul.f32 %v2418, %v2437
        %v2441 = vrot.slane %v2439, 5
        %2442 = vrot.lane.b32.xlu0 %v2441, 32
        %v2443 = vpop.permute.xlu0 %2442
        %v2444 = vsel %vm1807, %v2443, 0
        %2446 = vmatprep.subr.mxu0 0.0
        %2447 = vmatpush1.msra.mxu0 %v452
        %2448 = vmatprep.subr.mxu0 0.0
        %2449 = vmatpush1.msra.mxu0 %v453
        %2450 = vmatprep.subr.mxu0 0.0
        %2451 = vmatpush1.msra.mxu0 %v454
        %2452 = vmatprep.subr.mxu0 0.0
        %2453 = vmatpush1.msra.mxu0 %v455
        %2454 = vmatprep.subr.mxu0 0.0
        %2455 = vmatpush1.msra.mxu0 0.0
        %2456 = vmatprep.subr.mxu0 0.0
        %2457 = vmatpush1.msra.mxu0 0.0
        %2458 = vmatprep.subr.mxu0 0.0
        %2459 = vmatpush1.msra.mxu0 0.0
        %2460 = vmatprep.subr.mxu0 0.0
        %2461 = vmatpush1.msra.mxu0 0.0
        %2462 = vmatprep.subr.mxu0 0.0
        %2463 = vmatpush1.msra.mxu0 0.0
        %2464 = vmatprep.subr.mxu0 0.0
        %2465 = vmatpush1.msra.mxu0 0.0
        %2466 = vmatprep.subr.mxu0 0.0
        %2467 = vmatpush1.msra.mxu0 0.0
        %2468 = vmatprep.subr.mxu0 0.0
        %2469 = vmatpush1.msra.mxu0 0.0
        %2470 = vmatprep.subr.mxu0 0.0
        %2471 = vmatpush1.msra.mxu0 0.0
        %2472 = vmatprep.subr.mxu0 0.0
        %2473 = vmatpush1.msra.mxu0 0.0
        %2474 = vmatprep.subr.mxu0 0.0
        %2475 = vmatpush1.msra.mxu0 0.0
        %2476 = vmatprep.subr.mxu0 0.0
        %2477 = vmatpush1.msra.mxu0 0.0
        %2478 = vmatprep.subr.mxu0 0.0
        %2479 = vmatpush1.msra.mxu0 0.0
        %2480 = vmatprep.subr.mxu0 0.0
        %2481 = vmatpush1.msra.mxu0 0.0
        %2482 = vmatprep.subr.mxu0 0.0
        %2483 = vmatpush1.msra.mxu0 0.0
        %2484 = vmatprep.subr.mxu0 0.0
        %2485 = vmatpush1.msra.mxu0 0.0
        %2486 = vmatprep.subr.mxu0 0.0
        %2487 = vmatpush1.msra.mxu0 0.0
        %2488 = vmatprep.subr.mxu0 0.0
        %2489 = vmatpush1.msra.mxu0 0.0
        %2490 = vmatprep.subr.mxu0 0.0
        %2491 = vmatpush1.msra.mxu0 0.0
        %2492 = vmatprep.subr.mxu0 0.0
        %2493 = vmatpush1.msra.mxu0 0.0
        %2494 = vmatprep.subr.mxu0 0.0
        %2495 = vmatpush1.msra.mxu0 0.0
        %2496 = vmatprep.subr.mxu0 0.0
        %2497 = vmatpush1.msra.mxu0 0.0
        %2498 = vmatprep.subr.mxu0 0.0
        %2499 = vmatpush1.msra.mxu0 0.0
        %2500 = vmatprep.subr.mxu0 0.0
        %2501 = vmatpush1.msra.mxu0 0.0
        %2502 = vmatprep.subr.mxu0 0.0
        %2503 = vmatpush1.msra.mxu0 0.0
        %2504 = vmatprep.subr.mxu0 0.0
        %2505 = vmatpush1.msra.mxu0 0.0
        %2506 = vmatprep.subr.mxu0 0.0
        %2507 = vmatpush1.msra.mxu0 0.0
        %2508 = vmatprep.subr.mxu0 0.0
        %2509 = vmatpush1.msra.mxu0 0.0
        %2510 = vmatprep.mubr.f32.mxu0 0.0
        %2511 = vmatmul.mubr.f32.gmra.mrb[0].mxu0 %v2444
        %v2512 = vpop.f32.mrb[0].mxu0
        %v2513 = vadd.f32 0.0, %v2512
        %v2514 = vpop.f32.mrb[0].mxu0
        %2515 = vdwg.mxu0
        %v2517 = vrot.slane %v2513, 2
        %v2519 = vadd.f32 %v1806, %v2517
        %v2520 = vxor.u32 %v2519, 2147483648
        %v2521 = vmul.f32 %v2520, 1.442695
        %v2522 = vpow.pop %v2521
        %v2523 = vadd.f32 %v2522, 1.0
        %v2524 = vrcp.pop %v2523
        %v2525 = vmul.f32 1.0, %v2524
        %v2526 = vtanh.pop %v2519
        %v2528 = vrot.slane %v2433, 7
        %v2530 = vmul.f32 %v2525, %v2528
        %2532 = vrot.lane.b32.xlu0 %v2526, 64
        %v2533 = vpop.permute.xlu0 %2532
        %v2535 = vmul.f32 %v2525, %v2533
        %2537 = vrot.lane.b32.xlu0 %v2535, 32
        %v2538 = vpop.permute.xlu0 %2537
        %v2540 = vadd.f32 %v2530, %v2538
        %v2541 = vtanh.pop %v2540
        %2543 = vrot.lane.b32.xlu0 %v2541, 64
        %v2544 = vpop.permute.xlu0 %2543
        %v2546 = vmul.f32 %v2525, %v2544
        %v2548 = vrot.slane %v2546, 6
        %2549 = vrot.lane.b32.xlu0 %v2548, 32
        %v2550 = vpop.permute.xlu0 %2549
        %v2551 = vsel %vm1807, %v2550, 0
        %2553 = vmatprep.subr.mxu0 0.0
        %2554 = vmatpush1.msra.mxu0 %v452
        %2555 = vmatprep.subr.mxu0 0.0
        %2556 = vmatpush1.msra.mxu0 %v453
        %2557 = vmatprep.subr.mxu0 0.0
        %2558 = vmatpush1.msra.mxu0 %v454
        %2559 = vmatprep.subr.mxu0 0.0
        %2560 = vmatpush1.msra.mxu0 %v455
        %2561 = vmatprep.subr.mxu0 0.0
        %2562 = vmatpush1.msra.mxu0 0.0
        %2563 = vmatprep.subr.mxu0 0.0
        %2564 = vmatpush1.msra.mxu0 0.0
        %2565 = vmatprep.subr.mxu0 0.0
        %2566 = vmatpush1.msra.mxu0 0.0
        %2567 = vmatprep.subr.mxu0 0.0
        %2568 = vmatpush1.msra.mxu0 0.0
        %2569 = vmatprep.subr.mxu0 0.0
        %2570 = vmatpush1.msra.mxu0 0.0
        %2571 = vmatprep.subr.mxu0 0.0
        %2572 = vmatpush1.msra.mxu0 0.0
        %2573 = vmatprep.subr.mxu0 0.0
        %2574 = vmatpush1.msra.mxu0 0.0
        %2575 = vmatprep.subr.mxu0 0.0
        %2576 = vmatpush1.msra.mxu0 0.0
        %2577 = vmatprep.subr.mxu0 0.0
        %2578 = vmatpush1.msra.mxu0 0.0
        %2579 = vmatprep.subr.mxu0 0.0
        %2580 = vmatpush1.msra.mxu0 0.0
        %2581 = vmatprep.subr.mxu0 0.0
        %2582 = vmatpush1.msra.mxu0 0.0
        %2583 = vmatprep.subr.mxu0 0.0
        %2584 = vmatpush1.msra.mxu0 0.0
        %2585 = vmatprep.subr.mxu0 0.0
        %2586 = vmatpush1.msra.mxu0 0.0
        %2587 = vmatprep.subr.mxu0 0.0
        %2588 = vmatpush1.msra.mxu0 0.0
        %2589 = vmatprep.subr.mxu0 0.0
        %2590 = vmatpush1.msra.mxu0 0.0
        %2591 = vmatprep.subr.mxu0 0.0
        %2592 = vmatpush1.msra.mxu0 0.0
        %2593 = vmatprep.subr.mxu0 0.0
        %2594 = vmatpush1.msra.mxu0 0.0
        %2595 = vmatprep.subr.mxu0 0.0
        %2596 = vmatpush1.msra.mxu0 0.0
        %2597 = vmatprep.subr.mxu0 0.0
        %2598 = vmatpush1.msra.mxu0 0.0
        %2599 = vmatprep.subr.mxu0 0.0
        %2600 = vmatpush1.msra.mxu0 0.0
        %2601 = vmatprep.subr.mxu0 0.0
        %2602 = vmatpush1.msra.mxu0 0.0
        %2603 = vmatprep.subr.mxu0 0.0
        %2604 = vmatpush1.msra.mxu0 0.0
        %2605 = vmatprep.subr.mxu0 0.0
        %2606 = vmatpush1.msra.mxu0 0.0
        %2607 = vmatprep.subr.mxu0 0.0
        %2608 = vmatpush1.msra.mxu0 0.0
        %2609 = vmatprep.subr.mxu0 0.0
        %2610 = vmatpush1.msra.mxu0 0.0
        %2611 = vmatprep.subr.mxu0 0.0
        %2612 = vmatpush1.msra.mxu0 0.0
        %2613 = vmatprep.subr.mxu0 0.0
        %2614 = vmatpush1.msra.mxu0 0.0
        %2615 = vmatprep.subr.mxu0 0.0
        %2616 = vmatpush1.msra.mxu0 0.0
        %2617 = vmatprep.mubr.f32.mxu0 0.0
        %2618 = vmatmul.mubr.f32.gmra.mrb[0].mxu0 %v2551
        %v2619 = vpop.f32.mrb[0].mxu0
        %v2620 = vadd.f32 0.0, %v2619
        %v2621 = vpop.f32.mrb[0].mxu0
        %2622 = vdwg.mxu0
        %v2624 = vrot.slane %v2620, 1
        %v2626 = vadd.f32 %v1806, %v2624
        %v2627 = vxor.u32 %v2626, 2147483648
        %v2628 = vmul.f32 %v2627, 1.442695
        %v2629 = vpow.pop %v2628
        %v2630 = vadd.f32 %v2629, 1.0
        %v2631 = vrcp.pop %v2630
        %v2632 = vmul.f32 1.0, %v2631
        %v2633 = vtanh.pop %v2626
        %v2635 = vrot.slane %v2540, 7
        %v2637 = vmul.f32 %v2632, %v2635
        %2639 = vrot.lane.b32.xlu0 %v2633, 64
        %v2640 = vpop.permute.xlu0 %2639
        %v2642 = vmul.f32 %v2632, %v2640
        %2644 = vrot.lane.b32.xlu0 %v2642, 32
        %v2645 = vpop.permute.xlu0 %2644
        %v2647 = vadd.f32 %v2637, %v2645
        %v2648 = vtanh.pop %v2647
        %2650 = vrot.lane.b32.xlu0 %v2648, 64
        %v2651 = vpop.permute.xlu0 %2650
        %v2653 = vmul.f32 %v2632, %v2651
        %vm2654 = vcmask 1040384
        %v2655 = vsel %vm2654, %v1905, %v2011
        %vm2656 = vcmask 1041408
        %v2657 = vsel %vm2656, %v2655, %v2118
        %vm2658 = vcmask 1042432
        %v2659 = vsel %vm2658, %v2657, %v2225
        %v2660 = vsel %vm461, %v2659, %v2332
        %vm2661 = vcmask 1044480
        %v2662 = vsel %vm2661, %v2660, %v2439
        %vm2663 = vcmask 1045504
        %v2664 = vsel %vm2663, %v2662, %v2546
        %vm2665 = vcmask 1046528
        %v2666 = vsel %vm2665, %v2664, %v2653
        %v2667 = vld [vmem:[#allocation10] sm:$0xff]
        %v2668 = vld [vmem:[#allocation10 + $0x8] sm:$0xff]
        %v2669 = vld [vmem:[#allocation10 + $0x10] sm:$0xff]
        %v2670 = vld [vmem:[#allocation10 + $0x18] sm:$0xff]
        %v2671 = vld [vmem:[%s8] sm:$0x1]
        %v2673 = vlaneseq
        %v2674 = vshrl.u32 %v2673, 7
        %v2675 = vsub.s32 0, %v2674
        %v2676 = vrot.slane %v2671, %v2675
        %2679 = vrot.lane.b32.xlu0 %v2666, 32
        %v2680 = vpop.permute.xlu0 %2679
        %v2681 = vsel %vm1807, %v2680, 0
        %2683 = vmatprep.subr.mxu0 0.0
        %2684 = vmatpush1.msra.mxu0 %v2667
        %2685 = vmatprep.subr.mxu0 0.0
        %2686 = vmatpush1.msra.mxu0 %v2668
        %2687 = vmatprep.subr.mxu0 0.0
        %2688 = vmatpush1.msra.mxu0 %v2669
        %2689 = vmatprep.subr.mxu0 0.0
        %2690 = vmatpush1.msra.mxu0 %v2670
        %2691 = vmatprep.subr.mxu0 0.0
        %2692 = vmatpush1.msra.mxu0 0.0
        %2693 = vmatprep.subr.mxu0 0.0
        %2694 = vmatpush1.msra.mxu0 0.0
        %2695 = vmatprep.subr.mxu0 0.0
        %2696 = vmatpush1.msra.mxu0 0.0
        %2697 = vmatprep.subr.mxu0 0.0
        %2698 = vmatpush1.msra.mxu0 0.0
        %2699 = vmatprep.subr.mxu0 0.0
        %2700 = vmatpush1.msra.mxu0 0.0
        %2701 = vmatprep.subr.mxu0 0.0
        %2702 = vmatpush1.msra.mxu0 0.0
        %2703 = vmatprep.subr.mxu0 0.0
        %2704 = vmatpush1.msra.mxu0 0.0
        %2705 = vmatprep.subr.mxu0 0.0
        %2706 = vmatpush1.msra.mxu0 0.0
        %2707 = vmatprep.subr.mxu0 0.0
        %2708 = vmatpush1.msra.mxu0 0.0
        %2709 = vmatprep.subr.mxu0 0.0
        %2710 = vmatpush1.msra.mxu0 0.0
        %2711 = vmatprep.subr.mxu0 0.0
        %2712 = vmatpush1.msra.mxu0 0.0
        %2713 = vmatprep.subr.mxu0 0.0
        %2714 = vmatpush1.msra.mxu0 0.0
        %2715 = vmatprep.subr.mxu0 0.0
        %2716 = vmatpush1.msra.mxu0 0.0
        %2717 = vmatprep.subr.mxu0 0.0
        %2718 = vmatpush1.msra.mxu0 0.0
        %2719 = vmatprep.subr.mxu0 0.0
        %2720 = vmatpush1.msra.mxu0 0.0
        %2721 = vmatprep.subr.mxu0 0.0
        %2722 = vmatpush1.msra.mxu0 0.0
        %2723 = vmatprep.subr.mxu0 0.0
        %2724 = vmatpush1.msra.mxu0 0.0
        %2725 = vmatprep.subr.mxu0 0.0
        %2726 = vmatpush1.msra.mxu0 0.0
        %2727 = vmatprep.subr.mxu0 0.0
        %2728 = vmatpush1.msra.mxu0 0.0
        %2729 = vmatprep.subr.mxu0 0.0
        %2730 = vmatpush1.msra.mxu0 0.0
        %2731 = vmatprep.subr.mxu0 0.0
        %2732 = vmatpush1.msra.mxu0 0.0
        %2733 = vmatprep.subr.mxu0 0.0
        %2734 = vmatpush1.msra.mxu0 0.0
        %2735 = vmatprep.subr.mxu0 0.0
        %2736 = vmatpush1.msra.mxu0 0.0
        %2737 = vmatprep.subr.mxu0 0.0
        %2738 = vmatpush1.msra.mxu0 0.0
        %2739 = vmatprep.subr.mxu0 0.0
        %2740 = vmatpush1.msra.mxu0 0.0
        %2741 = vmatprep.subr.mxu0 0.0
        %2742 = vmatpush1.msra.mxu0 0.0
        %2743 = vmatprep.subr.mxu0 0.0
        %2744 = vmatpush1.msra.mxu0 0.0
        %2745 = vmatprep.subr.mxu0 0.0
        %2746 = vmatpush1.msra.mxu0 0.0
        %2747 = vmatprep.mubr.f32.mxu0 0.0
        %2748 = vmatmul.mubr.f32.gmra.mrb[0].mxu0 %v2681
        %v2749 = vpop.f32.mrb[0].mxu0
        %v2750 = vadd.f32 %v2676, %v2749
        %v2751 = vpop.f32.mrb[0].mxu0
        %2752 = vdwg.mxu0
        %v2753 = vlaneseq
        %v2754 = vand.u32 %v2753, 127
        %vm2755 = vcmp.ge.s32.totalorder %v2754, 12
        %vm2756 = vcmp.lt.s32.totalorder %v2754, 24
        %vm2757 = vmand %vm2755, %vm2756
        %vm2758 = vcmp.ge.s32.totalorder %v2754, 24
        %vm2759 = vcmp.lt.s32.totalorder %v2754, 27
        %vm2760 = vmand %vm2758, %vm2759
        %v2761 = vsel %vm2757, %v2750, 0.0
        %v2762 = vmul.f32 %v2761, 1.442695
        %v2763 = vpow.pop %v2762
        %v2764 = vsel %vm2757, %v2763, %v2750
        %v2765 = vsel %vm2760, %v2750, -1e+30
        %2766 = vmax.xlane.f32.xlu0 %v2765
        %v2767 = vpop.xlane.xlu0 %2766
        %v2768 = vsub.f32 %v2765, %v2767
        %v2769 = vmul.f32 %v2768, 1.442695
        %v2770 = vpow.pop %v2769
        %2771 = vadd.xlane.f32.xlu0 %v2770
        %v2772 = vpop.xlane.xlu0 %2771
        %v2773 = vrcp.pop %v2772
        %v2774 = vmul.f32 %v2770, %v2773
        %v2775 = vsel %vm2760, %v2774, %v2764
        %2776 = vst [vmem:[%s421] sm:$0xff] %v2775
        %s2777 = sand.u32 %s235, 1
        %s2778 = scalar_lea.sflag [#allocation4], %s2777
        %s2779 = sand.u32 %s235, 1
        %s2780 = smul.addr %s2779, 8
        %s2781 = scalar_lea.vmem [#allocation11], %s2780
        // Predicated region
        $region77: #{tpu_custom_call.1} parent=55 // pred_check
          %p2782 = pneg %p245
        $region78: #{tpu_custom_call.1} parent=55 // pred_check_branch
          %2784 = sbr.rel (%p2782) target = $region80
        $region79: #{tpu_custom_call.1} parent=55 // pred_region
          %s2786 = ssub.s32 128, 128
          %2787 = vsyncadd %s2778, %s2786
          %s2788 = smul.addr %s28, 128
          %s2789 = scalar_lea.hbm %s9, %s2788
          %s2791 = sshll.u32 %s2781, 4
          %s2792 = int_to_ptr.vmem [resolvable:$true] %s2791
          %2794 = dma.vmem_to_hbm [thread:$0]  %s2792, 128, %s2789, %s2778
        $region80: #{tpu_custom_call.1} parent=55 // pred_fallthru
          _
      $region56: #{tpu_custom_call.1} parent=5 // pred_fallthru
        _
      %p2795 = scmp.le.s32.totalorder 2, %s23
      // Predicated region
      $region81: #{tpu_custom_call.1} parent=5 // pred_check
        %p2796 = pneg %p2795
      $region82: #{tpu_custom_call.1} parent=5 // pred_check_branch
        %2798 = sbr.rel (%p2796) target = $region84
      $region83: #{tpu_custom_call.1} parent=5 // pred_region
        %s2799 = ssub.s32 %s23, 2
        // Predicated region
        $region85: #{tpu_custom_call.1} parent=83 // pred_check
          %p2800 = pneg %p251
        $region86: #{tpu_custom_call.1} parent=83 // pred_check_branch
          %2802 = sbr.rel (%p2800) target = $region88
        $region87: #{tpu_custom_call.1} parent=83 // pred_region
          %s2803 = sand.u32 %s236, 1
          %s2804 = scalar_lea.sflag [#allocation4], %s2803
          %s2805 = sand.u32 %s236, 1
          %s2806 = smul.addr %s2805, 8
          %s2807 = scalar_lea.vmem [#allocation11], %s2806
          %2808 = dma.done %s2804, 128
        $region88: #{tpu_custom_call.1} parent=83 // pred_fallthru
          _
      $region84: #{tpu_custom_call.1} parent=5 // pred_fallthru
        _
    $region6: #{tpu_custom_call.1} parent=1 // loop_footer
      %s27 = sadd.s32 1, %s23
    $region7: #{tpu_custom_call.1} parent=1 // loop_footer_branch
      %22 = sbr.rel target = $region3
    $region8: #{tpu_custom_call.1} parent=1 // loop_exit
      _
    %2809 = vsyncpa [#allocation3], 1
    %s2810 = scalar_lea.sflag [#allocation3], 1
    %2811 = vsyncpa %s2810, 1
    %2812 = vsyncpa [#allocation6], 1
    %2813 = vsyncpa [#allocation9], 1
    %2814 = vsyncpa [#allocation4], 1
    %s2815 = scalar_lea.sflag [#allocation4], 1
    %2816 = vsyncpa %s2815, 1

</llo_original>
